<compile_context>
chip_gen: v5e
topology: v5e:2x2
jax: 0.10.0
libtpu: 0.0.40
codegen_flags: <defaults>
</compile_context>

<pallas_src>
import jax
import jax.numpy as jnp
from jax.experimental import pallas as pl
from jax.experimental.pallas import tpu as pltpu

HIDDENS = [200, 1000, 200]
N_FEATURE = 3
N_OUTPUT = 1
BN_EPS = 1e-5

LANE = 128
FPAD = 8                      # input features padded 3 -> 8 (one f32 sublane tile)


def _round_up(n, m):
    return ((n + m - 1) // m) * m


H1P = _round_up(HIDDENS[0], LANE)   # 256
H2P = _round_up(HIDDENS[1], LANE)   # 1024
H3P = _round_up(HIDDENS[2], LANE)   # 256


# ----------------------------------------------------------------------------- kernel
def bpnet_kernel(x_ref,
                 w1_ref, b1_ref,
                 w2_ref, b2_ref,
                 w3_ref, b3_ref,
                 w4_ref, b4_ref,
                 o_ref):
    # x_ref: (FPAD, TB) f32, batch along lanes (lane-dense input slab).
    xT = x_ref[...].astype(jnp.bfloat16)                         # (8, TB)

    # hidden1: (H1P, 8) @ (8, TB) on the MXU; bf16 bias + ReLU epilogue.
    h = jnp.dot(w1_ref[...], xT, preferred_element_type=jnp.float32)
    h = jnp.maximum(h.astype(jnp.bfloat16) + b1_ref[...], 0.0)   # (H1P, TB) bf16

    # BN1 folded into W2/b2; dropout = identity in eval mode.
    # hidden2: (H2P, H1P) @ (H1P, TB), f32 MXU accumulation, bf16 epilogue.
    h = jnp.dot(w2_ref[...], h, preferred_element_type=jnp.float32)
    h = jnp.maximum(h.astype(jnp.bfloat16) + b2_ref[...], 0.0)   # (H2P, TB) bf16

    # BN2 folded into W3/b3.
    # hidden3: (H3P, H2P) @ (H2P, TB); small epilogue kept in f32 for accuracy.
    h = jnp.dot(w3_ref[...], h, preferred_element_type=jnp.float32)
    h = jnp.maximum(h + b3_ref[...], 0.0)                        # (H3P, TB) f32

    # out: Linear(200,1) as exact-f32 VPU multiply + sublane reduction.
    # Result is already lane-dense (1, TB) -> unmasked full-lane store.
    o_ref[...] = jnp.sum(h * w4_ref[...], axis=0, keepdims=True) + b4_ref[...]


# ----------------------------------------------------------------------------- wrapper
def bpnet_forward(x, prepped, *, tile_b=2048):
    """x: (B, 3) f32; prepped: output of prepare_params().

    tile_b guidance: 2048 (default) works on all generations; 4096 is viable on
    v5e/v6e (128 MiB VMEM); keep <= 2048 on v7x (64 MiB per TensorCore) and make
    sure B/tile_b >= 4 so both v7x TensorCores get several grid steps.
    """
    B = x.shape[0]
    w1, b1, w2, b2, w3, b3, w4, b4 = prepped

    # Clamp / align the tile and pad the batch to a tile multiple.
    tile_b = max(LANE, min(int(tile_b), _round_up(B, LANE)))
    tile_b = _round_up(tile_b, LANE)
    B_pad = _round_up(B, tile_b)
    grid = (B_pad // tile_b,)

    # Feature-major, lane-dense input slab (FPAD, B_pad); padding is zeros.
    xT = jnp.zeros((FPAD, B_pad), jnp.float32)
    xT = xT.at[:N_FEATURE, :B].set(x.astype(jnp.float32).T)

    tiled_in = pl.BlockSpec((FPAD, tile_b), lambda i: (0, i))
    const = lambda i: (0, 0)          # weights stay resident across grid steps
    # TODO(synk): pl.Buffered(1) on the weight specs would drop ~1 MiB of
    # pointless double-buffering on v7x; skipped (weights total only ~1 MiB).
    in_specs = [tiled_in] + [pl.BlockSpec(a.shape, const) for a in prepped]
    out_specs = pl.BlockSpec((1, tile_b), lambda i: (0, i))      # lane-dense out

    flops = 2 * B_pad * (FPAD * H1P + H1P * H2P + H2P * H3P + H3P)
    bytes_accessed = int(xT.size * 4 + B_pad * 4 +
                         sum(int(a.size) * a.dtype.itemsize for a in prepped))
    vmem_limit = int(min(64 << 20, (12 << 20) + tile_b * 18 * 1024))

    out_t = pl.pallas_call(
        bpnet_kernel,
        out_shape=jax.ShapeDtypeStruct((1, B_pad), jnp.float32),
        grid=grid,
        in_specs=in_specs,
        out_specs=out_specs,
        compiler_params=pltpu.CompilerParams(
            dimension_semantics=("parallel",),   # batch grid shards over 2 TCs
            vmem_limit_bytes=vmem_limit,
        ),
        cost_estimate=pl.CostEstimate(flops=flops, transcendentals=0,
                                      bytes_accessed=bytes_accessed),
    )(xT, *prepped)

    return out_t[0, :B][:, None]                 # (B, 1)


# ----------------------------------------------------------------------------- params
def init_params(key):
    """PyTorch-style init for the original (unfolded, unpadded) module params.

    Linear weights stored as (in_features, out_features) so y = x @ W + b.
    """
    dims = [(N_FEATURE, HIDDENS[0]),
            (HIDDENS[0], HIDDENS[1]),
            (HIDDENS[1], HIDDENS[2]),
            (HIDDENS[2], N_OUTPUT)]
    keys = jax.random.split(key, 2 * len(dims) + 2)
    lin = []
    for li, (fan_in, fan_out) in enumerate(dims):
        bound = 1.0 / jnp.sqrt(jnp.float32(fan_in))
        w = jax.random.uniform(keys[2 * li], (fan_in, fan_out),
                               minval=-bound, maxval=bound, dtype=jnp.float32)
        b = jax.random.uniform(keys[2 * li + 1], (1, fan_out),
                               minval=-bound, maxval=bound, dtype=jnp.float32)
        lin.append((w, b))
    (w1, b1), (w2, b2), (w3, b3), (w4, b4) = lin

    def bn_init(num_features, k):
        gamma = jnp.ones((1, num_features), jnp.float32)
        beta = jnp.zeros((1, num_features), jnp.float32)
        rm = 0.1 * jax.random.normal(k, (1, num_features), dtype=jnp.float32)
        rv = jnp.ones((1, num_features), jnp.float32) + 0.05 * jnp.abs(
            jax.random.normal(jax.random.fold_in(k, 1), (1, num_features),
                              dtype=jnp.float32))
        return gamma, beta, rm, rv

    g1, be1, rm1, rv1 = bn_init(HIDDENS[0], keys[-2])
    g2, be2, rm2, rv2 = bn_init(HIDDENS[1], keys[-1])

    return (w1, b1, g1, be1, rm1, rv1,
            w2, b2, g2, be2, rm2, rv2,
            w3, b3,
            w4, b4)


def prepare_params(params):
    """Fold eval-mode BNs into the adjacent Linears, transpose to feature-major
    (out, in) layout, zero-pad to lane multiples, and cast to kernel dtypes."""
    (w1, b1, g1, be1, rm1, rv1,
     w2, b2, g2, be2, rm2, rv2,
     w3, b3, w4, b4) = params

    hp = jax.lax.Precision.HIGHEST

    # eval-mode BN as per-feature affine:  y = x * s + t
    s1 = g1 * jax.lax.rsqrt(rv1 + BN_EPS)          # (1, 200)
    t1 = be1 - rm1 * s1
    s2 = g2 * jax.lax.rsqrt(rv2 + BN_EPS)          # (1, 1000)
    t2 = be2 - rm2 * s2

    # Fold BN1 into Linear2, BN2 into Linear3 (exact in eval mode):
    #   BN(h) @ W + b = h @ (diag(s) @ W) + (t @ W + b)
    w2f = w2 * s1.reshape(-1, 1)                              # (200, 1000)
    b2f = b2 + jnp.dot(t1, w2, precision=hp)                  # (1, 1000)
    w3f = w3 * s2.reshape(-1, 1)                              # (1000, 200)
    b3f = b3 + jnp.dot(t2, w3, precision=hp)                  # (1, 200)

    def pad_t(w, rows, cols, dtype):
        wt = w.T                                              # (out, in)
        return jnp.pad(wt, ((0, rows - wt.shape[0]),
                            (0, cols - wt.shape[1]))).astype(dtype)

    def col(b, rows, dtype):
        bc = b.reshape(-1, 1)
        return jnp.pad(bc, ((0, rows - bc.shape[0]), (0, 0))).astype(dtype)

    w1p = pad_t(w1, H1P, FPAD, jnp.bfloat16)       # (256, 8)
    b1p = col(b1, H1P, jnp.bfloat16)               # (256, 1)
    w2p = pad_t(w2f, H2P, H1P, jnp.bfloat16)       # (1024, 256)
    b2p = col(b2f, H2P, jnp.bfloat16)              # (1024, 1)
    w3p = pad_t(w3f, H3P, H2P, jnp.bfloat16)       # (256, 1024)
    b3p = col(b3f, H3P, jnp.float32)               # (256, 1)
    w4p = col(w4, H3P, jnp.float32)                # (256, 1)
    b4p = b4.reshape(1, 1).astype(jnp.float32)     # (1, 1)

    return (w1p, b1p, w2p, b2p, w3p, b3p, w4p, b4p)


# ----------------------------------------------------------------------------- references
def bpnet_reference_f32(x, params):
    """Faithful f32 eval-mode module semantics (unfolded BN, full precision)."""
    (w1, b1, g1, be1, rm1, rv1,
     w2, b2, g2, be2, rm2, rv2,
     w3, b3, w4, b4) = params
    hp = jax.lax.Precision.HIGHEST
    h = jnp.maximum(jnp.dot(x, w1, precision=hp) + b1, 0.0)
    h = (h - rm1) * (g1 / jnp.sqrt(rv1 + BN_EPS)) + be1
    h = jnp.maximum(jnp.dot(h, w2, precision=hp) + b2, 0.0)
    h = (h - rm2) * (g2 / jnp.sqrt(rv2 + BN_EPS)) + be2
    h = jnp.maximum(jnp.dot(h, w3, precision=hp) + b3, 0.0)
    return jnp.dot(h, w4, precision=hp) + b4


def bpnet_reference_prepped(x, prepped):
    """Plain-JAX replica of the exact folded / padded / bf16 compute path."""
    w1, b1, w2, b2, w3, b3, w4, b4 = prepped
    B = x.shape[0]
    xT = jnp.zeros((FPAD, B), jnp.float32).at[:N_FEATURE, :].set(x.T)
    xT = xT.astype(jnp.bfloat16)
    h = jnp.dot(w1, xT, preferred_element_type=jnp.float32)
    h = jnp.maximum(h.astype(jnp.bfloat16) + b1, 0.0)
    h = jnp.dot(w2, h, preferred_element_type=jnp.float32)
    h = jnp.maximum(h.astype(jnp.bfloat16) + b2, 0.0)
    h = jnp.dot(w3, h, preferred_element_type=jnp.float32)
    h = jnp.maximum(h + b3, 0.0)
    out = jnp.sum(h * w4, axis=0, keepdims=True) + b4            # (1, B)
    return out[0][:, None]                                       # (B, 1)


# ----------------------------------------------------------------------------- demo
if __name__ == "__main__":
    key = jax.random.PRNGKey(0)
    k_x, k_p = jax.random.split(key)

    # Small demo batch; B=300 is deliberately NOT a tile multiple so the
    # zero-padded last tile (and its output slicing) is exercised.
    B = 300
    x = jax.random.normal(k_x, (B, N_FEATURE), dtype=jnp.float32)

    params = init_params(k_p)
    prepped = prepare_params(params)

    # Multi-step grid path (tile_b=128 -> 3 grid steps over a 384-padded batch).
    out = bpnet_forward(x, prepped, tile_b=128)
    out = jax.block_until_ready(out)
    assert out.shape == (B, N_OUTPUT)

    # Default-tile path (clamped to a single 384-wide step here) for coverage.
    out_default = jax.block_until_ready(bpnet_forward(x, prepped))
    assert out_default.shape == (B, N_OUTPUT)

    # Tight check vs. a plain-JAX replica of the same folded/bf16 compute path.
    ref_same = bpnet_reference_prepped(x, prepped)
    assert jnp.allclose(out, ref_same, atol=2e-3, rtol=2e-3), \
        "mismatch vs bf16-path reference"
    assert jnp.allclose(out_default, ref_same, atol=2e-3, rtol=2e-3), \
        "mismatch vs bf16-path reference (default tile)"

    # Loose check vs. faithful f32 module semantics (bf16 MXU operands in kernel).
    ref_f32 = bpnet_reference_f32(x, params)
    assert jnp.allclose(out, ref_f32, atol=5e-2, rtol=5e-2), \
        "mismatch vs f32 module reference"

    print("KERNEL_OK")
</pallas_src>

<mosaic_0001>
module attributes {stable_mosaic.version = 11 : i64} {
  func.func @bpnet_kernel(%arg0: i32, %arg1: memref<8x128xf32, #tpu.memory_space<vmem>>, %arg2: memref<256x8xbf16, #tpu.memory_space<vmem>>, %arg3: memref<256x1xbf16, #tpu.memory_space<vmem>>, %arg4: memref<1024x256xbf16, #tpu.memory_space<vmem>>, %arg5: memref<1024x1xbf16, #tpu.memory_space<vmem>>, %arg6: memref<256x1024xbf16, #tpu.memory_space<vmem>>, %arg7: memref<256x1xf32, #tpu.memory_space<vmem>>, %arg8: memref<256x1xf32, #tpu.memory_space<vmem>>, %arg9: memref<1x1xf32, #tpu.memory_space<vmem>>, %arg10: memref<1x128xf32, #tpu.memory_space<vmem>>) attributes {dimension_semantics = [#tpu.dimension_semantics<parallel>], iteration_bounds = array<i64: 3>, scalar_prefetch = 0 : i64, scratch_operands = 0 : i64, tpu.core_type = #tpu.core_type<tc>, window_params = [{transform_indices = @transform_0, window_bounds = array<i64: 8, 128>}, {pipeline_mode = #tpu.pipeline_mode<synchronous>, transform_indices = @transform_1, window_bounds = array<i64: 256, 8>}, {pipeline_mode = #tpu.pipeline_mode<synchronous>, transform_indices = @transform_2, window_bounds = array<i64: 256, 1>}, {pipeline_mode = #tpu.pipeline_mode<synchronous>, transform_indices = @transform_3, window_bounds = array<i64: 1024, 256>}, {pipeline_mode = #tpu.pipeline_mode<synchronous>, transform_indices = @transform_4, window_bounds = array<i64: 1024, 1>}, {pipeline_mode = #tpu.pipeline_mode<synchronous>, transform_indices = @transform_5, window_bounds = array<i64: 256, 1024>}, {pipeline_mode = #tpu.pipeline_mode<synchronous>, transform_indices = @transform_6, window_bounds = array<i64: 256, 1>}, {pipeline_mode = #tpu.pipeline_mode<synchronous>, transform_indices = @transform_7, window_bounds = array<i64: 256, 1>}, {pipeline_mode = #tpu.pipeline_mode<synchronous>, transform_indices = @transform_8, window_bounds = array<i64: 1, 1>}, {transform_indices = @transform_9, window_bounds = array<i64: 1, 128>}]} {
    %c0 = arith.constant 0 : index
    %c0_0 = arith.constant 0 : index
    %0 = vector.load %arg1[%c0, %c0_0] : memref<8x128xf32, #tpu.memory_space<vmem>>, vector<8x128xf32>
    %1 = arith.truncf %0 : vector<8x128xf32> to vector<8x128xbf16>
    %c0_1 = arith.constant 0 : index
    %c0_2 = arith.constant 0 : index
    %2 = vector.load %arg2[%c0_1, %c0_2] : memref<256x8xbf16, #tpu.memory_space<vmem>>, vector<256x8xbf16>
    %cst = arith.constant dense<0.000000e+00> : vector<256x128xf32>
    %3 = tpu.matmul %2, %1, %cst {dimension_numbers = #tpu.dot_dimension_numbers<[1], [0], [0], [1], [0, 0, 1, 1], [], []>} : vector<256x8xbf16>, vector<8x128xbf16>, vector<256x128xf32> -> vector<256x128xf32>
    %4 = arith.truncf %3 : vector<256x128xf32> to vector<256x128xbf16>
    %c0_3 = arith.constant 0 : index
    %c0_4 = arith.constant 0 : index
    %5 = vector.load %arg3[%c0_3, %c0_4] : memref<256x1xbf16, #tpu.memory_space<vmem>>, vector<256x1xbf16>
    %6 = vector.broadcast %5 : vector<256x1xbf16> to vector<256x128xbf16>
    %7 = arith.addf %4, %6 : vector<256x128xbf16>
    %cst_5 = arith.constant 0.000000e+00 : bf16
    %8 = vector.broadcast %cst_5 : bf16 to vector<256x128xbf16>
    %9 = arith.maximumf %7, %8 : vector<256x128xbf16>
    %c0_6 = arith.constant 0 : index
    %c0_7 = arith.constant 0 : index
    %10 = vector.load %arg4[%c0_6, %c0_7] : memref<1024x256xbf16, #tpu.memory_space<vmem>>, vector<1024x256xbf16>
    %cst_8 = arith.constant dense<0.000000e+00> : vector<1024x128xf32>
    %11 = tpu.matmul %10, %9, %cst_8 {dimension_numbers = #tpu.dot_dimension_numbers<[1], [0], [0], [1], [0, 0, 1, 1], [], []>} : vector<1024x256xbf16>, vector<256x128xbf16>, vector<1024x128xf32> -> vector<1024x128xf32>
    %12 = arith.truncf %11 : vector<1024x128xf32> to vector<1024x128xbf16>
    %c0_9 = arith.constant 0 : index
    %c0_10 = arith.constant 0 : index
    %13 = vector.load %arg5[%c0_9, %c0_10] : memref<1024x1xbf16, #tpu.memory_space<vmem>>, vector<1024x1xbf16>
    %14 = vector.broadcast %13 : vector<1024x1xbf16> to vector<1024x128xbf16>
    %15 = arith.addf %12, %14 : vector<1024x128xbf16>
    %cst_11 = arith.constant 0.000000e+00 : bf16
    %16 = vector.broadcast %cst_11 : bf16 to vector<1024x128xbf16>
    %17 = arith.maximumf %15, %16 : vector<1024x128xbf16>
    %c0_12 = arith.constant 0 : index
    %c0_13 = arith.constant 0 : index
    %18 = vector.load %arg6[%c0_12, %c0_13] : memref<256x1024xbf16, #tpu.memory_space<vmem>>, vector<256x1024xbf16>
    %cst_14 = arith.constant dense<0.000000e+00> : vector<256x128xf32>
    %19 = tpu.matmul %18, %17, %cst_14 {dimension_numbers = #tpu.dot_dimension_numbers<[1], [0], [0], [1], [0, 0, 1, 1], [], []>} : vector<256x1024xbf16>, vector<1024x128xbf16>, vector<256x128xf32> -> vector<256x128xf32>
    %c0_15 = arith.constant 0 : index
    %c0_16 = arith.constant 0 : index
    %20 = vector.load %arg7[%c0_15, %c0_16] : memref<256x1xf32, #tpu.memory_space<vmem>>, vector<256x1xf32>
    %21 = vector.broadcast %20 : vector<256x1xf32> to vector<256x128xf32>
    %22 = arith.addf %19, %21 : vector<256x128xf32>
    %cst_17 = arith.constant 0.000000e+00 : f32
    %23 = vector.broadcast %cst_17 : f32 to vector<256x128xf32>
    %24 = arith.maximumf %22, %23 : vector<256x128xf32>
    %c0_18 = arith.constant 0 : index
    %c0_19 = arith.constant 0 : index
    %25 = vector.load %arg8[%c0_18, %c0_19] : memref<256x1xf32, #tpu.memory_space<vmem>>, vector<256x1xf32>
    %26 = vector.broadcast %25 : vector<256x1xf32> to vector<256x128xf32>
    %27 = arith.mulf %24, %26 : vector<256x128xf32>
    %cst_20 = arith.constant dense<0.000000e+00> : vector<128xf32>
    %28 = vector.multi_reduction <add>, %27, %cst_20 [0] : vector<256x128xf32> to vector<128xf32>
    %29 = vector.shape_cast %28 : vector<128xf32> to vector<1x128xf32>
    %c0_21 = arith.constant 0 : index
    %c0_22 = arith.constant 0 : index
    %30 = vector.load %arg9[%c0_21, %c0_22] : memref<1x1xf32, #tpu.memory_space<vmem>>, vector<1x1xf32>
    %31 = vector.broadcast %30 : vector<1x1xf32> to vector<1x128xf32>
    %32 = arith.addf %29, %31 : vector<1x128xf32>
    %c0_23 = arith.constant 0 : index
    %c0_24 = arith.constant 0 : index
    %33 = vector.load %arg10[%c0_23, %c0_24] : memref<1x128xf32, #tpu.memory_space<vmem>>, vector<1x128xf32>
    tpu.vector_store %arg10[%c0_23, %c0_24], %32 {strides = array<i32>} : memref<1x128xf32, #tpu.memory_space<vmem>>, vector<1x128xf32>,
    return
  }
  func.func @transform_0(%arg0: i32) -> (i32, i32) {
    %c0_i32 = arith.constant 0 : i32
    %c0_i32_0 = arith.constant 0 : i32
    return %c0_i32, %arg0 : i32, i32
  }
  func.func @transform_1(%arg0: i32) -> (i32, i32) {
    %c0_i32 = arith.constant 0 : i32
    %c0_i32_0 = arith.constant 0 : i32
    %c0_i32_1 = arith.constant 0 : i32
    return %c0_i32, %c0_i32_0 : i32, i32
  }
  func.func @transform_2(%arg0: i32) -> (i32, i32) {
    %c0_i32 = arith.constant 0 : i32
    %c0_i32_0 = arith.constant 0 : i32
    %c0_i32_1 = arith.constant 0 : i32
    return %c0_i32, %c0_i32_0 : i32, i32
  }
  func.func @transform_3(%arg0: i32) -> (i32, i32) {
    %c0_i32 = arith.constant 0 : i32
    %c0_i32_0 = arith.constant 0 : i32
    %c0_i32_1 = arith.constant 0 : i32
    return %c0_i32, %c0_i32_0 : i32, i32
  }
  func.func @transform_4(%arg0: i32) -> (i32, i32) {
    %c0_i32 = arith.constant 0 : i32
    %c0_i32_0 = arith.constant 0 : i32
    %c0_i32_1 = arith.constant 0 : i32
    return %c0_i32, %c0_i32_0 : i32, i32
  }
  func.func @transform_5(%arg0: i32) -> (i32, i32) {
    %c0_i32 = arith.constant 0 : i32
    %c0_i32_0 = arith.constant 0 : i32
    %c0_i32_1 = arith.constant 0 : i32
    return %c0_i32, %c0_i32_0 : i32, i32
  }
  func.func @transform_6(%arg0: i32) -> (i32, i32) {
    %c0_i32 = arith.constant 0 : i32
    %c0_i32_0 = arith.constant 0 : i32
    %c0_i32_1 = arith.constant 0 : i32
    return %c0_i32, %c0_i32_0 : i32, i32
  }
  func.func @transform_7(%arg0: i32) -> (i32, i32) {
    %c0_i32 = arith.constant 0 : i32
    %c0_i32_0 = arith.constant 0 : i32
    %c0_i32_1 = arith.constant 0 : i32
    return %c0_i32, %c0_i32_0 : i32, i32
  }
  func.func @transform_8(%arg0: i32) -> (i32, i32) {
    %c0_i32 = arith.constant 0 : i32
    %c0_i32_0 = arith.constant 0 : i32
    %c0_i32_1 = arith.constant 0 : i32
    return %c0_i32, %c0_i32_0 : i32, i32
  }
  func.func @transform_9(%arg0: i32) -> (i32, i32) {
    %c0_i32 = arith.constant 0 : i32
    %c0_i32_0 = arith.constant 0 : i32
    return %c0_i32, %arg0 : i32, i32
  }
}

</mosaic_0001>

<llo_original>
// kernel: tpu_custom_call.1
$region0: #{tpu_custom_call.1}
  #allocation0 [shape = 'u32[]', space=smem, size = 0x4, offset = 0x4, fixed_abs, tag = 'smem constant byte address 0x4 - core index']
  #allocation1 [shape = 'u32[72,128]{1,0:T(1,128)}', space=vmem, size = 0x9000, scoped, tag = 'internal scratch']
  #allocation2 [shape = 'f32[1,1]{1,0:T(1,128)S(1)}', space=vmem, size = 0x200, scoped, tag = 'scoped memory for tpu_custom_call.1']
  %s0 = inlined_call_operand.vmem [shape: f32[8,384], index: 0, kind: input, shape index: {}]
  %s1 = inlined_call_operand.vmem [shape: bf16[256,8], index: 1, kind: input, shape index: {}]
  %s2 = inlined_call_operand.vmem [shape: bf16[256,1], index: 2, kind: input, shape index: {}]
  %s3 = inlined_call_operand.hbm [shape: bf16[1024,256], index: 3, kind: input, shape index: {}]
  %s4 = inlined_call_operand.vmem [shape: bf16[1024,1], index: 4, kind: input, shape index: {}]
  %s5 = inlined_call_operand.hbm [shape: bf16[256,1024], index: 5, kind: input, shape index: {}]
  %s6 = inlined_call_operand.vmem [shape: f32[256,1], index: 6, kind: input, shape index: {}]
  %s7 = inlined_call_operand.vmem [shape: f32[256,1], index: 7, kind: input, shape index: {}]
  %s8 = inlined_call_operand.<no memory space> [shape: f32[1,1], index: 8, kind: input, shape index: {}]
  %s9 = inlined_call_operand.hbm [shape: f32[1,384], index: 9, kind: output, shape index: {}]
  %s10 = sld [smem:[#allocation0]]
  $region77: #{tpu_custom_call.1} parent=0
    _
  %s12 = ssub.s32 1, %s10
  %s13 = scalar_select 0, %s12, %s10
  %v14 = vstv %s8
  %15 = vst [vmem:[#allocation2] sm:$0x1] %v14
  $region1: #{tpu_custom_call.1} parent=0
    #allocation3 [shape = 'u8[524288]{0}', space=vmem, size = 0x80000, scoped, tag = 'input window, operand 3, single buffered']
    #allocation4 [shape = 's32[2]{0}', space=sflag, size = 0x8, scoped, tag = 'scoped memory for tpu_custom_call.1']
    #allocation5 [shape = 's32[2]{0}', space=sflag, size = 0x8, scoped, tag = 'scoped memory for tpu_custom_call.1']
    #allocation6 [shape = 'u8[524288]{0}', space=vmem, size = 0x80000, scoped, tag = 'input window, operand 5, single buffered']
    #allocation7 [shape = 's32[1]{0}', space=sflag, size = 0x4, scoped, tag = 'scoped memory for tpu_custom_call.1']
    #allocation8 [shape = 'u8[1024]{0}', space=vmem, size = 0x400, scoped, tag = 'output window, operand 0']
    %16 = vsyncpa [#allocation4], 0
    %17 = vsyncpa [#allocation7], 0
    %18 = vsyncpa [#allocation5], 0
    %s19 = scalar_lea.sflag [#allocation5], 1
    %20 = vsyncpa %s19, 0
    loop: start=0, step=1, limit=5
    $region2: #{tpu_custom_call.1} parent=1 // loop_pre_header
      _
    $region3: #{tpu_custom_call.1} parent=1 // loop_header
      %s22 = sphi 0, %s26
      %p23 = scmp.ge.s32.totalorder %s22, 5
      %s32 = sphi 0, %s34
      %s35 = sphi 0, %s32
      %s36 = sphi 0, %s35
      %s52 = sphi 0, %s36
      %s56 = sphi 0, %s56
      %s58 = sphi 0, %s56
      %s59 = sphi 0, %s58
      %s73 = sphi 0, %s59
      %s77 = sphi 0, %s77
      %s79 = sphi 0, %s77
      %s80 = sphi 0, %s79
      %s94 = sphi 0, %s80
      %s98 = sphi 0, %s98
      %s100 = sphi 0, %s98
      %s101 = sphi 0, %s100
      %s115 = sphi 0, %s101
      %s119 = sphi 0, %s119
      %s121 = sphi 0, %s119
      %s122 = sphi 0, %s121
      %s136 = sphi 0, %s122
      %s140 = sphi 0, %s140
      %s142 = sphi 0, %s140
      %s143 = sphi 0, %s142
      %s157 = sphi 0, %s143
      %s161 = sphi 0, %s161
      %s163 = sphi 0, %s161
      %s164 = sphi 0, %s163
      %s178 = sphi 0, %s164
      %s182 = sphi 0, %s182
      %s184 = sphi 0, %s182
      %s185 = sphi 0, %s184
      %s199 = sphi 0, %s185
      %s203 = sphi 0, %s203
      %s205 = sphi 0, %s203
      %s206 = sphi 0, %s205
      %s220 = sphi 0, %s206
      %s226 = sphi 0, %s228
      %s229 = sphi 0, %s226
      %s230 = sphi 0, %s229
      %s246 = sphi 0, %s230
    $region4: #{tpu_custom_call.1} parent=1 // loop_header_branch
      %25 = sbr.rel (%p23) target = $region8
    $region5: #{tpu_custom_call.1} parent=1 // loop_body
      %s27 = ssub.s32 %s22, 1
      %s28 = ssub.s32 %s22, 2
      %s29 = sadd.s32 %s22, 1
      %s30 = ssub.s32 %s22, %s29
      %p31 = scmp.eq.s32.totalorder %s30, 0
      %s33 = sadd.s32 %s32, 1
      %s34 = scalar_select %p31, %s32, %s33
      %p37 = pneg %p31
      %p38 = scmp.eq.s32.totalorder %s22, 2
      %p39 = por %p37, %p38
      %p40 = scmp.ne.s32.totalorder %s32, %s35
      %p41 = scmp.eq.s32.totalorder %s22, 0
      %p42 = por %p40, %p41
      %p43 = scmp.ne.s32.totalorder %s32, %s35
      %p44 = scmp.eq.s32.totalorder %s27, 2
      %p45 = por %p43, %p44
      %p46 = scmp.ne.s32.totalorder %s35, %s36
      %p47 = scmp.eq.s32.totalorder %s27, 0
      %p48 = por %p46, %p47
      %p49 = scmp.ne.s32.totalorder %s35, %s36
      %p50 = scmp.eq.s32.totalorder %s28, 2
      %p51 = por %p49, %p50
      %p53 = scmp.ne.s32.totalorder %s36, %s52
      %p54 = scmp.eq.s32.totalorder %s28, 0
      %p55 = por %p53, %p54
      %s57 = sadd.s32 %s56, 1
      %p60 = scmp.eq.s32.totalorder %s22, 2
      %p61 = scmp.ne.s32.totalorder %s56, %s58
      %p62 = scmp.eq.s32.totalorder %s22, 0
      %p63 = por %p61, %p62
      %p64 = scmp.ne.s32.totalorder %s56, %s58
      %p65 = scmp.eq.s32.totalorder %s27, 2
      %p66 = por %p64, %p65
      %p67 = scmp.ne.s32.totalorder %s58, %s59
      %p68 = scmp.eq.s32.totalorder %s27, 0
      %p69 = por %p67, %p68
      %p70 = scmp.ne.s32.totalorder %s58, %s59
      %p71 = scmp.eq.s32.totalorder %s28, 2
      %p72 = por %p70, %p71
      %p74 = scmp.ne.s32.totalorder %s59, %s73
      %p75 = scmp.eq.s32.totalorder %s28, 0
      %p76 = por %p74, %p75
      %s78 = sadd.s32 %s77, 1
      %p81 = scmp.eq.s32.totalorder %s22, 2
      %p82 = scmp.ne.s32.totalorder %s77, %s79
      %p83 = scmp.eq.s32.totalorder %s22, 0
      %p84 = por %p82, %p83
      %p85 = scmp.ne.s32.totalorder %s77, %s79
      %p86 = scmp.eq.s32.totalorder %s27, 2
      %p87 = por %p85, %p86
      %p88 = scmp.ne.s32.totalorder %s79, %s80
      %p89 = scmp.eq.s32.totalorder %s27, 0
      %p90 = por %p88, %p89
      %p91 = scmp.ne.s32.totalorder %s79, %s80
      %p92 = scmp.eq.s32.totalorder %s28, 2
      %p93 = por %p91, %p92
      %p95 = scmp.ne.s32.totalorder %s80, %s94
      %p96 = scmp.eq.s32.totalorder %s28, 0
      %p97 = por %p95, %p96
      %s99 = sadd.s32 %s98, 1
      %p102 = scmp.eq.s32.totalorder %s22, 2
      %p103 = scmp.ne.s32.totalorder %s98, %s100
      %p104 = scmp.eq.s32.totalorder %s22, 0
      %p105 = por %p103, %p104
      %p106 = scmp.ne.s32.totalorder %s98, %s100
      %p107 = scmp.eq.s32.totalorder %s27, 2
      %p108 = por %p106, %p107
      %p109 = scmp.ne.s32.totalorder %s100, %s101
      %p110 = scmp.eq.s32.totalorder %s27, 0
      %p111 = por %p109, %p110
      %p112 = scmp.ne.s32.totalorder %s100, %s101
      %p113 = scmp.eq.s32.totalorder %s28, 2
      %p114 = por %p112, %p113
      %p116 = scmp.ne.s32.totalorder %s101, %s115
      %p117 = scmp.eq.s32.totalorder %s28, 0
      %p118 = por %p116, %p117
      %s120 = sadd.s32 %s119, 1
      %p123 = scmp.eq.s32.totalorder %s22, 2
      %p124 = scmp.ne.s32.totalorder %s119, %s121
      %p125 = scmp.eq.s32.totalorder %s22, 0
      %p126 = por %p124, %p125
      %p127 = scmp.ne.s32.totalorder %s119, %s121
      %p128 = scmp.eq.s32.totalorder %s27, 2
      %p129 = por %p127, %p128
      %p130 = scmp.ne.s32.totalorder %s121, %s122
      %p131 = scmp.eq.s32.totalorder %s27, 0
      %p132 = por %p130, %p131
      %p133 = scmp.ne.s32.totalorder %s121, %s122
      %p134 = scmp.eq.s32.totalorder %s28, 2
      %p135 = por %p133, %p134
      %p137 = scmp.ne.s32.totalorder %s122, %s136
      %p138 = scmp.eq.s32.totalorder %s28, 0
      %p139 = por %p137, %p138
      %s141 = sadd.s32 %s140, 1
      %p144 = scmp.eq.s32.totalorder %s22, 2
      %p145 = scmp.ne.s32.totalorder %s140, %s142
      %p146 = scmp.eq.s32.totalorder %s22, 0
      %p147 = por %p145, %p146
      %p148 = scmp.ne.s32.totalorder %s140, %s142
      %p149 = scmp.eq.s32.totalorder %s27, 2
      %p150 = por %p148, %p149
      %p151 = scmp.ne.s32.totalorder %s142, %s143
      %p152 = scmp.eq.s32.totalorder %s27, 0
      %p153 = por %p151, %p152
      %p154 = scmp.ne.s32.totalorder %s142, %s143
      %p155 = scmp.eq.s32.totalorder %s28, 2
      %p156 = por %p154, %p155
      %p158 = scmp.ne.s32.totalorder %s143, %s157
      %p159 = scmp.eq.s32.totalorder %s28, 0
      %p160 = por %p158, %p159
      %s162 = sadd.s32 %s161, 1
      %p165 = scmp.eq.s32.totalorder %s22, 2
      %p166 = scmp.ne.s32.totalorder %s161, %s163
      %p167 = scmp.eq.s32.totalorder %s22, 0
      %p168 = por %p166, %p167
      %p169 = scmp.ne.s32.totalorder %s161, %s163
      %p170 = scmp.eq.s32.totalorder %s27, 2
      %p171 = por %p169, %p170
      %p172 = scmp.ne.s32.totalorder %s163, %s164
      %p173 = scmp.eq.s32.totalorder %s27, 0
      %p174 = por %p172, %p173
      %p175 = scmp.ne.s32.totalorder %s163, %s164
      %p176 = scmp.eq.s32.totalorder %s28, 2
      %p177 = por %p175, %p176
      %p179 = scmp.ne.s32.totalorder %s164, %s178
      %p180 = scmp.eq.s32.totalorder %s28, 0
      %p181 = por %p179, %p180
      %s183 = sadd.s32 %s182, 1
      %p186 = scmp.eq.s32.totalorder %s22, 2
      %p187 = scmp.ne.s32.totalorder %s182, %s184
      %p188 = scmp.eq.s32.totalorder %s22, 0
      %p189 = por %p187, %p188
      %p190 = scmp.ne.s32.totalorder %s182, %s184
      %p191 = scmp.eq.s32.totalorder %s27, 2
      %p192 = por %p190, %p191
      %p193 = scmp.ne.s32.totalorder %s184, %s185
      %p194 = scmp.eq.s32.totalorder %s27, 0
      %p195 = por %p193, %p194
      %p196 = scmp.ne.s32.totalorder %s184, %s185
      %p197 = scmp.eq.s32.totalorder %s28, 2
      %p198 = por %p196, %p197
      %p200 = scmp.ne.s32.totalorder %s185, %s199
      %p201 = scmp.eq.s32.totalorder %s28, 0
      %p202 = por %p200, %p201
      %s204 = sadd.s32 %s203, 1
      %p207 = scmp.eq.s32.totalorder %s22, 2
      %p208 = scmp.ne.s32.totalorder %s203, %s205
      %p209 = scmp.eq.s32.totalorder %s22, 0
      %p210 = por %p208, %p209
      %p211 = scmp.ne.s32.totalorder %s203, %s205
      %p212 = scmp.eq.s32.totalorder %s27, 2
      %p213 = por %p211, %p212
      %p214 = scmp.ne.s32.totalorder %s205, %s206
      %p215 = scmp.eq.s32.totalorder %s27, 0
      %p216 = por %p214, %p215
      %p217 = scmp.ne.s32.totalorder %s205, %s206
      %p218 = scmp.eq.s32.totalorder %s28, 2
      %p219 = por %p217, %p218
      %p221 = scmp.ne.s32.totalorder %s206, %s220
      %p222 = scmp.eq.s32.totalorder %s28, 0
      %p223 = por %p221, %p222
      %s224 = ssub.s32 %s22, %s29
      %p225 = scmp.eq.s32.totalorder %s224, 0
      %s227 = sadd.s32 %s226, 1
      %s228 = scalar_select %p225, %s226, %s227
      %p231 = pneg %p225
      %p232 = scmp.eq.s32.totalorder %s22, 2
      %p233 = por %p231, %p232
      %p234 = scmp.ne.s32.totalorder %s226, %s229
      %p235 = scmp.eq.s32.totalorder %s22, 0
      %p236 = por %p234, %p235
      %p237 = scmp.ne.s32.totalorder %s226, %s229
      %p238 = scmp.eq.s32.totalorder %s27, 2
      %p239 = por %p237, %p238
      %p240 = scmp.ne.s32.totalorder %s229, %s230
      %p241 = scmp.eq.s32.totalorder %s27, 0
      %p242 = por %p240, %p241
      %p243 = scmp.ne.s32.totalorder %s229, %s230
      %p244 = scmp.eq.s32.totalorder %s28, 2
      %p245 = por %p243, %p244
      %p247 = scmp.ne.s32.totalorder %s230, %s246
      %p248 = scmp.eq.s32.totalorder %s28, 0
      %p249 = por %p247, %p248
      %p250 = scmp.le.s32.totalorder 1, %s22
      %p251 = scmp.lt.s32.totalorder %s22, 4
      %p252 = pnand %p250, %p251
      %p253 = pneg %p252
      // Predicated region
      $region9: #{tpu_custom_call.1} parent=5 // pred_check
        _
      $region10: #{tpu_custom_call.1} parent=5 // pred_check_branch
        %255 = sbr.rel (%p252) target = $region12
      $region11: #{tpu_custom_call.1} parent=5 // pred_region
        %s256 = ssub.s32 %s22, 1
        // Predicated region
        $region13: #{tpu_custom_call.1} parent=11 // pred_check
          %p257 = pneg %p69
        $region14: #{tpu_custom_call.1} parent=11 // pred_check_branch
          %259 = sbr.rel (%p257) target = $region16
        $region15: #{tpu_custom_call.1} parent=11 // pred_region
          _
        $region16: #{tpu_custom_call.1} parent=11 // pred_fallthru
          _
        // Predicated region
        $region17: #{tpu_custom_call.1} parent=11 // pred_check
          %p260 = pneg %p90
        $region18: #{tpu_custom_call.1} parent=11 // pred_check_branch
          %262 = sbr.rel (%p260) target = $region20
        $region19: #{tpu_custom_call.1} parent=11 // pred_region
          _
        $region20: #{tpu_custom_call.1} parent=11 // pred_fallthru
          _
        // Predicated region
        $region21: #{tpu_custom_call.1} parent=11 // pred_check
          %p263 = pneg %p111
        $region22: #{tpu_custom_call.1} parent=11 // pred_check_branch
          %265 = sbr.rel (%p263) target = $region24
        $region23: #{tpu_custom_call.1} parent=11 // pred_region
          %267 = vsyncadd [#allocation4], 0
          %s268 = sshll.u32 %s3, 4
          %s269 = int_to_ptr.hbm [resolvable:$true] %s268
          %s270 = sshll.u32 [#allocation3], 4
          %s271 = int_to_ptr.vmem [resolvable:$true] %s270
          %276 = dma.hbm_to_vmem [thread:$0]  %s269, 16384, %s271, [#allocation4], 128, 128, 8
        $region24: #{tpu_custom_call.1} parent=11 // pred_fallthru
          _
        // Predicated region
        $region25: #{tpu_custom_call.1} parent=11 // pred_check
          %p277 = pneg %p132
        $region26: #{tpu_custom_call.1} parent=11 // pred_check_branch
          %279 = sbr.rel (%p277) target = $region28
        $region27: #{tpu_custom_call.1} parent=11 // pred_region
          _
        $region28: #{tpu_custom_call.1} parent=11 // pred_fallthru
          _
        // Predicated region
        $region29: #{tpu_custom_call.1} parent=11 // pred_check
          %p280 = pneg %p153
        $region30: #{tpu_custom_call.1} parent=11 // pred_check_branch
          %282 = sbr.rel (%p280) target = $region32
        $region31: #{tpu_custom_call.1} parent=11 // pred_region
          %284 = vsyncadd [#allocation7], 0
          %s285 = sshll.u32 %s5, 4
          %s286 = int_to_ptr.hbm [resolvable:$true] %s285
          %s287 = sshll.u32 [#allocation6], 4
          %s288 = int_to_ptr.vmem [resolvable:$true] %s287
          %293 = dma.hbm_to_vmem [thread:$0]  %s286, 16384, %s288, [#allocation7], 512, 512, 32
        $region32: #{tpu_custom_call.1} parent=11 // pred_fallthru
          _
        // Predicated region
        $region33: #{tpu_custom_call.1} parent=11 // pred_check
          %p294 = pneg %p174
        $region34: #{tpu_custom_call.1} parent=11 // pred_check_branch
          %296 = sbr.rel (%p294) target = $region36
        $region35: #{tpu_custom_call.1} parent=11 // pred_region
          _
        $region36: #{tpu_custom_call.1} parent=11 // pred_fallthru
          _
        // Predicated region
        $region37: #{tpu_custom_call.1} parent=11 // pred_check
          %p297 = pneg %p195
        $region38: #{tpu_custom_call.1} parent=11 // pred_check_branch
          %299 = sbr.rel (%p297) target = $region40
        $region39: #{tpu_custom_call.1} parent=11 // pred_region
          _
        $region40: #{tpu_custom_call.1} parent=11 // pred_fallthru
          _
        // Predicated region
        $region41: #{tpu_custom_call.1} parent=11 // pred_check
          %p300 = pneg %p216
        $region42: #{tpu_custom_call.1} parent=11 // pred_check_branch
          %302 = sbr.rel (%p300) target = $region44
        $region43: #{tpu_custom_call.1} parent=11 // pred_region
          _
        $region44: #{tpu_custom_call.1} parent=11 // pred_fallthru
          _
      $region12: #{tpu_custom_call.1} parent=5 // pred_fallthru
        _
      %p303 = scmp.lt.s32.totalorder %s22, 3
      // Predicated region
      $region45: #{tpu_custom_call.1} parent=5 // pred_check
        %p304 = pneg %p303
      $region46: #{tpu_custom_call.1} parent=5 // pred_check_branch
        %306 = sbr.rel (%p304) target = $region48
      $region47: #{tpu_custom_call.1} parent=5 // pred_region
        // Predicated region
        $region49: #{tpu_custom_call.1} parent=47 // pred_check
          %p307 = pneg %p42
        $region50: #{tpu_custom_call.1} parent=47 // pred_check_branch
          %309 = sbr.rel (%p307) target = $region52
        $region51: #{tpu_custom_call.1} parent=47 // pred_region
          %p310 = scmp.lt.s32.totalorder %s22, 2
          %s311 = scalar_select %p310, %s22, 2
          %s312 = smul.addr %s311, 8
          %s313 = scalar_lea.vmem %s0, %s312
        $region52: #{tpu_custom_call.1} parent=47 // pred_fallthru
          _
      $region48: #{tpu_custom_call.1} parent=5 // pred_fallthru
        _
      %p314 = scmp.le.s32.totalorder 1, %s22
      %p315 = scmp.lt.s32.totalorder %s22, 4
      %p316 = pnand %p314, %p315
      %p317 = pneg %p316
      // Predicated region
      $region53: #{tpu_custom_call.1} parent=5 // pred_check
        _
      $region54: #{tpu_custom_call.1} parent=5 // pred_check_branch
        %319 = sbr.rel (%p316) target = $region56
      $region55: #{tpu_custom_call.1} parent=5 // pred_region
        %s320 = ssub.s32 %s22, 1
        // Predicated region
        $region57: #{tpu_custom_call.1} parent=55 // pred_check
          %p321 = pneg %p111
        $region58: #{tpu_custom_call.1} parent=55 // pred_check_branch
          %323 = sbr.rel (%p321) target = $region60
        $region59: #{tpu_custom_call.1} parent=55 // pred_region
          %325 = dma.done [#allocation4], 16384
        $region60: #{tpu_custom_call.1} parent=55 // pred_fallthru
          _
        // Predicated region
        $region61: #{tpu_custom_call.1} parent=55 // pred_check
          %p326 = pneg %p153
        $region62: #{tpu_custom_call.1} parent=55 // pred_check_branch
          %328 = sbr.rel (%p326) target = $region64
        $region63: #{tpu_custom_call.1} parent=55 // pred_region
          %330 = dma.done [#allocation7], 16384
        $region64: #{tpu_custom_call.1} parent=55 // pred_fallthru
          _
        %p331 = scmp.lt.s32.totalorder %s27, 2
        %s332 = scalar_select %p331, %s27, 2
        %s333 = smul.addr %s332, 8
        %s334 = scalar_lea.vmem %s0, %s333
        %p335 = pneg %p48
        %p336 = pneg %p45
        %p337 = pneg %p69
        %p338 = pneg %p66
        %p339 = pneg %p90
        %p340 = pneg %p87
        %p341 = pneg %p111
        %p342 = pneg %p108
        %p343 = pneg %p132
        %p344 = pneg %p129
        %p345 = pneg %p153
        %p346 = pneg %p150
        %p347 = pneg %p174
        %p348 = pneg %p171
        %p349 = pneg %p195
        %p350 = pneg %p192
        %p351 = pneg %p216
        %p352 = pneg %p213
        %p353 = pneg %p242
        %p354 = pneg %p239
        %s355 = sand.u32 %s229, 1
        %s356 = scalar_lea.sflag [#allocation5], %s355
        %s357 = sand.u32 %s229, 1
        %s358 = scalar_lea.vmem [#allocation8], %s357
        %p359 = scmp.lt.s32.totalorder %s27, 2
        %s360 = scalar_select %p359, %s27, 2
        %s361 = smul.addr %s360, 8
        %s362 = scalar_lea.vmem %s0, %s361
        %v364 = vld [vmem:[%s362] sm:$0xff]
        %v365 = vpack.c.bf16 %v364, %v364
        %v366 = vld [vmem:[%s1] sm:$0xf]
        %v367 = vld [vmem:[%s1 + $0x4] sm:$0xf]
        %v368 = vld [vmem:[%s1 + $0x8] sm:$0xf]
        %v369 = vld [vmem:[%s1 + $0xc] sm:$0xf]
        %v370 = vld [vmem:[%s1 + $0x10] sm:$0xf]
        %v371 = vld [vmem:[%s1 + $0x14] sm:$0xf]
        %v372 = vld [vmem:[%s1 + $0x18] sm:$0xf]
        %v373 = vld [vmem:[%s1 + $0x1c] sm:$0xf]
        %v374 = vld [vmem:[%s1 + $0x20] sm:$0xf]
        %v375 = vld [vmem:[%s1 + $0x24] sm:$0xf]
        %v376 = vld [vmem:[%s1 + $0x28] sm:$0xf]
        %v377 = vld [vmem:[%s1 + $0x2c] sm:$0xf]
        %v378 = vld [vmem:[%s1 + $0x30] sm:$0xf]
        %v379 = vld [vmem:[%s1 + $0x34] sm:$0xf]
        %v380 = vld [vmem:[%s1 + $0x38] sm:$0xf]
        %v381 = vld [vmem:[%s1 + $0x3c] sm:$0xf]
        %v382 = vld [vmem:[%s1 + $0x40] sm:$0xf]
        %v383 = vld [vmem:[%s1 + $0x44] sm:$0xf]
        %v384 = vld [vmem:[%s1 + $0x48] sm:$0xf]
        %v385 = vld [vmem:[%s1 + $0x4c] sm:$0xf]
        %v386 = vld [vmem:[%s1 + $0x50] sm:$0xf]
        %v387 = vld [vmem:[%s1 + $0x54] sm:$0xf]
        %v388 = vld [vmem:[%s1 + $0x58] sm:$0xf]
        %v389 = vld [vmem:[%s1 + $0x5c] sm:$0xf]
        %v390 = vld [vmem:[%s1 + $0x60] sm:$0xf]
        %v391 = vld [vmem:[%s1 + $0x64] sm:$0xf]
        %v392 = vld [vmem:[%s1 + $0x68] sm:$0xf]
        %v393 = vld [vmem:[%s1 + $0x6c] sm:$0xf]
        %v394 = vld [vmem:[%s1 + $0x70] sm:$0xf]
        %v395 = vld [vmem:[%s1 + $0x74] sm:$0xf]
        %v396 = vld [vmem:[%s1 + $0x78] sm:$0xf]
        %v397 = vld [vmem:[%s1 + $0x7c] sm:$0xf]
        %v430 = vunpack.c.l.b16 %v366
        %v431 = vunpack.c.l.b16 %v367
        %v432 = vunpack.c.l.b16 %v368
        %v433 = vunpack.c.l.b16 %v369
        %v434 = vunpack.c.l.b16 %v370
        %v435 = vunpack.c.l.b16 %v371
        %v436 = vunpack.c.l.b16 %v372
        %v437 = vunpack.c.l.b16 %v373
        %v438 = vunpack.c.l.b16 %v374
        %v439 = vunpack.c.l.b16 %v375
        %v440 = vunpack.c.l.b16 %v376
        %v441 = vunpack.c.l.b16 %v377
        %v442 = vunpack.c.l.b16 %v378
        %v443 = vunpack.c.l.b16 %v379
        %v444 = vunpack.c.l.b16 %v380
        %v445 = vunpack.c.l.b16 %v381
        %v446 = vunpack.c.l.b16 %v382
        %v447 = vunpack.c.l.b16 %v383
        %v448 = vunpack.c.l.b16 %v384
        %v449 = vunpack.c.l.b16 %v385
        %v450 = vunpack.c.l.b16 %v386
        %v451 = vunpack.c.l.b16 %v387
        %v452 = vunpack.c.l.b16 %v388
        %v453 = vunpack.c.l.b16 %v389
        %v454 = vunpack.c.l.b16 %v390
        %v455 = vunpack.c.l.b16 %v391
        %v456 = vunpack.c.l.b16 %v392
        %v457 = vunpack.c.l.b16 %v393
        %v458 = vunpack.c.l.b16 %v394
        %v459 = vunpack.c.l.b16 %v395
        %v460 = vunpack.c.l.b16 %v396
        %v461 = vunpack.c.l.b16 %v397
        %v462 = vpack.c.b16 %v431, %v430
        %v463 = vpack.c.b16 %v433, %v432
        %v464 = vpack.c.b16 %v435, %v434
        %v465 = vpack.c.b16 %v437, %v436
        %v466 = vpack.c.b16 %v439, %v438
        %v467 = vpack.c.b16 %v441, %v440
        %v468 = vpack.c.b16 %v443, %v442
        %v469 = vpack.c.b16 %v445, %v444
        %v470 = vpack.c.b16 %v447, %v446
        %v471 = vpack.c.b16 %v449, %v448
        %v472 = vpack.c.b16 %v451, %v450
        %v473 = vpack.c.b16 %v453, %v452
        %v474 = vpack.c.b16 %v455, %v454
        %v475 = vpack.c.b16 %v457, %v456
        %v476 = vpack.c.b16 %v459, %v458
        %v477 = vpack.c.b16 %v461, %v460
        %vm478 = vcmask 64512
        %v480 = vsel %vm478, %v462, 0
        %v483 = vsel %vm478, %v463, 0
        %v486 = vsel %vm478, %v464, 0
        %v489 = vsel %vm478, %v465, 0
        %v492 = vsel %vm478, %v466, 0
        %v495 = vsel %vm478, %v467, 0
        %v498 = vsel %vm478, %v468, 0
        %v501 = vsel %vm478, %v469, 0
        %v504 = vsel %vm478, %v470, 0
        %v507 = vsel %vm478, %v471, 0
        %v510 = vsel %vm478, %v472, 0
        %v513 = vsel %vm478, %v473, 0
        %v516 = vsel %vm478, %v474, 0
        %v519 = vsel %vm478, %v475, 0
        %v522 = vsel %vm478, %v476, 0
        %v525 = vsel %vm478, %v477, 0
        %vm527 = vcmask 1043456
        %v529 = vsel %vm527, %v365, 0
        %531 = vmatpush.bf16.msra.mxu0 0
        %532 = vmatpush.bf16.msra.mxu0 0
        %533 = vmatpush.bf16.msra.mxu0 0
        %534 = vmatpush.bf16.msra.mxu0 0
        %535 = vmatpush.bf16.msra.mxu0 0
        %536 = vmatpush.bf16.msra.mxu0 0
        %537 = vmatpush.bf16.msra.mxu0 0
        %538 = vmatpush.bf16.msra.mxu0 %v529
        %539 = vmatmul.bf16.gmra.mxu0 %v480
        %v540 = vpop.f32.mrf.mxu0
        %v541 = vadd.f32 0.0, %v540
        %v542 = vpop.f32.mrf.mxu0
        %v543 = vadd.f32 0.0, %v542
        %544 = vmatmul.bf16.gmra.mxu0 %v483
        %v545 = vpop.f32.mrf.mxu0
        %v546 = vadd.f32 0.0, %v545
        %v547 = vpop.f32.mrf.mxu0
        %v548 = vadd.f32 0.0, %v547
        %549 = vmatmul.bf16.gmra.mxu0 %v486
        %v550 = vpop.f32.mrf.mxu0
        %v551 = vadd.f32 0.0, %v550
        %v552 = vpop.f32.mrf.mxu0
        %v553 = vadd.f32 0.0, %v552
        %554 = vmatmul.bf16.gmra.mxu0 %v489
        %v555 = vpop.f32.mrf.mxu0
        %v556 = vadd.f32 0.0, %v555
        %v557 = vpop.f32.mrf.mxu0
        %v558 = vadd.f32 0.0, %v557
        %559 = vmatmul.bf16.gmra.mxu0 %v492
        %v560 = vpop.f32.mrf.mxu0
        %v561 = vadd.f32 0.0, %v560
        %v562 = vpop.f32.mrf.mxu0
        %v563 = vadd.f32 0.0, %v562
        %564 = vmatmul.bf16.gmra.mxu0 %v495
        %v565 = vpop.f32.mrf.mxu0
        %v566 = vadd.f32 0.0, %v565
        %v567 = vpop.f32.mrf.mxu0
        %v568 = vadd.f32 0.0, %v567
        %569 = vmatmul.bf16.gmra.mxu0 %v498
        %v570 = vpop.f32.mrf.mxu0
        %v571 = vadd.f32 0.0, %v570
        %v572 = vpop.f32.mrf.mxu0
        %v573 = vadd.f32 0.0, %v572
        %574 = vmatmul.bf16.gmra.mxu0 %v501
        %v575 = vpop.f32.mrf.mxu0
        %v576 = vadd.f32 0.0, %v575
        %v577 = vpop.f32.mrf.mxu0
        %v578 = vadd.f32 0.0, %v577
        %579 = vmatmul.bf16.gmra.mxu0 %v504
        %v580 = vpop.f32.mrf.mxu0
        %v581 = vadd.f32 0.0, %v580
        %v582 = vpop.f32.mrf.mxu0
        %v583 = vadd.f32 0.0, %v582
        %584 = vmatmul.bf16.gmra.mxu0 %v507
        %v585 = vpop.f32.mrf.mxu0
        %v586 = vadd.f32 0.0, %v585
        %v587 = vpop.f32.mrf.mxu0
        %v588 = vadd.f32 0.0, %v587
        %589 = vmatmul.bf16.gmra.mxu0 %v510
        %v590 = vpop.f32.mrf.mxu0
        %v591 = vadd.f32 0.0, %v590
        %v592 = vpop.f32.mrf.mxu0
        %v593 = vadd.f32 0.0, %v592
        %594 = vmatmul.bf16.gmra.mxu0 %v513
        %v595 = vpop.f32.mrf.mxu0
        %v596 = vadd.f32 0.0, %v595
        %v597 = vpop.f32.mrf.mxu0
        %v598 = vadd.f32 0.0, %v597
        %599 = vmatmul.bf16.gmra.mxu0 %v516
        %v600 = vpop.f32.mrf.mxu0
        %v601 = vadd.f32 0.0, %v600
        %v602 = vpop.f32.mrf.mxu0
        %v603 = vadd.f32 0.0, %v602
        %604 = vmatmul.bf16.gmra.mxu0 %v519
        %v605 = vpop.f32.mrf.mxu0
        %v606 = vadd.f32 0.0, %v605
        %v607 = vpop.f32.mrf.mxu0
        %v608 = vadd.f32 0.0, %v607
        %609 = vmatmul.bf16.gmra.mxu0 %v522
        %v610 = vpop.f32.mrf.mxu0
        %v611 = vadd.f32 0.0, %v610
        %v612 = vpop.f32.mrf.mxu0
        %v613 = vadd.f32 0.0, %v612
        %614 = vmatmul.bf16.gmra.mxu0 %v525
        %v615 = vpop.f32.mrf.mxu0
        %v616 = vadd.f32 0.0, %v615
        %v617 = vpop.f32.mrf.mxu0
        %v618 = vadd.f32 0.0, %v617
        %619 = vdwg.mxu0
        %v620 = vpack.c.bf16 %v541, %v541
        %v621 = vpack.c.bf16 %v543, %v543
        %v622 = vpack.c.bf16 %v546, %v546
        %v623 = vpack.c.bf16 %v548, %v548
        %v624 = vpack.c.bf16 %v551, %v551
        %v625 = vpack.c.bf16 %v553, %v553
        %v626 = vpack.c.bf16 %v556, %v556
        %v627 = vpack.c.bf16 %v558, %v558
        %v628 = vpack.c.bf16 %v561, %v561
        %v629 = vpack.c.bf16 %v563, %v563
        %v630 = vpack.c.bf16 %v566, %v566
        %v631 = vpack.c.bf16 %v568, %v568
        %v632 = vpack.c.bf16 %v571, %v571
        %v633 = vpack.c.bf16 %v573, %v573
        %v634 = vpack.c.bf16 %v576, %v576
        %v635 = vpack.c.bf16 %v578, %v578
        %v636 = vpack.c.bf16 %v581, %v581
        %v637 = vpack.c.bf16 %v583, %v583
        %v638 = vpack.c.bf16 %v586, %v586
        %v639 = vpack.c.bf16 %v588, %v588
        %v640 = vpack.c.bf16 %v591, %v591
        %v641 = vpack.c.bf16 %v593, %v593
        %v642 = vpack.c.bf16 %v596, %v596
        %v643 = vpack.c.bf16 %v598, %v598
        %v644 = vpack.c.bf16 %v601, %v601
        %v645 = vpack.c.bf16 %v603, %v603
        %v646 = vpack.c.bf16 %v606, %v606
        %v647 = vpack.c.bf16 %v608, %v608
        %v648 = vpack.c.bf16 %v611, %v611
        %v649 = vpack.c.bf16 %v613, %v613
        %v650 = vpack.c.bf16 %v616, %v616
        %v651 = vpack.c.bf16 %v618, %v618
        %v652 = vld [vmem:[%s2] sm:$0xf]
        %v653 = vld [vmem:[%s2 + $0x4] sm:$0xf]
        %v654 = vld [vmem:[%s2 + $0x8] sm:$0xf]
        %v655 = vld [vmem:[%s2 + $0xc] sm:$0xf]
        %v656 = vld [vmem:[%s2 + $0x10] sm:$0xf]
        %v657 = vld [vmem:[%s2 + $0x14] sm:$0xf]
        %v658 = vld [vmem:[%s2 + $0x18] sm:$0xf]
        %v659 = vld [vmem:[%s2 + $0x1c] sm:$0xf]
        %v660 = vld [vmem:[%s2 + $0x20] sm:$0xf]
        %v661 = vld [vmem:[%s2 + $0x24] sm:$0xf]
        %v662 = vld [vmem:[%s2 + $0x28] sm:$0xf]
        %v663 = vld [vmem:[%s2 + $0x2c] sm:$0xf]
        %v664 = vld [vmem:[%s2 + $0x30] sm:$0xf]
        %v665 = vld [vmem:[%s2 + $0x34] sm:$0xf]
        %v666 = vld [vmem:[%s2 + $0x38] sm:$0xf]
        %v667 = vld [vmem:[%s2 + $0x3c] sm:$0xf]
        %v668 = vld [vmem:[%s2 + $0x40] sm:$0xf]
        %v669 = vld [vmem:[%s2 + $0x44] sm:$0xf]
        %v670 = vld [vmem:[%s2 + $0x48] sm:$0xf]
        %v671 = vld [vmem:[%s2 + $0x4c] sm:$0xf]
        %v672 = vld [vmem:[%s2 + $0x50] sm:$0xf]
        %v673 = vld [vmem:[%s2 + $0x54] sm:$0xf]
        %v674 = vld [vmem:[%s2 + $0x58] sm:$0xf]
        %v675 = vld [vmem:[%s2 + $0x5c] sm:$0xf]
        %v676 = vld [vmem:[%s2 + $0x60] sm:$0xf]
        %v677 = vld [vmem:[%s2 + $0x64] sm:$0xf]
        %v678 = vld [vmem:[%s2 + $0x68] sm:$0xf]
        %v679 = vld [vmem:[%s2 + $0x6c] sm:$0xf]
        %v680 = vld [vmem:[%s2 + $0x70] sm:$0xf]
        %v681 = vld [vmem:[%s2 + $0x74] sm:$0xf]
        %v682 = vld [vmem:[%s2 + $0x78] sm:$0xf]
        %v683 = vld [vmem:[%s2 + $0x7c] sm:$0xf]
        %685 = vset.pattern.permute.xlu0 0
        %686 = vperm.xlu0 %685, %v652
        %v687 = vpop.permute.xlu0 %686
        %v690 = vunpack.c.l.s4 839922192
        %v691 = vunpack.c.0.s8 %v690
        %v692 = vperm.slane %v687, %v691
        %694 = vset.pattern.permute.xlu0 0
        %695 = vperm.xlu0 %694, %v653
        %v696 = vpop.permute.xlu0 %695
        %v699 = vunpack.c.l.s4 839922192
        %v700 = vunpack.c.0.s8 %v699
        %v701 = vperm.slane %v696, %v700
        %703 = vset.pattern.permute.xlu0 0
        %704 = vperm.xlu0 %703, %v654
        %v705 = vpop.permute.xlu0 %704
        %v708 = vunpack.c.l.s4 839922192
        %v709 = vunpack.c.0.s8 %v708
        %v710 = vperm.slane %v705, %v709
        %712 = vset.pattern.permute.xlu0 0
        %713 = vperm.xlu0 %712, %v655
        %v714 = vpop.permute.xlu0 %713
        %v717 = vunpack.c.l.s4 839922192
        %v718 = vunpack.c.0.s8 %v717
        %v719 = vperm.slane %v714, %v718
        %721 = vset.pattern.permute.xlu0 0
        %722 = vperm.xlu0 %721, %v656
        %v723 = vpop.permute.xlu0 %722
        %v726 = vunpack.c.l.s4 839922192
        %v727 = vunpack.c.0.s8 %v726
        %v728 = vperm.slane %v723, %v727
        %730 = vset.pattern.permute.xlu0 0
        %731 = vperm.xlu0 %730, %v657
        %v732 = vpop.permute.xlu0 %731
        %v735 = vunpack.c.l.s4 839922192
        %v736 = vunpack.c.0.s8 %v735
        %v737 = vperm.slane %v732, %v736
        %739 = vset.pattern.permute.xlu0 0
        %740 = vperm.xlu0 %739, %v658
        %v741 = vpop.permute.xlu0 %740
        %v744 = vunpack.c.l.s4 839922192
        %v745 = vunpack.c.0.s8 %v744
        %v746 = vperm.slane %v741, %v745
        %748 = vset.pattern.permute.xlu0 0
        %749 = vperm.xlu0 %748, %v659
        %v750 = vpop.permute.xlu0 %749
        %v753 = vunpack.c.l.s4 839922192
        %v754 = vunpack.c.0.s8 %v753
        %v755 = vperm.slane %v750, %v754
        %757 = vset.pattern.permute.xlu0 0
        %758 = vperm.xlu0 %757, %v660
        %v759 = vpop.permute.xlu0 %758
        %v762 = vunpack.c.l.s4 839922192
        %v763 = vunpack.c.0.s8 %v762
        %v764 = vperm.slane %v759, %v763
        %766 = vset.pattern.permute.xlu0 0
        %767 = vperm.xlu0 %766, %v661
        %v768 = vpop.permute.xlu0 %767
        %v771 = vunpack.c.l.s4 839922192
        %v772 = vunpack.c.0.s8 %v771
        %v773 = vperm.slane %v768, %v772
        %775 = vset.pattern.permute.xlu0 0
        %776 = vperm.xlu0 %775, %v662
        %v777 = vpop.permute.xlu0 %776
        %v780 = vunpack.c.l.s4 839922192
        %v781 = vunpack.c.0.s8 %v780
        %v782 = vperm.slane %v777, %v781
        %784 = vset.pattern.permute.xlu0 0
        %785 = vperm.xlu0 %784, %v663
        %v786 = vpop.permute.xlu0 %785
        %v789 = vunpack.c.l.s4 839922192
        %v790 = vunpack.c.0.s8 %v789
        %v791 = vperm.slane %v786, %v790
        %793 = vset.pattern.permute.xlu0 0
        %794 = vperm.xlu0 %793, %v664
        %v795 = vpop.permute.xlu0 %794
        %v798 = vunpack.c.l.s4 839922192
        %v799 = vunpack.c.0.s8 %v798
        %v800 = vperm.slane %v795, %v799
        %802 = vset.pattern.permute.xlu0 0
        %803 = vperm.xlu0 %802, %v665
        %v804 = vpop.permute.xlu0 %803
        %v807 = vunpack.c.l.s4 839922192
        %v808 = vunpack.c.0.s8 %v807
        %v809 = vperm.slane %v804, %v808
        %811 = vset.pattern.permute.xlu0 0
        %812 = vperm.xlu0 %811, %v666
        %v813 = vpop.permute.xlu0 %812
        %v816 = vunpack.c.l.s4 839922192
        %v817 = vunpack.c.0.s8 %v816
        %v818 = vperm.slane %v813, %v817
        %820 = vset.pattern.permute.xlu0 0
        %821 = vperm.xlu0 %820, %v667
        %v822 = vpop.permute.xlu0 %821
        %v825 = vunpack.c.l.s4 839922192
        %v826 = vunpack.c.0.s8 %v825
        %v827 = vperm.slane %v822, %v826
        %829 = vset.pattern.permute.xlu0 0
        %830 = vperm.xlu0 %829, %v668
        %v831 = vpop.permute.xlu0 %830
        %v834 = vunpack.c.l.s4 839922192
        %v835 = vunpack.c.0.s8 %v834
        %v836 = vperm.slane %v831, %v835
        %838 = vset.pattern.permute.xlu0 0
        %839 = vperm.xlu0 %838, %v669
        %v840 = vpop.permute.xlu0 %839
        %v843 = vunpack.c.l.s4 839922192
        %v844 = vunpack.c.0.s8 %v843
        %v845 = vperm.slane %v840, %v844
        %847 = vset.pattern.permute.xlu0 0
        %848 = vperm.xlu0 %847, %v670
        %v849 = vpop.permute.xlu0 %848
        %v852 = vunpack.c.l.s4 839922192
        %v853 = vunpack.c.0.s8 %v852
        %v854 = vperm.slane %v849, %v853
        %856 = vset.pattern.permute.xlu0 0
        %857 = vperm.xlu0 %856, %v671
        %v858 = vpop.permute.xlu0 %857
        %v861 = vunpack.c.l.s4 839922192
        %v862 = vunpack.c.0.s8 %v861
        %v863 = vperm.slane %v858, %v862
        %865 = vset.pattern.permute.xlu0 0
        %866 = vperm.xlu0 %865, %v672
        %v867 = vpop.permute.xlu0 %866
        %v870 = vunpack.c.l.s4 839922192
        %v871 = vunpack.c.0.s8 %v870
        %v872 = vperm.slane %v867, %v871
        %874 = vset.pattern.permute.xlu0 0
        %875 = vperm.xlu0 %874, %v673
        %v876 = vpop.permute.xlu0 %875
        %v879 = vunpack.c.l.s4 839922192
        %v880 = vunpack.c.0.s8 %v879
        %v881 = vperm.slane %v876, %v880
        %883 = vset.pattern.permute.xlu0 0
        %884 = vperm.xlu0 %883, %v674
        %v885 = vpop.permute.xlu0 %884
        %v888 = vunpack.c.l.s4 839922192
        %v889 = vunpack.c.0.s8 %v888
        %v890 = vperm.slane %v885, %v889
        %892 = vset.pattern.permute.xlu0 0
        %893 = vperm.xlu0 %892, %v675
        %v894 = vpop.permute.xlu0 %893
        %v897 = vunpack.c.l.s4 839922192
        %v898 = vunpack.c.0.s8 %v897
        %v899 = vperm.slane %v894, %v898
        %901 = vset.pattern.permute.xlu0 0
        %902 = vperm.xlu0 %901, %v676
        %v903 = vpop.permute.xlu0 %902
        %v906 = vunpack.c.l.s4 839922192
        %v907 = vunpack.c.0.s8 %v906
        %v908 = vperm.slane %v903, %v907
        %910 = vset.pattern.permute.xlu0 0
        %911 = vperm.xlu0 %910, %v677
        %v912 = vpop.permute.xlu0 %911
        %v915 = vunpack.c.l.s4 839922192
        %v916 = vunpack.c.0.s8 %v915
        %v917 = vperm.slane %v912, %v916
        %919 = vset.pattern.permute.xlu0 0
        %920 = vperm.xlu0 %919, %v678
        %v921 = vpop.permute.xlu0 %920
        %v924 = vunpack.c.l.s4 839922192
        %v925 = vunpack.c.0.s8 %v924
        %v926 = vperm.slane %v921, %v925
        %928 = vset.pattern.permute.xlu0 0
        %929 = vperm.xlu0 %928, %v679
        %v930 = vpop.permute.xlu0 %929
        %v933 = vunpack.c.l.s4 839922192
        %v934 = vunpack.c.0.s8 %v933
        %v935 = vperm.slane %v930, %v934
        %937 = vset.pattern.permute.xlu0 0
        %938 = vperm.xlu0 %937, %v680
        %v939 = vpop.permute.xlu0 %938
        %v942 = vunpack.c.l.s4 839922192
        %v943 = vunpack.c.0.s8 %v942
        %v944 = vperm.slane %v939, %v943
        %946 = vset.pattern.permute.xlu0 0
        %947 = vperm.xlu0 %946, %v681
        %v948 = vpop.permute.xlu0 %947
        %v951 = vunpack.c.l.s4 839922192
        %v952 = vunpack.c.0.s8 %v951
        %v953 = vperm.slane %v948, %v952
        %955 = vset.pattern.permute.xlu0 0
        %956 = vperm.xlu0 %955, %v682
        %v957 = vpop.permute.xlu0 %956
        %v960 = vunpack.c.l.s4 839922192
        %v961 = vunpack.c.0.s8 %v960
        %v962 = vperm.slane %v957, %v961
        %964 = vset.pattern.permute.xlu0 0
        %965 = vperm.xlu0 %964, %v683
        %v966 = vpop.permute.xlu0 %965
        %v969 = vunpack.c.l.s4 839922192
        %v970 = vunpack.c.0.s8 %v969
        %v971 = vperm.slane %v966, %v970
        %v972 = vunpack.c.l.bf16 %v620
        %v973 = vunpack.c.l.bf16 %v621
        %v974 = vunpack.c.l.bf16 %v622
        %v975 = vunpack.c.l.bf16 %v623
        %v976 = vunpack.c.l.bf16 %v624
        %v977 = vunpack.c.l.bf16 %v625
        %v978 = vunpack.c.l.bf16 %v626
        %v979 = vunpack.c.l.bf16 %v627
        %v980 = vunpack.c.l.bf16 %v628
        %v981 = vunpack.c.l.bf16 %v629
        %v982 = vunpack.c.l.bf16 %v630
        %v983 = vunpack.c.l.bf16 %v631
        %v984 = vunpack.c.l.bf16 %v632
        %v985 = vunpack.c.l.bf16 %v633
        %v986 = vunpack.c.l.bf16 %v634
        %v987 = vunpack.c.l.bf16 %v635
        %v988 = vunpack.c.l.bf16 %v636
        %v989 = vunpack.c.l.bf16 %v637
        %v990 = vunpack.c.l.bf16 %v638
        %v991 = vunpack.c.l.bf16 %v639
        %v992 = vunpack.c.l.bf16 %v640
        %v993 = vunpack.c.l.bf16 %v641
        %v994 = vunpack.c.l.bf16 %v642
        %v995 = vunpack.c.l.bf16 %v643
        %v996 = vunpack.c.l.bf16 %v644
        %v997 = vunpack.c.l.bf16 %v645
        %v998 = vunpack.c.l.bf16 %v646
        %v999 = vunpack.c.l.bf16 %v647
        %v1000 = vunpack.c.l.bf16 %v648
        %v1001 = vunpack.c.l.bf16 %v649
        %v1002 = vunpack.c.l.bf16 %v650
        %v1003 = vunpack.c.l.bf16 %v651
        %v1004 = vunpack.c.l.bf16 %v692
        %v1005 = vunpack.c.l.bf16 %v701
        %v1006 = vunpack.c.l.bf16 %v710
        %v1007 = vunpack.c.l.bf16 %v719
        %v1008 = vunpack.c.l.bf16 %v728
        %v1009 = vunpack.c.l.bf16 %v737
        %v1010 = vunpack.c.l.bf16 %v746
        %v1011 = vunpack.c.l.bf16 %v755
        %v1012 = vunpack.c.l.bf16 %v764
        %v1013 = vunpack.c.l.bf16 %v773
        %v1014 = vunpack.c.l.bf16 %v782
        %v1015 = vunpack.c.l.bf16 %v791
        %v1016 = vunpack.c.l.bf16 %v800
        %v1017 = vunpack.c.l.bf16 %v809
        %v1018 = vunpack.c.l.bf16 %v818
        %v1019 = vunpack.c.l.bf16 %v827
        %v1020 = vunpack.c.l.bf16 %v836
        %v1021 = vunpack.c.l.bf16 %v845
        %v1022 = vunpack.c.l.bf16 %v854
        %v1023 = vunpack.c.l.bf16 %v863
        %v1024 = vunpack.c.l.bf16 %v872
        %v1025 = vunpack.c.l.bf16 %v881
        %v1026 = vunpack.c.l.bf16 %v890
        %v1027 = vunpack.c.l.bf16 %v899
        %v1028 = vunpack.c.l.bf16 %v908
        %v1029 = vunpack.c.l.bf16 %v917
        %v1030 = vunpack.c.l.bf16 %v926
        %v1031 = vunpack.c.l.bf16 %v935
        %v1032 = vunpack.c.l.bf16 %v944
        %v1033 = vunpack.c.l.bf16 %v953
        %v1034 = vunpack.c.l.bf16 %v962
        %v1035 = vunpack.c.l.bf16 %v971
        %v1036 = vadd.f32 %v972, %v1004
        %v1037 = vadd.f32 %v973, %v1005
        %v1038 = vadd.f32 %v974, %v1006
        %v1039 = vadd.f32 %v975, %v1007
        %v1040 = vadd.f32 %v976, %v1008
        %v1041 = vadd.f32 %v977, %v1009
        %v1042 = vadd.f32 %v978, %v1010
        %v1043 = vadd.f32 %v979, %v1011
        %v1044 = vadd.f32 %v980, %v1012
        %v1045 = vadd.f32 %v981, %v1013
        %v1046 = vadd.f32 %v982, %v1014
        %v1047 = vadd.f32 %v983, %v1015
        %v1048 = vadd.f32 %v984, %v1016
        %v1049 = vadd.f32 %v985, %v1017
        %v1050 = vadd.f32 %v986, %v1018
        %v1051 = vadd.f32 %v987, %v1019
        %v1052 = vadd.f32 %v988, %v1020
        %v1053 = vadd.f32 %v989, %v1021
        %v1054 = vadd.f32 %v990, %v1022
        %v1055 = vadd.f32 %v991, %v1023
        %v1056 = vadd.f32 %v992, %v1024
        %v1057 = vadd.f32 %v993, %v1025
        %v1058 = vadd.f32 %v994, %v1026
        %v1059 = vadd.f32 %v995, %v1027
        %v1060 = vadd.f32 %v996, %v1028
        %v1061 = vadd.f32 %v997, %v1029
        %v1062 = vadd.f32 %v998, %v1030
        %v1063 = vadd.f32 %v999, %v1031
        %v1064 = vadd.f32 %v1000, %v1032
        %v1065 = vadd.f32 %v1001, %v1033
        %v1066 = vadd.f32 %v1002, %v1034
        %v1067 = vadd.f32 %v1003, %v1035
        %v1068 = vpack.c.bf16 %v1036, %v1036
        %v1069 = vpack.c.bf16 %v1037, %v1037
        %v1070 = vpack.c.bf16 %v1038, %v1038
        %v1071 = vpack.c.bf16 %v1039, %v1039
        %v1072 = vpack.c.bf16 %v1040, %v1040
        %v1073 = vpack.c.bf16 %v1041, %v1041
        %v1074 = vpack.c.bf16 %v1042, %v1042
        %v1075 = vpack.c.bf16 %v1043, %v1043
        %v1076 = vpack.c.bf16 %v1044, %v1044
        %v1077 = vpack.c.bf16 %v1045, %v1045
        %v1078 = vpack.c.bf16 %v1046, %v1046
        %v1079 = vpack.c.bf16 %v1047, %v1047
        %v1080 = vpack.c.bf16 %v1048, %v1048
        %v1081 = vpack.c.bf16 %v1049, %v1049
        %v1082 = vpack.c.bf16 %v1050, %v1050
        %v1083 = vpack.c.bf16 %v1051, %v1051
        %v1084 = vpack.c.bf16 %v1052, %v1052
        %v1085 = vpack.c.bf16 %v1053, %v1053
        %v1086 = vpack.c.bf16 %v1054, %v1054
        %v1087 = vpack.c.bf16 %v1055, %v1055
        %v1088 = vpack.c.bf16 %v1056, %v1056
        %v1089 = vpack.c.bf16 %v1057, %v1057
        %v1090 = vpack.c.bf16 %v1058, %v1058
        %v1091 = vpack.c.bf16 %v1059, %v1059
        %v1092 = vpack.c.bf16 %v1060, %v1060
        %v1093 = vpack.c.bf16 %v1061, %v1061
        %v1094 = vpack.c.bf16 %v1062, %v1062
        %v1095 = vpack.c.bf16 %v1063, %v1063
        %v1096 = vpack.c.bf16 %v1064, %v1064
        %v1097 = vpack.c.bf16 %v1065, %v1065
        %v1098 = vpack.c.bf16 %v1066, %v1066
        %v1099 = vpack.c.bf16 %v1067, %v1067
        %v1100 = vunpack.c.l.bf16 %v1068
        %v1101 = vunpack.c.l.bf16 %v1069
        %v1102 = vunpack.c.l.bf16 %v1070
        %v1103 = vunpack.c.l.bf16 %v1071
        %v1104 = vunpack.c.l.bf16 %v1072
        %v1105 = vunpack.c.l.bf16 %v1073
        %v1106 = vunpack.c.l.bf16 %v1074
        %v1107 = vunpack.c.l.bf16 %v1075
        %v1108 = vunpack.c.l.bf16 %v1076
        %v1109 = vunpack.c.l.bf16 %v1077
        %v1110 = vunpack.c.l.bf16 %v1078
        %v1111 = vunpack.c.l.bf16 %v1079
        %v1112 = vunpack.c.l.bf16 %v1080
        %v1113 = vunpack.c.l.bf16 %v1081
        %v1114 = vunpack.c.l.bf16 %v1082
        %v1115 = vunpack.c.l.bf16 %v1083
        %v1116 = vunpack.c.l.bf16 %v1084
        %v1117 = vunpack.c.l.bf16 %v1085
        %v1118 = vunpack.c.l.bf16 %v1086
        %v1119 = vunpack.c.l.bf16 %v1087
        %v1120 = vunpack.c.l.bf16 %v1088
        %v1121 = vunpack.c.l.bf16 %v1089
        %v1122 = vunpack.c.l.bf16 %v1090
        %v1123 = vunpack.c.l.bf16 %v1091
        %v1124 = vunpack.c.l.bf16 %v1092
        %v1125 = vunpack.c.l.bf16 %v1093
        %v1126 = vunpack.c.l.bf16 %v1094
        %v1127 = vunpack.c.l.bf16 %v1095
        %v1128 = vunpack.c.l.bf16 %v1096
        %v1129 = vunpack.c.l.bf16 %v1097
        %v1130 = vunpack.c.l.bf16 %v1098
        %v1131 = vunpack.c.l.bf16 %v1099
        %v1132 = vmax.f32 %v1100, 0.0
        %v1133 = vmax.f32 %v1101, 0.0
        %v1134 = vmax.f32 %v1102, 0.0
        %v1135 = vmax.f32 %v1103, 0.0
        %v1136 = vmax.f32 %v1104, 0.0
        %v1137 = vmax.f32 %v1105, 0.0
        %v1138 = vmax.f32 %v1106, 0.0
        %v1139 = vmax.f32 %v1107, 0.0
        %v1140 = vmax.f32 %v1108, 0.0
        %v1141 = vmax.f32 %v1109, 0.0
        %v1142 = vmax.f32 %v1110, 0.0
        %v1143 = vmax.f32 %v1111, 0.0
        %v1144 = vmax.f32 %v1112, 0.0
        %v1145 = vmax.f32 %v1113, 0.0
        %v1146 = vmax.f32 %v1114, 0.0
        %v1147 = vmax.f32 %v1115, 0.0
        %v1148 = vmax.f32 %v1116, 0.0
        %v1149 = vmax.f32 %v1117, 0.0
        %v1150 = vmax.f32 %v1118, 0.0
        %v1151 = vmax.f32 %v1119, 0.0
        %v1152 = vmax.f32 %v1120, 0.0
        %v1153 = vmax.f32 %v1121, 0.0
        %v1154 = vmax.f32 %v1122, 0.0
        %v1155 = vmax.f32 %v1123, 0.0
        %v1156 = vmax.f32 %v1124, 0.0
        %v1157 = vmax.f32 %v1125, 0.0
        %v1158 = vmax.f32 %v1126, 0.0
        %v1159 = vmax.f32 %v1127, 0.0
        %v1160 = vmax.f32 %v1128, 0.0
        %v1161 = vmax.f32 %v1129, 0.0
        %v1162 = vmax.f32 %v1130, 0.0
        %v1163 = vmax.f32 %v1131, 0.0
        %v1164 = vpack.c.bf16 %v1133, %v1132
        %v1165 = vpack.c.bf16 %v1135, %v1134
        %v1166 = vpack.c.bf16 %v1137, %v1136
        %v1167 = vpack.c.bf16 %v1139, %v1138
        %v1168 = vpack.c.bf16 %v1141, %v1140
        %v1169 = vpack.c.bf16 %v1143, %v1142
        %v1170 = vpack.c.bf16 %v1145, %v1144
        %v1171 = vpack.c.bf16 %v1147, %v1146
        %v1172 = vpack.c.bf16 %v1149, %v1148
        %v1173 = vpack.c.bf16 %v1151, %v1150
        %v1174 = vpack.c.bf16 %v1153, %v1152
        %v1175 = vpack.c.bf16 %v1155, %v1154
        %v1176 = vpack.c.bf16 %v1157, %v1156
        %v1177 = vpack.c.bf16 %v1159, %v1158
        %v1178 = vpack.c.bf16 %v1161, %v1160
        %v1179 = vpack.c.bf16 %v1163, %v1162
        %v1180 = vld [vmem:[#allocation3] sm:$0xff]
        %v1181 = vld [vmem:[#allocation3 + $0x8] sm:$0xff]
        %v1182 = vld [vmem:[#allocation3 + $0x10] sm:$0xff]
        %v1183 = vld [vmem:[#allocation3 + $0x18] sm:$0xff]
        %v1184 = vld [vmem:[#allocation3 + $0x20] sm:$0xff]
        %v1185 = vld [vmem:[#allocation3 + $0x28] sm:$0xff]
        %v1186 = vld [vmem:[#allocation3 + $0x30] sm:$0xff]
        %v1187 = vld [vmem:[#allocation3 + $0x38] sm:$0xff]
        %v1188 = vld [vmem:[#allocation3 + $0x40] sm:$0xff]
        %v1189 = vld [vmem:[#allocation3 + $0x48] sm:$0xff]
        %v1190 = vld [vmem:[#allocation3 + $0x50] sm:$0xff]
        %v1191 = vld [vmem:[#allocation3 + $0x58] sm:$0xff]
        %v1192 = vld [vmem:[#allocation3 + $0x60] sm:$0xff]
        %v1193 = vld [vmem:[#allocation3 + $0x68] sm:$0xff]
        %v1194 = vld [vmem:[#allocation3 + $0x70] sm:$0xff]
        %v1195 = vld [vmem:[#allocation3 + $0x78] sm:$0xff]
        %v1196 = vld [vmem:[#allocation3 + $0x80] sm:$0xff]
        %v1197 = vld [vmem:[#allocation3 + $0x88] sm:$0xff]
        %v1198 = vld [vmem:[#allocation3 + $0x90] sm:$0xff]
        %v1199 = vld [vmem:[#allocation3 + $0x98] sm:$0xff]
        %v1200 = vld [vmem:[#allocation3 + $0xa0] sm:$0xff]
        %v1201 = vld [vmem:[#allocation3 + $0xa8] sm:$0xff]
        %v1202 = vld [vmem:[#allocation3 + $0xb0] sm:$0xff]
        %v1203 = vld [vmem:[#allocation3 + $0xb8] sm:$0xff]
        %v1204 = vld [vmem:[#allocation3 + $0xc0] sm:$0xff]
        %v1205 = vld [vmem:[#allocation3 + $0xc8] sm:$0xff]
        %v1206 = vld [vmem:[#allocation3 + $0xd0] sm:$0xff]
        %v1207 = vld [vmem:[#allocation3 + $0xd8] sm:$0xff]
        %v1208 = vld [vmem:[#allocation3 + $0xe0] sm:$0xff]
        %v1209 = vld [vmem:[#allocation3 + $0xe8] sm:$0xff]
        %v1210 = vld [vmem:[#allocation3 + $0xf0] sm:$0xff]
        %v1211 = vld [vmem:[#allocation3 + $0xf8] sm:$0xff]
        %v1212 = vld [vmem:[#allocation3 + $0x100] sm:$0xff]
        %v1213 = vld [vmem:[#allocation3 + $0x108] sm:$0xff]
        %v1214 = vld [vmem:[#allocation3 + $0x110] sm:$0xff]
        %v1215 = vld [vmem:[#allocation3 + $0x118] sm:$0xff]
        %v1216 = vld [vmem:[#allocation3 + $0x120] sm:$0xff]
        %v1217 = vld [vmem:[#allocation3 + $0x128] sm:$0xff]
        %v1218 = vld [vmem:[#allocation3 + $0x130] sm:$0xff]
        %v1219 = vld [vmem:[#allocation3 + $0x138] sm:$0xff]
        %v1220 = vld [vmem:[#allocation3 + $0x140] sm:$0xff]
        %v1221 = vld [vmem:[#allocation3 + $0x148] sm:$0xff]
        %v1222 = vld [vmem:[#allocation3 + $0x150] sm:$0xff]
        %v1223 = vld [vmem:[#allocation3 + $0x158] sm:$0xff]
        %v1224 = vld [vmem:[#allocation3 + $0x160] sm:$0xff]
        %v1225 = vld [vmem:[#allocation3 + $0x168] sm:$0xff]
        %v1226 = vld [vmem:[#allocation3 + $0x170] sm:$0xff]
        %v1227 = vld [vmem:[#allocation3 + $0x178] sm:$0xff]
        %v1228 = vld [vmem:[#allocation3 + $0x180] sm:$0xff]
        %v1229 = vld [vmem:[#allocation3 + $0x188] sm:$0xff]
        %v1230 = vld [vmem:[#allocation3 + $0x190] sm:$0xff]
        %v1231 = vld [vmem:[#allocation3 + $0x198] sm:$0xff]
        %v1232 = vld [vmem:[#allocation3 + $0x1a0] sm:$0xff]
        %v1233 = vld [vmem:[#allocation3 + $0x1a8] sm:$0xff]
        %v1234 = vld [vmem:[#allocation3 + $0x1b0] sm:$0xff]
        %v1235 = vld [vmem:[#allocation3 + $0x1b8] sm:$0xff]
        %v1236 = vld [vmem:[#allocation3 + $0x1c0] sm:$0xff]
        %v1237 = vld [vmem:[#allocation3 + $0x1c8] sm:$0xff]
        %v1238 = vld [vmem:[#allocation3 + $0x1d0] sm:$0xff]
        %v1239 = vld [vmem:[#allocation3 + $0x1d8] sm:$0xff]
        %v1240 = vld [vmem:[#allocation3 + $0x1e0] sm:$0xff]
        %v1241 = vld [vmem:[#allocation3 + $0x1e8] sm:$0xff]
        %v1242 = vld [vmem:[#allocation3 + $0x1f0] sm:$0xff]
        %v1243 = vld [vmem:[#allocation3 + $0x1f8] sm:$0xff]
        %v1244 = vld [vmem:[#allocation3 + $0x200] sm:$0xff]
        %v1245 = vld [vmem:[#allocation3 + $0x208] sm:$0xff]
        %v1246 = vld [vmem:[#allocation3 + $0x210] sm:$0xff]
        %v1247 = vld [vmem:[#allocation3 + $0x218] sm:$0xff]
        %v1248 = vld [vmem:[#allocation3 + $0x220] sm:$0xff]
        %v1249 = vld [vmem:[#allocation3 + $0x228] sm:$0xff]
        %v1250 = vld [vmem:[#allocation3 + $0x230] sm:$0xff]
        %v1251 = vld [vmem:[#allocation3 + $0x238] sm:$0xff]
        %v1252 = vld [vmem:[#allocation3 + $0x240] sm:$0xff]
        %v1253 = vld [vmem:[#allocation3 + $0x248] sm:$0xff]
        %v1254 = vld [vmem:[#allocation3 + $0x250] sm:$0xff]
        %v1255 = vld [vmem:[#allocation3 + $0x258] sm:$0xff]
        %v1256 = vld [vmem:[#allocation3 + $0x260] sm:$0xff]
        %v1257 = vld [vmem:[#allocation3 + $0x268] sm:$0xff]
        %v1258 = vld [vmem:[#allocation3 + $0x270] sm:$0xff]
        %v1259 = vld [vmem:[#allocation3 + $0x278] sm:$0xff]
        %v1260 = vld [vmem:[#allocation3 + $0x280] sm:$0xff]
        %v1261 = vld [vmem:[#allocation3 + $0x288] sm:$0xff]
        %v1262 = vld [vmem:[#allocation3 + $0x290] sm:$0xff]
        %v1263 = vld [vmem:[#allocation3 + $0x298] sm:$0xff]
        %v1264 = vld [vmem:[#allocation3 + $0x2a0] sm:$0xff]
        %v1265 = vld [vmem:[#allocation3 + $0x2a8] sm:$0xff]
        %v1266 = vld [vmem:[#allocation3 + $0x2b0] sm:$0xff]
        %v1267 = vld [vmem:[#allocation3 + $0x2b8] sm:$0xff]
        %v1268 = vld [vmem:[#allocation3 + $0x2c0] sm:$0xff]
        %v1269 = vld [vmem:[#allocation3 + $0x2c8] sm:$0xff]
        %v1270 = vld [vmem:[#allocation3 + $0x2d0] sm:$0xff]
        %v1271 = vld [vmem:[#allocation3 + $0x2d8] sm:$0xff]
        %v1272 = vld [vmem:[#allocation3 + $0x2e0] sm:$0xff]
        %v1273 = vld [vmem:[#allocation3 + $0x2e8] sm:$0xff]
        %v1274 = vld [vmem:[#allocation3 + $0x2f0] sm:$0xff]
        %v1275 = vld [vmem:[#allocation3 + $0x2f8] sm:$0xff]
        %v1276 = vld [vmem:[#allocation3 + $0x300] sm:$0xff]
        %v1277 = vld [vmem:[#allocation3 + $0x308] sm:$0xff]
        %v1278 = vld [vmem:[#allocation3 + $0x310] sm:$0xff]
        %v1279 = vld [vmem:[#allocation3 + $0x318] sm:$0xff]
        %v1280 = vld [vmem:[#allocation3 + $0x320] sm:$0xff]
        %v1281 = vld [vmem:[#allocation3 + $0x328] sm:$0xff]
        %v1282 = vld [vmem:[#allocation3 + $0x330] sm:$0xff]
        %v1283 = vld [vmem:[#allocation3 + $0x338] sm:$0xff]
        %v1284 = vld [vmem:[#allocation3 + $0x340] sm:$0xff]
        %v1285 = vld [vmem:[#allocation3 + $0x348] sm:$0xff]
        %v1286 = vld [vmem:[#allocation3 + $0x350] sm:$0xff]
        %v1287 = vld [vmem:[#allocation3 + $0x358] sm:$0xff]
        %v1288 = vld [vmem:[#allocation3 + $0x360] sm:$0xff]
        %v1289 = vld [vmem:[#allocation3 + $0x368] sm:$0xff]
        %v1290 = vld [vmem:[#allocation3 + $0x370] sm:$0xff]
        %v1291 = vld [vmem:[#allocation3 + $0x378] sm:$0xff]
        %v1292 = vld [vmem:[#allocation3 + $0x380] sm:$0xff]
        %v1293 = vld [vmem:[#allocation3 + $0x388] sm:$0xff]
        %v1294 = vld [vmem:[#allocation3 + $0x390] sm:$0xff]
        %v1295 = vld [vmem:[#allocation3 + $0x398] sm:$0xff]
        %v1296 = vld [vmem:[#allocation3 + $0x3a0] sm:$0xff]
        %v1297 = vld [vmem:[#allocation3 + $0x3a8] sm:$0xff]
        %v1298 = vld [vmem:[#allocation3 + $0x3b0] sm:$0xff]
        %v1299 = vld [vmem:[#allocation3 + $0x3b8] sm:$0xff]
        %v1300 = vld [vmem:[#allocation3 + $0x3c0] sm:$0xff]
        %v1301 = vld [vmem:[#allocation3 + $0x3c8] sm:$0xff]
        %v1302 = vld [vmem:[#allocation3 + $0x3d0] sm:$0xff]
        %v1303 = vld [vmem:[#allocation3 + $0x3d8] sm:$0xff]
        %v1304 = vld [vmem:[#allocation3 + $0x3e0] sm:$0xff]
        %v1305 = vld [vmem:[#allocation3 + $0x3e8] sm:$0xff]
        %v1306 = vld [vmem:[#allocation3 + $0x3f0] sm:$0xff]
        %v1307 = vld [vmem:[#allocation3 + $0x3f8] sm:$0xff]
        %v1436 = vunpack.c.l.b16 %v1180
        %v1437 = vunpack.c.h.b16 %v1180
        %v1438 = vunpack.c.l.b16 %v1181
        %v1439 = vunpack.c.h.b16 %v1181
        %v1440 = vunpack.c.l.b16 %v1182
        %v1441 = vunpack.c.h.b16 %v1182
        %v1442 = vunpack.c.l.b16 %v1183
        %v1443 = vunpack.c.h.b16 %v1183
        %v1444 = vunpack.c.l.b16 %v1184
        %v1445 = vunpack.c.h.b16 %v1184
        %v1446 = vunpack.c.l.b16 %v1185
        %v1447 = vunpack.c.h.b16 %v1185
        %v1448 = vunpack.c.l.b16 %v1186
        %v1449 = vunpack.c.h.b16 %v1186
        %v1450 = vunpack.c.l.b16 %v1187
        %v1451 = vunpack.c.h.b16 %v1187
        %v1452 = vunpack.c.l.b16 %v1188
        %v1453 = vunpack.c.h.b16 %v1188
        %v1454 = vunpack.c.l.b16 %v1189
        %v1455 = vunpack.c.h.b16 %v1189
        %v1456 = vunpack.c.l.b16 %v1190
        %v1457 = vunpack.c.h.b16 %v1190
        %v1458 = vunpack.c.l.b16 %v1191
        %v1459 = vunpack.c.h.b16 %v1191
        %v1460 = vunpack.c.l.b16 %v1192
        %v1461 = vunpack.c.h.b16 %v1192
        %v1462 = vunpack.c.l.b16 %v1193
        %v1463 = vunpack.c.h.b16 %v1193
        %v1464 = vunpack.c.l.b16 %v1194
        %v1465 = vunpack.c.h.b16 %v1194
        %v1466 = vunpack.c.l.b16 %v1195
        %v1467 = vunpack.c.h.b16 %v1195
        %v1468 = vunpack.c.l.b16 %v1196
        %v1469 = vunpack.c.h.b16 %v1196
        %v1470 = vunpack.c.l.b16 %v1197
        %v1471 = vunpack.c.h.b16 %v1197
        %v1472 = vunpack.c.l.b16 %v1198
        %v1473 = vunpack.c.h.b16 %v1198
        %v1474 = vunpack.c.l.b16 %v1199
        %v1475 = vunpack.c.h.b16 %v1199
        %v1476 = vunpack.c.l.b16 %v1200
        %v1477 = vunpack.c.h.b16 %v1200
        %v1478 = vunpack.c.l.b16 %v1201
        %v1479 = vunpack.c.h.b16 %v1201
        %v1480 = vunpack.c.l.b16 %v1202
        %v1481 = vunpack.c.h.b16 %v1202
        %v1482 = vunpack.c.l.b16 %v1203
        %v1483 = vunpack.c.h.b16 %v1203
        %v1484 = vunpack.c.l.b16 %v1204
        %v1485 = vunpack.c.h.b16 %v1204
        %v1486 = vunpack.c.l.b16 %v1205
        %v1487 = vunpack.c.h.b16 %v1205
        %v1488 = vunpack.c.l.b16 %v1206
        %v1489 = vunpack.c.h.b16 %v1206
        %v1490 = vunpack.c.l.b16 %v1207
        %v1491 = vunpack.c.h.b16 %v1207
        %v1492 = vunpack.c.l.b16 %v1208
        %v1493 = vunpack.c.h.b16 %v1208
        %v1494 = vunpack.c.l.b16 %v1209
        %v1495 = vunpack.c.h.b16 %v1209
        %v1496 = vunpack.c.l.b16 %v1210
        %v1497 = vunpack.c.h.b16 %v1210
        %v1498 = vunpack.c.l.b16 %v1211
        %v1499 = vunpack.c.h.b16 %v1211
        %v1500 = vunpack.c.l.b16 %v1212
        %v1501 = vunpack.c.h.b16 %v1212
        %v1502 = vunpack.c.l.b16 %v1213
        %v1503 = vunpack.c.h.b16 %v1213
        %v1504 = vunpack.c.l.b16 %v1214
        %v1505 = vunpack.c.h.b16 %v1214
        %v1506 = vunpack.c.l.b16 %v1215
        %v1507 = vunpack.c.h.b16 %v1215
        %v1508 = vunpack.c.l.b16 %v1216
        %v1509 = vunpack.c.h.b16 %v1216
        %v1510 = vunpack.c.l.b16 %v1217
        %v1511 = vunpack.c.h.b16 %v1217
        %v1512 = vunpack.c.l.b16 %v1218
        %v1513 = vunpack.c.h.b16 %v1218
        %v1514 = vunpack.c.l.b16 %v1219
        %v1515 = vunpack.c.h.b16 %v1219
        %v1516 = vunpack.c.l.b16 %v1220
        %v1517 = vunpack.c.h.b16 %v1220
        %v1518 = vunpack.c.l.b16 %v1221
        %v1519 = vunpack.c.h.b16 %v1221
        %v1520 = vunpack.c.l.b16 %v1222
        %v1521 = vunpack.c.h.b16 %v1222
        %v1522 = vunpack.c.l.b16 %v1223
        %v1523 = vunpack.c.h.b16 %v1223
        %v1524 = vunpack.c.l.b16 %v1224
        %v1525 = vunpack.c.h.b16 %v1224
        %v1526 = vunpack.c.l.b16 %v1225
        %v1527 = vunpack.c.h.b16 %v1225
        %v1528 = vunpack.c.l.b16 %v1226
        %v1529 = vunpack.c.h.b16 %v1226
        %v1530 = vunpack.c.l.b16 %v1227
        %v1531 = vunpack.c.h.b16 %v1227
        %v1532 = vunpack.c.l.b16 %v1228
        %v1533 = vunpack.c.h.b16 %v1228
        %v1534 = vunpack.c.l.b16 %v1229
        %v1535 = vunpack.c.h.b16 %v1229
        %v1536 = vunpack.c.l.b16 %v1230
        %v1537 = vunpack.c.h.b16 %v1230
        %v1538 = vunpack.c.l.b16 %v1231
        %v1539 = vunpack.c.h.b16 %v1231
        %v1540 = vunpack.c.l.b16 %v1232
        %v1541 = vunpack.c.h.b16 %v1232
        %v1542 = vunpack.c.l.b16 %v1233
        %v1543 = vunpack.c.h.b16 %v1233
        %v1544 = vunpack.c.l.b16 %v1234
        %v1545 = vunpack.c.h.b16 %v1234
        %v1546 = vunpack.c.l.b16 %v1235
        %v1547 = vunpack.c.h.b16 %v1235
        %v1548 = vunpack.c.l.b16 %v1236
        %v1549 = vunpack.c.h.b16 %v1236
        %v1550 = vunpack.c.l.b16 %v1237
        %v1551 = vunpack.c.h.b16 %v1237
        %v1552 = vunpack.c.l.b16 %v1238
        %v1553 = vunpack.c.h.b16 %v1238
        %v1554 = vunpack.c.l.b16 %v1239
        %v1555 = vunpack.c.h.b16 %v1239
        %v1556 = vunpack.c.l.b16 %v1240
        %v1557 = vunpack.c.h.b16 %v1240
        %v1558 = vunpack.c.l.b16 %v1241
        %v1559 = vunpack.c.h.b16 %v1241
        %v1560 = vunpack.c.l.b16 %v1242
        %v1561 = vunpack.c.h.b16 %v1242
        %v1562 = vunpack.c.l.b16 %v1243
        %v1563 = vunpack.c.h.b16 %v1243
        %v1564 = vunpack.c.l.b16 %v1244
        %v1565 = vunpack.c.h.b16 %v1244
        %v1566 = vunpack.c.l.b16 %v1245
        %v1567 = vunpack.c.h.b16 %v1245
        %v1568 = vunpack.c.l.b16 %v1246
        %v1569 = vunpack.c.h.b16 %v1246
        %v1570 = vunpack.c.l.b16 %v1247
        %v1571 = vunpack.c.h.b16 %v1247
        %v1572 = vunpack.c.l.b16 %v1248
        %v1573 = vunpack.c.h.b16 %v1248
        %v1574 = vunpack.c.l.b16 %v1249
        %v1575 = vunpack.c.h.b16 %v1249
        %v1576 = vunpack.c.l.b16 %v1250
        %v1577 = vunpack.c.h.b16 %v1250
        %v1578 = vunpack.c.l.b16 %v1251
        %v1579 = vunpack.c.h.b16 %v1251
        %v1580 = vunpack.c.l.b16 %v1252
        %v1581 = vunpack.c.h.b16 %v1252
        %v1582 = vunpack.c.l.b16 %v1253
        %v1583 = vunpack.c.h.b16 %v1253
        %v1584 = vunpack.c.l.b16 %v1254
        %v1585 = vunpack.c.h.b16 %v1254
        %v1586 = vunpack.c.l.b16 %v1255
        %v1587 = vunpack.c.h.b16 %v1255
        %v1588 = vunpack.c.l.b16 %v1256
        %v1589 = vunpack.c.h.b16 %v1256
        %v1590 = vunpack.c.l.b16 %v1257
        %v1591 = vunpack.c.h.b16 %v1257
        %v1592 = vunpack.c.l.b16 %v1258
        %v1593 = vunpack.c.h.b16 %v1258
        %v1594 = vunpack.c.l.b16 %v1259
        %v1595 = vunpack.c.h.b16 %v1259
        %v1596 = vunpack.c.l.b16 %v1260
        %v1597 = vunpack.c.h.b16 %v1260
        %v1598 = vunpack.c.l.b16 %v1261
        %v1599 = vunpack.c.h.b16 %v1261
        %v1600 = vunpack.c.l.b16 %v1262
        %v1601 = vunpack.c.h.b16 %v1262
        %v1602 = vunpack.c.l.b16 %v1263
        %v1603 = vunpack.c.h.b16 %v1263
        %v1604 = vunpack.c.l.b16 %v1264
        %v1605 = vunpack.c.h.b16 %v1264
        %v1606 = vunpack.c.l.b16 %v1265
        %v1607 = vunpack.c.h.b16 %v1265
        %v1608 = vunpack.c.l.b16 %v1266
        %v1609 = vunpack.c.h.b16 %v1266
        %v1610 = vunpack.c.l.b16 %v1267
        %v1611 = vunpack.c.h.b16 %v1267
        %v1612 = vunpack.c.l.b16 %v1268
        %v1613 = vunpack.c.h.b16 %v1268
        %v1614 = vunpack.c.l.b16 %v1269
        %v1615 = vunpack.c.h.b16 %v1269
        %v1616 = vunpack.c.l.b16 %v1270
        %v1617 = vunpack.c.h.b16 %v1270
        %v1618 = vunpack.c.l.b16 %v1271
        %v1619 = vunpack.c.h.b16 %v1271
        %v1620 = vunpack.c.l.b16 %v1272
        %v1621 = vunpack.c.h.b16 %v1272
        %v1622 = vunpack.c.l.b16 %v1273
        %v1623 = vunpack.c.h.b16 %v1273
        %v1624 = vunpack.c.l.b16 %v1274
        %v1625 = vunpack.c.h.b16 %v1274
        %v1626 = vunpack.c.l.b16 %v1275
        %v1627 = vunpack.c.h.b16 %v1275
        %v1628 = vunpack.c.l.b16 %v1276
        %v1629 = vunpack.c.h.b16 %v1276
        %v1630 = vunpack.c.l.b16 %v1277
        %v1631 = vunpack.c.h.b16 %v1277
        %v1632 = vunpack.c.l.b16 %v1278
        %v1633 = vunpack.c.h.b16 %v1278
        %v1634 = vunpack.c.l.b16 %v1279
        %v1635 = vunpack.c.h.b16 %v1279
        %v1636 = vunpack.c.l.b16 %v1280
        %v1637 = vunpack.c.h.b16 %v1280
        %v1638 = vunpack.c.l.b16 %v1281
        %v1639 = vunpack.c.h.b16 %v1281
        %v1640 = vunpack.c.l.b16 %v1282
        %v1641 = vunpack.c.h.b16 %v1282
        %v1642 = vunpack.c.l.b16 %v1283
        %v1643 = vunpack.c.h.b16 %v1283
        %v1644 = vunpack.c.l.b16 %v1284
        %v1645 = vunpack.c.h.b16 %v1284
        %v1646 = vunpack.c.l.b16 %v1285
        %v1647 = vunpack.c.h.b16 %v1285
        %v1648 = vunpack.c.l.b16 %v1286
        %v1649 = vunpack.c.h.b16 %v1286
        %v1650 = vunpack.c.l.b16 %v1287
        %v1651 = vunpack.c.h.b16 %v1287
        %v1652 = vunpack.c.l.b16 %v1288
        %v1653 = vunpack.c.h.b16 %v1288
        %v1654 = vunpack.c.l.b16 %v1289
        %v1655 = vunpack.c.h.b16 %v1289
        %v1656 = vunpack.c.l.b16 %v1290
        %v1657 = vunpack.c.h.b16 %v1290
        %v1658 = vunpack.c.l.b16 %v1291
        %v1659 = vunpack.c.h.b16 %v1291
        %v1660 = vunpack.c.l.b16 %v1292
        %v1661 = vunpack.c.h.b16 %v1292
        %v1662 = vunpack.c.l.b16 %v1293
        %v1663 = vunpack.c.h.b16 %v1293
        %v1664 = vunpack.c.l.b16 %v1294
        %v1665 = vunpack.c.h.b16 %v1294
        %v1666 = vunpack.c.l.b16 %v1295
        %v1667 = vunpack.c.h.b16 %v1295
        %v1668 = vunpack.c.l.b16 %v1296
        %v1669 = vunpack.c.h.b16 %v1296
        %v1670 = vunpack.c.l.b16 %v1297
        %v1671 = vunpack.c.h.b16 %v1297
        %v1672 = vunpack.c.l.b16 %v1298
        %v1673 = vunpack.c.h.b16 %v1298
        %v1674 = vunpack.c.l.b16 %v1299
        %v1675 = vunpack.c.h.b16 %v1299
        %v1676 = vunpack.c.l.b16 %v1300
        %v1677 = vunpack.c.h.b16 %v1300
        %v1678 = vunpack.c.l.b16 %v1301
        %v1679 = vunpack.c.h.b16 %v1301
        %v1680 = vunpack.c.l.b16 %v1302
        %v1681 = vunpack.c.h.b16 %v1302
        %v1682 = vunpack.c.l.b16 %v1303
        %v1683 = vunpack.c.h.b16 %v1303
        %v1684 = vunpack.c.l.b16 %v1304
        %v1685 = vunpack.c.h.b16 %v1304
        %v1686 = vunpack.c.l.b16 %v1305
        %v1687 = vunpack.c.h.b16 %v1305
        %v1688 = vunpack.c.l.b16 %v1306
        %v1689 = vunpack.c.h.b16 %v1306
        %v1690 = vunpack.c.l.b16 %v1307
        %v1691 = vunpack.c.h.b16 %v1307
        %v1692 = vpack.c.b16 %v1438, %v1436
        %v1693 = vpack.c.b16 %v1439, %v1437
        %v1694 = vpack.c.b16 %v1442, %v1440
        %v1695 = vpack.c.b16 %v1443, %v1441
        %v1696 = vpack.c.b16 %v1446, %v1444
        %v1697 = vpack.c.b16 %v1447, %v1445
        %v1698 = vpack.c.b16 %v1450, %v1448
        %v1699 = vpack.c.b16 %v1451, %v1449
        %v1700 = vpack.c.b16 %v1454, %v1452
        %v1701 = vpack.c.b16 %v1455, %v1453
        %v1702 = vpack.c.b16 %v1458, %v1456
        %v1703 = vpack.c.b16 %v1459, %v1457
        %v1704 = vpack.c.b16 %v1462, %v1460
        %v1705 = vpack.c.b16 %v1463, %v1461
        %v1706 = vpack.c.b16 %v1466, %v1464
        %v1707 = vpack.c.b16 %v1467, %v1465
        %v1708 = vpack.c.b16 %v1470, %v1468
        %v1709 = vpack.c.b16 %v1471, %v1469
        %v1710 = vpack.c.b16 %v1474, %v1472
        %v1711 = vpack.c.b16 %v1475, %v1473
        %v1712 = vpack.c.b16 %v1478, %v1476
        %v1713 = vpack.c.b16 %v1479, %v1477
        %v1714 = vpack.c.b16 %v1482, %v1480
        %v1715 = vpack.c.b16 %v1483, %v1481
        %v1716 = vpack.c.b16 %v1486, %v1484
        %v1717 = vpack.c.b16 %v1487, %v1485
        %v1718 = vpack.c.b16 %v1490, %v1488
        %v1719 = vpack.c.b16 %v1491, %v1489
        %v1720 = vpack.c.b16 %v1494, %v1492
        %v1721 = vpack.c.b16 %v1495, %v1493
        %v1722 = vpack.c.b16 %v1498, %v1496
        %v1723 = vpack.c.b16 %v1499, %v1497
        %v1724 = vpack.c.b16 %v1502, %v1500
        %v1725 = vpack.c.b16 %v1503, %v1501
        %v1726 = vpack.c.b16 %v1506, %v1504
        %v1727 = vpack.c.b16 %v1507, %v1505
        %v1728 = vpack.c.b16 %v1510, %v1508
        %v1729 = vpack.c.b16 %v1511, %v1509
        %v1730 = vpack.c.b16 %v1514, %v1512
        %v1731 = vpack.c.b16 %v1515, %v1513
        %v1732 = vpack.c.b16 %v1518, %v1516
        %v1733 = vpack.c.b16 %v1519, %v1517
        %v1734 = vpack.c.b16 %v1522, %v1520
        %v1735 = vpack.c.b16 %v1523, %v1521
        %v1736 = vpack.c.b16 %v1526, %v1524
        %v1737 = vpack.c.b16 %v1527, %v1525
        %v1738 = vpack.c.b16 %v1530, %v1528
        %v1739 = vpack.c.b16 %v1531, %v1529
        %v1740 = vpack.c.b16 %v1534, %v1532
        %v1741 = vpack.c.b16 %v1535, %v1533
        %v1742 = vpack.c.b16 %v1538, %v1536
        %v1743 = vpack.c.b16 %v1539, %v1537
        %v1744 = vpack.c.b16 %v1542, %v1540
        %v1745 = vpack.c.b16 %v1543, %v1541
        %v1746 = vpack.c.b16 %v1546, %v1544
        %v1747 = vpack.c.b16 %v1547, %v1545
        %v1748 = vpack.c.b16 %v1550, %v1548
        %v1749 = vpack.c.b16 %v1551, %v1549
        %v1750 = vpack.c.b16 %v1554, %v1552
        %v1751 = vpack.c.b16 %v1555, %v1553
        %v1752 = vpack.c.b16 %v1558, %v1556
        %v1753 = vpack.c.b16 %v1559, %v1557
        %v1754 = vpack.c.b16 %v1562, %v1560
        %v1755 = vpack.c.b16 %v1563, %v1561
        %v1756 = vpack.c.b16 %v1566, %v1564
        %v1757 = vpack.c.b16 %v1567, %v1565
        %v1758 = vpack.c.b16 %v1570, %v1568
        %v1759 = vpack.c.b16 %v1571, %v1569
        %v1760 = vpack.c.b16 %v1574, %v1572
        %v1761 = vpack.c.b16 %v1575, %v1573
        %v1762 = vpack.c.b16 %v1578, %v1576
        %v1763 = vpack.c.b16 %v1579, %v1577
        %v1764 = vpack.c.b16 %v1582, %v1580
        %v1765 = vpack.c.b16 %v1583, %v1581
        %v1766 = vpack.c.b16 %v1586, %v1584
        %v1767 = vpack.c.b16 %v1587, %v1585
        %v1768 = vpack.c.b16 %v1590, %v1588
        %v1769 = vpack.c.b16 %v1591, %v1589
        %v1770 = vpack.c.b16 %v1594, %v1592
        %v1771 = vpack.c.b16 %v1595, %v1593
        %v1772 = vpack.c.b16 %v1598, %v1596
        %v1773 = vpack.c.b16 %v1599, %v1597
        %v1774 = vpack.c.b16 %v1602, %v1600
        %v1775 = vpack.c.b16 %v1603, %v1601
        %v1776 = vpack.c.b16 %v1606, %v1604
        %v1777 = vpack.c.b16 %v1607, %v1605
        %v1778 = vpack.c.b16 %v1610, %v1608
        %v1779 = vpack.c.b16 %v1611, %v1609
        %v1780 = vpack.c.b16 %v1614, %v1612
        %v1781 = vpack.c.b16 %v1615, %v1613
        %v1782 = vpack.c.b16 %v1618, %v1616
        %v1783 = vpack.c.b16 %v1619, %v1617
        %v1784 = vpack.c.b16 %v1622, %v1620
        %v1785 = vpack.c.b16 %v1623, %v1621
        %v1786 = vpack.c.b16 %v1626, %v1624
        %v1787 = vpack.c.b16 %v1627, %v1625
        %v1788 = vpack.c.b16 %v1630, %v1628
        %v1789 = vpack.c.b16 %v1631, %v1629
        %v1790 = vpack.c.b16 %v1634, %v1632
        %v1791 = vpack.c.b16 %v1635, %v1633
        %v1792 = vpack.c.b16 %v1638, %v1636
        %v1793 = vpack.c.b16 %v1639, %v1637
        %v1794 = vpack.c.b16 %v1642, %v1640
        %v1795 = vpack.c.b16 %v1643, %v1641
        %v1796 = vpack.c.b16 %v1646, %v1644
        %v1797 = vpack.c.b16 %v1647, %v1645
        %v1798 = vpack.c.b16 %v1650, %v1648
        %v1799 = vpack.c.b16 %v1651, %v1649
        %v1800 = vpack.c.b16 %v1654, %v1652
        %v1801 = vpack.c.b16 %v1655, %v1653
        %v1802 = vpack.c.b16 %v1658, %v1656
        %v1803 = vpack.c.b16 %v1659, %v1657
        %v1804 = vpack.c.b16 %v1662, %v1660
        %v1805 = vpack.c.b16 %v1663, %v1661
        %v1806 = vpack.c.b16 %v1666, %v1664
        %v1807 = vpack.c.b16 %v1667, %v1665
        %v1808 = vpack.c.b16 %v1670, %v1668
        %v1809 = vpack.c.b16 %v1671, %v1669
        %v1810 = vpack.c.b16 %v1674, %v1672
        %v1811 = vpack.c.b16 %v1675, %v1673
        %v1812 = vpack.c.b16 %v1678, %v1676
        %v1813 = vpack.c.b16 %v1679, %v1677
        %v1814 = vpack.c.b16 %v1682, %v1680
        %v1815 = vpack.c.b16 %v1683, %v1681
        %v1816 = vpack.c.b16 %v1686, %v1684
        %v1817 = vpack.c.b16 %v1687, %v1685
        %v1818 = vpack.c.b16 %v1690, %v1688
        %v1819 = vpack.c.b16 %v1691, %v1689
        %1948 = vmatpush.bf16.msra.mxu0 %v1171
        %1949 = vmatpush.bf16.msra.mxu0 %v1170
        %1950 = vmatpush.bf16.msra.mxu0 %v1169
        %1951 = vmatpush.bf16.msra.mxu0 %v1168
        %1952 = vmatpush.bf16.msra.mxu0 %v1167
        %1953 = vmatpush.bf16.msra.mxu0 %v1166
        %1954 = vmatpush.bf16.msra.mxu0 %v1165
        %1955 = vmatpush.bf16.msra.mxu0 %v1164
        %1956 = vmatmul.bf16.gmra.mxu0 %v1692
        %v1957 = vpop.f32.mrf.mxu0
        %v1958 = vadd.f32 0.0, %v1957
        %v1959 = vpop.f32.mrf.mxu0
        %v1960 = vadd.f32 0.0, %v1959
        %1961 = vmatmul.bf16.gmra.mxu0 %v1694
        %v1962 = vpop.f32.mrf.mxu0
        %v1963 = vadd.f32 0.0, %v1962
        %v1964 = vpop.f32.mrf.mxu0
        %v1965 = vadd.f32 0.0, %v1964
        %1966 = vmatmul.bf16.gmra.mxu0 %v1696
        %v1967 = vpop.f32.mrf.mxu0
        %v1968 = vadd.f32 0.0, %v1967
        %v1969 = vpop.f32.mrf.mxu0
        %v1970 = vadd.f32 0.0, %v1969
        %1971 = vmatmul.bf16.gmra.mxu0 %v1698
        %v1972 = vpop.f32.mrf.mxu0
        %v1973 = vadd.f32 0.0, %v1972
        %v1974 = vpop.f32.mrf.mxu0
        %v1975 = vadd.f32 0.0, %v1974
        %1976 = vmatmul.bf16.gmra.mxu0 %v1700
        %v1977 = vpop.f32.mrf.mxu0
        %v1978 = vadd.f32 0.0, %v1977
        %v1979 = vpop.f32.mrf.mxu0
        %v1980 = vadd.f32 0.0, %v1979
        %1981 = vmatmul.bf16.gmra.mxu0 %v1702
        %v1982 = vpop.f32.mrf.mxu0
        %v1983 = vadd.f32 0.0, %v1982
        %v1984 = vpop.f32.mrf.mxu0
        %v1985 = vadd.f32 0.0, %v1984
        %1986 = vmatmul.bf16.gmra.mxu0 %v1704
        %v1987 = vpop.f32.mrf.mxu0
        %v1988 = vadd.f32 0.0, %v1987
        %v1989 = vpop.f32.mrf.mxu0
        %v1990 = vadd.f32 0.0, %v1989
        %1991 = vmatmul.bf16.gmra.mxu0 %v1706
        %v1992 = vpop.f32.mrf.mxu0
        %v1993 = vadd.f32 0.0, %v1992
        %v1994 = vpop.f32.mrf.mxu0
        %v1995 = vadd.f32 0.0, %v1994
        %1996 = vmatmul.bf16.gmra.mxu0 %v1708
        %v1997 = vpop.f32.mrf.mxu0
        %v1998 = vadd.f32 0.0, %v1997
        %v1999 = vpop.f32.mrf.mxu0
        %v2000 = vadd.f32 0.0, %v1999
        %2001 = vmatmul.bf16.gmra.mxu0 %v1710
        %v2002 = vpop.f32.mrf.mxu0
        %v2003 = vadd.f32 0.0, %v2002
        %v2004 = vpop.f32.mrf.mxu0
        %v2005 = vadd.f32 0.0, %v2004
        %2006 = vmatmul.bf16.gmra.mxu0 %v1712
        %v2007 = vpop.f32.mrf.mxu0
        %v2008 = vadd.f32 0.0, %v2007
        %v2009 = vpop.f32.mrf.mxu0
        %v2010 = vadd.f32 0.0, %v2009
        %2011 = vmatmul.bf16.gmra.mxu0 %v1714
        %v2012 = vpop.f32.mrf.mxu0
        %v2013 = vadd.f32 0.0, %v2012
        %v2014 = vpop.f32.mrf.mxu0
        %v2015 = vadd.f32 0.0, %v2014
        %2016 = vmatmul.bf16.gmra.mxu0 %v1716
        %v2017 = vpop.f32.mrf.mxu0
        %v2018 = vadd.f32 0.0, %v2017
        %v2019 = vpop.f32.mrf.mxu0
        %v2020 = vadd.f32 0.0, %v2019
        %2021 = vmatmul.bf16.gmra.mxu0 %v1718
        %v2022 = vpop.f32.mrf.mxu0
        %v2023 = vadd.f32 0.0, %v2022
        %v2024 = vpop.f32.mrf.mxu0
        %v2025 = vadd.f32 0.0, %v2024
        %2026 = vmatmul.bf16.gmra.mxu0 %v1720
        %v2027 = vpop.f32.mrf.mxu0
        %v2028 = vadd.f32 0.0, %v2027
        %v2029 = vpop.f32.mrf.mxu0
        %v2030 = vadd.f32 0.0, %v2029
        %2031 = vmatmul.bf16.gmra.mxu0 %v1722
        %v2032 = vpop.f32.mrf.mxu0
        %v2033 = vadd.f32 0.0, %v2032
        %v2034 = vpop.f32.mrf.mxu0
        %v2035 = vadd.f32 0.0, %v2034
        %2036 = vmatmul.bf16.gmra.mxu0 %v1724
        %v2037 = vpop.f32.mrf.mxu0
        %v2038 = vadd.f32 0.0, %v2037
        %v2039 = vpop.f32.mrf.mxu0
        %v2040 = vadd.f32 0.0, %v2039
        %2041 = vmatmul.bf16.gmra.mxu0 %v1726
        %v2042 = vpop.f32.mrf.mxu0
        %v2043 = vadd.f32 0.0, %v2042
        %v2044 = vpop.f32.mrf.mxu0
        %v2045 = vadd.f32 0.0, %v2044
        %2046 = vmatmul.bf16.gmra.mxu0 %v1728
        %v2047 = vpop.f32.mrf.mxu0
        %v2048 = vadd.f32 0.0, %v2047
        %v2049 = vpop.f32.mrf.mxu0
        %v2050 = vadd.f32 0.0, %v2049
        %2051 = vmatmul.bf16.gmra.mxu0 %v1730
        %v2052 = vpop.f32.mrf.mxu0
        %v2053 = vadd.f32 0.0, %v2052
        %v2054 = vpop.f32.mrf.mxu0
        %v2055 = vadd.f32 0.0, %v2054
        %2056 = vmatmul.bf16.gmra.mxu0 %v1732
        %v2057 = vpop.f32.mrf.mxu0
        %v2058 = vadd.f32 0.0, %v2057
        %v2059 = vpop.f32.mrf.mxu0
        %v2060 = vadd.f32 0.0, %v2059
        %2061 = vmatmul.bf16.gmra.mxu0 %v1734
        %v2062 = vpop.f32.mrf.mxu0
        %v2063 = vadd.f32 0.0, %v2062
        %v2064 = vpop.f32.mrf.mxu0
        %v2065 = vadd.f32 0.0, %v2064
        %2066 = vmatmul.bf16.gmra.mxu0 %v1736
        %v2067 = vpop.f32.mrf.mxu0
        %v2068 = vadd.f32 0.0, %v2067
        %v2069 = vpop.f32.mrf.mxu0
        %v2070 = vadd.f32 0.0, %v2069
        %2071 = vmatmul.bf16.gmra.mxu0 %v1738
        %v2072 = vpop.f32.mrf.mxu0
        %v2073 = vadd.f32 0.0, %v2072
        %v2074 = vpop.f32.mrf.mxu0
        %v2075 = vadd.f32 0.0, %v2074
        %2076 = vmatmul.bf16.gmra.mxu0 %v1740
        %v2077 = vpop.f32.mrf.mxu0
        %v2078 = vadd.f32 0.0, %v2077
        %v2079 = vpop.f32.mrf.mxu0
        %v2080 = vadd.f32 0.0, %v2079
        %2081 = vmatmul.bf16.gmra.mxu0 %v1742
        %v2082 = vpop.f32.mrf.mxu0
        %v2083 = vadd.f32 0.0, %v2082
        %v2084 = vpop.f32.mrf.mxu0
        %v2085 = vadd.f32 0.0, %v2084
        %2086 = vmatmul.bf16.gmra.mxu0 %v1744
        %v2087 = vpop.f32.mrf.mxu0
        %v2088 = vadd.f32 0.0, %v2087
        %v2089 = vpop.f32.mrf.mxu0
        %v2090 = vadd.f32 0.0, %v2089
        %2091 = vmatmul.bf16.gmra.mxu0 %v1746
        %v2092 = vpop.f32.mrf.mxu0
        %v2093 = vadd.f32 0.0, %v2092
        %v2094 = vpop.f32.mrf.mxu0
        %v2095 = vadd.f32 0.0, %v2094
        %2096 = vmatmul.bf16.gmra.mxu0 %v1748
        %v2097 = vpop.f32.mrf.mxu0
        %v2098 = vadd.f32 0.0, %v2097
        %v2099 = vpop.f32.mrf.mxu0
        %v2100 = vadd.f32 0.0, %v2099
        %2101 = vmatmul.bf16.gmra.mxu0 %v1750
        %v2102 = vpop.f32.mrf.mxu0
        %v2103 = vadd.f32 0.0, %v2102
        %v2104 = vpop.f32.mrf.mxu0
        %v2105 = vadd.f32 0.0, %v2104
        %2106 = vmatmul.bf16.gmra.mxu0 %v1752
        %v2107 = vpop.f32.mrf.mxu0
        %v2108 = vadd.f32 0.0, %v2107
        %v2109 = vpop.f32.mrf.mxu0
        %v2110 = vadd.f32 0.0, %v2109
        %2111 = vmatmul.bf16.gmra.mxu0 %v1754
        %v2112 = vpop.f32.mrf.mxu0
        %v2113 = vadd.f32 0.0, %v2112
        %v2114 = vpop.f32.mrf.mxu0
        %v2115 = vadd.f32 0.0, %v2114
        %2116 = vmatmul.bf16.gmra.mxu0 %v1756
        %v2117 = vpop.f32.mrf.mxu0
        %v2118 = vadd.f32 0.0, %v2117
        %v2119 = vpop.f32.mrf.mxu0
        %v2120 = vadd.f32 0.0, %v2119
        %2121 = vmatmul.bf16.gmra.mxu0 %v1758
        %v2122 = vpop.f32.mrf.mxu0
        %v2123 = vadd.f32 0.0, %v2122
        %v2124 = vpop.f32.mrf.mxu0
        %v2125 = vadd.f32 0.0, %v2124
        %2126 = vmatmul.bf16.gmra.mxu0 %v1760
        %v2127 = vpop.f32.mrf.mxu0
        %v2128 = vadd.f32 0.0, %v2127
        %v2129 = vpop.f32.mrf.mxu0
        %v2130 = vadd.f32 0.0, %v2129
        %2131 = vmatmul.bf16.gmra.mxu0 %v1762
        %v2132 = vpop.f32.mrf.mxu0
        %v2133 = vadd.f32 0.0, %v2132
        %v2134 = vpop.f32.mrf.mxu0
        %v2135 = vadd.f32 0.0, %v2134
        %2136 = vmatmul.bf16.gmra.mxu0 %v1764
        %v2137 = vpop.f32.mrf.mxu0
        %v2138 = vadd.f32 0.0, %v2137
        %v2139 = vpop.f32.mrf.mxu0
        %v2140 = vadd.f32 0.0, %v2139
        %2141 = vmatmul.bf16.gmra.mxu0 %v1766
        %v2142 = vpop.f32.mrf.mxu0
        %v2143 = vadd.f32 0.0, %v2142
        %v2144 = vpop.f32.mrf.mxu0
        %v2145 = vadd.f32 0.0, %v2144
        %2146 = vmatmul.bf16.gmra.mxu0 %v1768
        %v2147 = vpop.f32.mrf.mxu0
        %v2148 = vadd.f32 0.0, %v2147
        %v2149 = vpop.f32.mrf.mxu0
        %v2150 = vadd.f32 0.0, %v2149
        %2151 = vmatmul.bf16.gmra.mxu0 %v1770
        %v2152 = vpop.f32.mrf.mxu0
        %v2153 = vadd.f32 0.0, %v2152
        %v2154 = vpop.f32.mrf.mxu0
        %v2155 = vadd.f32 0.0, %v2154
        %2156 = vmatmul.bf16.gmra.mxu0 %v1772
        %v2157 = vpop.f32.mrf.mxu0
        %v2158 = vadd.f32 0.0, %v2157
        %v2159 = vpop.f32.mrf.mxu0
        %v2160 = vadd.f32 0.0, %v2159
        %2161 = vmatmul.bf16.gmra.mxu0 %v1774
        %v2162 = vpop.f32.mrf.mxu0
        %v2163 = vadd.f32 0.0, %v2162
        %v2164 = vpop.f32.mrf.mxu0
        %v2165 = vadd.f32 0.0, %v2164
        %2166 = vmatmul.bf16.gmra.mxu0 %v1776
        %v2167 = vpop.f32.mrf.mxu0
        %v2168 = vadd.f32 0.0, %v2167
        %v2169 = vpop.f32.mrf.mxu0
        %v2170 = vadd.f32 0.0, %v2169
        %2171 = vmatmul.bf16.gmra.mxu0 %v1778
        %v2172 = vpop.f32.mrf.mxu0
        %v2173 = vadd.f32 0.0, %v2172
        %v2174 = vpop.f32.mrf.mxu0
        %v2175 = vadd.f32 0.0, %v2174
        %2176 = vmatmul.bf16.gmra.mxu0 %v1780
        %v2177 = vpop.f32.mrf.mxu0
        %v2178 = vadd.f32 0.0, %v2177
        %v2179 = vpop.f32.mrf.mxu0
        %v2180 = vadd.f32 0.0, %v2179
        %2181 = vmatmul.bf16.gmra.mxu0 %v1782
        %v2182 = vpop.f32.mrf.mxu0
        %v2183 = vadd.f32 0.0, %v2182
        %v2184 = vpop.f32.mrf.mxu0
        %v2185 = vadd.f32 0.0, %v2184
        %2186 = vmatmul.bf16.gmra.mxu0 %v1784
        %v2187 = vpop.f32.mrf.mxu0
        %v2188 = vadd.f32 0.0, %v2187
        %v2189 = vpop.f32.mrf.mxu0
        %v2190 = vadd.f32 0.0, %v2189
        %2191 = vmatmul.bf16.gmra.mxu0 %v1786
        %v2192 = vpop.f32.mrf.mxu0
        %v2193 = vadd.f32 0.0, %v2192
        %v2194 = vpop.f32.mrf.mxu0
        %v2195 = vadd.f32 0.0, %v2194
        %2196 = vmatmul.bf16.gmra.mxu0 %v1788
        %v2197 = vpop.f32.mrf.mxu0
        %v2198 = vadd.f32 0.0, %v2197
        %v2199 = vpop.f32.mrf.mxu0
        %v2200 = vadd.f32 0.0, %v2199
        %2201 = vmatmul.bf16.gmra.mxu0 %v1790
        %v2202 = vpop.f32.mrf.mxu0
        %v2203 = vadd.f32 0.0, %v2202
        %v2204 = vpop.f32.mrf.mxu0
        %v2205 = vadd.f32 0.0, %v2204
        %2206 = vmatmul.bf16.gmra.mxu0 %v1792
        %v2207 = vpop.f32.mrf.mxu0
        %v2208 = vadd.f32 0.0, %v2207
        %v2209 = vpop.f32.mrf.mxu0
        %v2210 = vadd.f32 0.0, %v2209
        %2211 = vmatmul.bf16.gmra.mxu0 %v1794
        %v2212 = vpop.f32.mrf.mxu0
        %v2213 = vadd.f32 0.0, %v2212
        %v2214 = vpop.f32.mrf.mxu0
        %v2215 = vadd.f32 0.0, %v2214
        %2216 = vmatmul.bf16.gmra.mxu0 %v1796
        %v2217 = vpop.f32.mrf.mxu0
        %v2218 = vadd.f32 0.0, %v2217
        %v2219 = vpop.f32.mrf.mxu0
        %v2220 = vadd.f32 0.0, %v2219
        %2221 = vmatmul.bf16.gmra.mxu0 %v1798
        %v2222 = vpop.f32.mrf.mxu0
        %v2223 = vadd.f32 0.0, %v2222
        %v2224 = vpop.f32.mrf.mxu0
        %v2225 = vadd.f32 0.0, %v2224
        %2226 = vmatmul.bf16.gmra.mxu0 %v1800
        %v2227 = vpop.f32.mrf.mxu0
        %v2228 = vadd.f32 0.0, %v2227
        %v2229 = vpop.f32.mrf.mxu0
        %v2230 = vadd.f32 0.0, %v2229
        %2231 = vmatmul.bf16.gmra.mxu0 %v1802
        %v2232 = vpop.f32.mrf.mxu0
        %v2233 = vadd.f32 0.0, %v2232
        %v2234 = vpop.f32.mrf.mxu0
        %v2235 = vadd.f32 0.0, %v2234
        %2236 = vmatmul.bf16.gmra.mxu0 %v1804
        %v2237 = vpop.f32.mrf.mxu0
        %v2238 = vadd.f32 0.0, %v2237
        %v2239 = vpop.f32.mrf.mxu0
        %v2240 = vadd.f32 0.0, %v2239
        %2241 = vmatmul.bf16.gmra.mxu0 %v1806
        %v2242 = vpop.f32.mrf.mxu0
        %v2243 = vadd.f32 0.0, %v2242
        %v2244 = vpop.f32.mrf.mxu0
        %v2245 = vadd.f32 0.0, %v2244
        %2246 = vmatmul.bf16.gmra.mxu0 %v1808
        %v2247 = vpop.f32.mrf.mxu0
        %v2248 = vadd.f32 0.0, %v2247
        %v2249 = vpop.f32.mrf.mxu0
        %v2250 = vadd.f32 0.0, %v2249
        %2251 = vmatmul.bf16.gmra.mxu0 %v1810
        %v2252 = vpop.f32.mrf.mxu0
        %v2253 = vadd.f32 0.0, %v2252
        %v2254 = vpop.f32.mrf.mxu0
        %v2255 = vadd.f32 0.0, %v2254
        %2256 = vmatmul.bf16.gmra.mxu0 %v1812
        %v2257 = vpop.f32.mrf.mxu0
        %v2258 = vadd.f32 0.0, %v2257
        %v2259 = vpop.f32.mrf.mxu0
        %v2260 = vadd.f32 0.0, %v2259
        %2261 = vmatmul.bf16.gmra.mxu0 %v1814
        %v2262 = vpop.f32.mrf.mxu0
        %v2263 = vadd.f32 0.0, %v2262
        %v2264 = vpop.f32.mrf.mxu0
        %v2265 = vadd.f32 0.0, %v2264
        %2266 = vmatmul.bf16.gmra.mxu0 %v1816
        %v2267 = vpop.f32.mrf.mxu0
        %v2268 = vadd.f32 0.0, %v2267
        %v2269 = vpop.f32.mrf.mxu0
        %v2270 = vadd.f32 0.0, %v2269
        %2271 = vmatmul.bf16.gmra.mxu0 %v1818
        %v2272 = vpop.f32.mrf.mxu0
        %v2273 = vadd.f32 0.0, %v2272
        %v2274 = vpop.f32.mrf.mxu0
        %v2275 = vadd.f32 0.0, %v2274
        %2276 = vdwg.mxu0
        %2277 = vmatpush.bf16.msra.mxu0 %v1179
        %2278 = vmatpush.bf16.msra.mxu0 %v1178
        %2279 = vmatpush.bf16.msra.mxu0 %v1177
        %2280 = vmatpush.bf16.msra.mxu0 %v1176
        %2281 = vmatpush.bf16.msra.mxu0 %v1175
        %2282 = vmatpush.bf16.msra.mxu0 %v1174
        %2283 = vmatpush.bf16.msra.mxu0 %v1173
        %2284 = vmatpush.bf16.msra.mxu0 %v1172
        %2285 = vmatmul.bf16.gmra.mxu0 %v1693
        %v2286 = vpop.f32.mrf.mxu0
        %v2287 = vadd.f32 %v1958, %v2286
        %v2288 = vpop.f32.mrf.mxu0
        %v2289 = vadd.f32 %v1960, %v2288
        %2290 = vmatmul.bf16.gmra.mxu0 %v1695
        %v2291 = vpop.f32.mrf.mxu0
        %v2292 = vadd.f32 %v1963, %v2291
        %v2293 = vpop.f32.mrf.mxu0
        %v2294 = vadd.f32 %v1965, %v2293
        %2295 = vmatmul.bf16.gmra.mxu0 %v1697
        %v2296 = vpop.f32.mrf.mxu0
        %v2297 = vadd.f32 %v1968, %v2296
        %v2298 = vpop.f32.mrf.mxu0
        %v2299 = vadd.f32 %v1970, %v2298
        %2300 = vmatmul.bf16.gmra.mxu0 %v1699
        %v2301 = vpop.f32.mrf.mxu0
        %v2302 = vadd.f32 %v1973, %v2301
        %v2303 = vpop.f32.mrf.mxu0
        %v2304 = vadd.f32 %v1975, %v2303
        %2305 = vmatmul.bf16.gmra.mxu0 %v1701
        %v2306 = vpop.f32.mrf.mxu0
        %v2307 = vadd.f32 %v1978, %v2306
        %v2308 = vpop.f32.mrf.mxu0
        %v2309 = vadd.f32 %v1980, %v2308
        %2310 = vmatmul.bf16.gmra.mxu0 %v1703
        %v2311 = vpop.f32.mrf.mxu0
        %v2312 = vadd.f32 %v1983, %v2311
        %v2313 = vpop.f32.mrf.mxu0
        %v2314 = vadd.f32 %v1985, %v2313
        %2315 = vmatmul.bf16.gmra.mxu0 %v1705
        %v2316 = vpop.f32.mrf.mxu0
        %v2317 = vadd.f32 %v1988, %v2316
        %v2318 = vpop.f32.mrf.mxu0
        %v2319 = vadd.f32 %v1990, %v2318
        %2320 = vmatmul.bf16.gmra.mxu0 %v1707
        %v2321 = vpop.f32.mrf.mxu0
        %v2322 = vadd.f32 %v1993, %v2321
        %v2323 = vpop.f32.mrf.mxu0
        %v2324 = vadd.f32 %v1995, %v2323
        %2325 = vmatmul.bf16.gmra.mxu0 %v1709
        %v2326 = vpop.f32.mrf.mxu0
        %v2327 = vadd.f32 %v1998, %v2326
        %v2328 = vpop.f32.mrf.mxu0
        %v2329 = vadd.f32 %v2000, %v2328
        %2330 = vmatmul.bf16.gmra.mxu0 %v1711
        %v2331 = vpop.f32.mrf.mxu0
        %v2332 = vadd.f32 %v2003, %v2331
        %v2333 = vpop.f32.mrf.mxu0
        %v2334 = vadd.f32 %v2005, %v2333
        %2335 = vmatmul.bf16.gmra.mxu0 %v1713
        %v2336 = vpop.f32.mrf.mxu0
        %v2337 = vadd.f32 %v2008, %v2336
        %v2338 = vpop.f32.mrf.mxu0
        %v2339 = vadd.f32 %v2010, %v2338
        %2340 = vmatmul.bf16.gmra.mxu0 %v1715
        %v2341 = vpop.f32.mrf.mxu0
        %v2342 = vadd.f32 %v2013, %v2341
        %v2343 = vpop.f32.mrf.mxu0
        %v2344 = vadd.f32 %v2015, %v2343
        %2345 = vmatmul.bf16.gmra.mxu0 %v1717
        %v2346 = vpop.f32.mrf.mxu0
        %v2347 = vadd.f32 %v2018, %v2346
        %v2348 = vpop.f32.mrf.mxu0
        %v2349 = vadd.f32 %v2020, %v2348
        %2350 = vmatmul.bf16.gmra.mxu0 %v1719
        %v2351 = vpop.f32.mrf.mxu0
        %v2352 = vadd.f32 %v2023, %v2351
        %v2353 = vpop.f32.mrf.mxu0
        %v2354 = vadd.f32 %v2025, %v2353
        %2355 = vmatmul.bf16.gmra.mxu0 %v1721
        %v2356 = vpop.f32.mrf.mxu0
        %v2357 = vadd.f32 %v2028, %v2356
        %v2358 = vpop.f32.mrf.mxu0
        %v2359 = vadd.f32 %v2030, %v2358
        %2360 = vmatmul.bf16.gmra.mxu0 %v1723
        %v2361 = vpop.f32.mrf.mxu0
        %v2362 = vadd.f32 %v2033, %v2361
        %v2363 = vpop.f32.mrf.mxu0
        %v2364 = vadd.f32 %v2035, %v2363
        %2365 = vmatmul.bf16.gmra.mxu0 %v1725
        %v2366 = vpop.f32.mrf.mxu0
        %v2367 = vadd.f32 %v2038, %v2366
        %v2368 = vpop.f32.mrf.mxu0
        %v2369 = vadd.f32 %v2040, %v2368
        %2370 = vmatmul.bf16.gmra.mxu0 %v1727
        %v2371 = vpop.f32.mrf.mxu0
        %v2372 = vadd.f32 %v2043, %v2371
        %v2373 = vpop.f32.mrf.mxu0
        %v2374 = vadd.f32 %v2045, %v2373
        %2375 = vmatmul.bf16.gmra.mxu0 %v1729
        %v2376 = vpop.f32.mrf.mxu0
        %v2377 = vadd.f32 %v2048, %v2376
        %v2378 = vpop.f32.mrf.mxu0
        %v2379 = vadd.f32 %v2050, %v2378
        %2380 = vmatmul.bf16.gmra.mxu0 %v1731
        %v2381 = vpop.f32.mrf.mxu0
        %v2382 = vadd.f32 %v2053, %v2381
        %v2383 = vpop.f32.mrf.mxu0
        %v2384 = vadd.f32 %v2055, %v2383
        %2385 = vmatmul.bf16.gmra.mxu0 %v1733
        %v2386 = vpop.f32.mrf.mxu0
        %v2387 = vadd.f32 %v2058, %v2386
        %v2388 = vpop.f32.mrf.mxu0
        %v2389 = vadd.f32 %v2060, %v2388
        %2390 = vmatmul.bf16.gmra.mxu0 %v1735
        %v2391 = vpop.f32.mrf.mxu0
        %v2392 = vadd.f32 %v2063, %v2391
        %v2393 = vpop.f32.mrf.mxu0
        %v2394 = vadd.f32 %v2065, %v2393
        %2395 = vmatmul.bf16.gmra.mxu0 %v1737
        %v2396 = vpop.f32.mrf.mxu0
        %v2397 = vadd.f32 %v2068, %v2396
        %v2398 = vpop.f32.mrf.mxu0
        %v2399 = vadd.f32 %v2070, %v2398
        %2400 = vmatmul.bf16.gmra.mxu0 %v1739
        %v2401 = vpop.f32.mrf.mxu0
        %v2402 = vadd.f32 %v2073, %v2401
        %v2403 = vpop.f32.mrf.mxu0
        %v2404 = vadd.f32 %v2075, %v2403
        %2405 = vmatmul.bf16.gmra.mxu0 %v1741
        %v2406 = vpop.f32.mrf.mxu0
        %v2407 = vadd.f32 %v2078, %v2406
        %v2408 = vpop.f32.mrf.mxu0
        %v2409 = vadd.f32 %v2080, %v2408
        %2410 = vmatmul.bf16.gmra.mxu0 %v1743
        %v2411 = vpop.f32.mrf.mxu0
        %v2412 = vadd.f32 %v2083, %v2411
        %v2413 = vpop.f32.mrf.mxu0
        %v2414 = vadd.f32 %v2085, %v2413
        %2415 = vmatmul.bf16.gmra.mxu0 %v1745
        %v2416 = vpop.f32.mrf.mxu0
        %v2417 = vadd.f32 %v2088, %v2416
        %v2418 = vpop.f32.mrf.mxu0
        %v2419 = vadd.f32 %v2090, %v2418
        %2420 = vmatmul.bf16.gmra.mxu0 %v1747
        %v2421 = vpop.f32.mrf.mxu0
        %v2422 = vadd.f32 %v2093, %v2421
        %v2423 = vpop.f32.mrf.mxu0
        %v2424 = vadd.f32 %v2095, %v2423
        %2425 = vmatmul.bf16.gmra.mxu0 %v1749
        %v2426 = vpop.f32.mrf.mxu0
        %v2427 = vadd.f32 %v2098, %v2426
        %v2428 = vpop.f32.mrf.mxu0
        %v2429 = vadd.f32 %v2100, %v2428
        %2430 = vmatmul.bf16.gmra.mxu0 %v1751
        %v2431 = vpop.f32.mrf.mxu0
        %v2432 = vadd.f32 %v2103, %v2431
        %v2433 = vpop.f32.mrf.mxu0
        %v2434 = vadd.f32 %v2105, %v2433
        %2435 = vmatmul.bf16.gmra.mxu0 %v1753
        %v2436 = vpop.f32.mrf.mxu0
        %v2437 = vadd.f32 %v2108, %v2436
        %v2438 = vpop.f32.mrf.mxu0
        %v2439 = vadd.f32 %v2110, %v2438
        %2440 = vmatmul.bf16.gmra.mxu0 %v1755
        %v2441 = vpop.f32.mrf.mxu0
        %v2442 = vadd.f32 %v2113, %v2441
        %v2443 = vpop.f32.mrf.mxu0
        %v2444 = vadd.f32 %v2115, %v2443
        %2445 = vmatmul.bf16.gmra.mxu0 %v1757
        %v2446 = vpop.f32.mrf.mxu0
        %v2447 = vadd.f32 %v2118, %v2446
        %v2448 = vpop.f32.mrf.mxu0
        %v2449 = vadd.f32 %v2120, %v2448
        %2450 = vmatmul.bf16.gmra.mxu0 %v1759
        %v2451 = vpop.f32.mrf.mxu0
        %v2452 = vadd.f32 %v2123, %v2451
        %v2453 = vpop.f32.mrf.mxu0
        %v2454 = vadd.f32 %v2125, %v2453
        %2455 = vmatmul.bf16.gmra.mxu0 %v1761
        %v2456 = vpop.f32.mrf.mxu0
        %v2457 = vadd.f32 %v2128, %v2456
        %v2458 = vpop.f32.mrf.mxu0
        %v2459 = vadd.f32 %v2130, %v2458
        %2460 = vmatmul.bf16.gmra.mxu0 %v1763
        %v2461 = vpop.f32.mrf.mxu0
        %v2462 = vadd.f32 %v2133, %v2461
        %v2463 = vpop.f32.mrf.mxu0
        %v2464 = vadd.f32 %v2135, %v2463
        %2465 = vmatmul.bf16.gmra.mxu0 %v1765
        %v2466 = vpop.f32.mrf.mxu0
        %v2467 = vadd.f32 %v2138, %v2466
        %v2468 = vpop.f32.mrf.mxu0
        %v2469 = vadd.f32 %v2140, %v2468
        %2470 = vmatmul.bf16.gmra.mxu0 %v1767
        %v2471 = vpop.f32.mrf.mxu0
        %v2472 = vadd.f32 %v2143, %v2471
        %v2473 = vpop.f32.mrf.mxu0
        %v2474 = vadd.f32 %v2145, %v2473
        %2475 = vmatmul.bf16.gmra.mxu0 %v1769
        %v2476 = vpop.f32.mrf.mxu0
        %v2477 = vadd.f32 %v2148, %v2476
        %v2478 = vpop.f32.mrf.mxu0
        %v2479 = vadd.f32 %v2150, %v2478
        %2480 = vmatmul.bf16.gmra.mxu0 %v1771
        %v2481 = vpop.f32.mrf.mxu0
        %v2482 = vadd.f32 %v2153, %v2481
        %v2483 = vpop.f32.mrf.mxu0
        %v2484 = vadd.f32 %v2155, %v2483
        %2485 = vmatmul.bf16.gmra.mxu0 %v1773
        %v2486 = vpop.f32.mrf.mxu0
        %v2487 = vadd.f32 %v2158, %v2486
        %v2488 = vpop.f32.mrf.mxu0
        %v2489 = vadd.f32 %v2160, %v2488
        %2490 = vmatmul.bf16.gmra.mxu0 %v1775
        %v2491 = vpop.f32.mrf.mxu0
        %v2492 = vadd.f32 %v2163, %v2491
        %v2493 = vpop.f32.mrf.mxu0
        %v2494 = vadd.f32 %v2165, %v2493
        %2495 = vmatmul.bf16.gmra.mxu0 %v1777
        %v2496 = vpop.f32.mrf.mxu0
        %v2497 = vadd.f32 %v2168, %v2496
        %v2498 = vpop.f32.mrf.mxu0
        %v2499 = vadd.f32 %v2170, %v2498
        %2500 = vmatmul.bf16.gmra.mxu0 %v1779
        %v2501 = vpop.f32.mrf.mxu0
        %v2502 = vadd.f32 %v2173, %v2501
        %v2503 = vpop.f32.mrf.mxu0
        %v2504 = vadd.f32 %v2175, %v2503
        %2505 = vmatmul.bf16.gmra.mxu0 %v1781
        %v2506 = vpop.f32.mrf.mxu0
        %v2507 = vadd.f32 %v2178, %v2506
        %v2508 = vpop.f32.mrf.mxu0
        %v2509 = vadd.f32 %v2180, %v2508
        %2510 = vmatmul.bf16.gmra.mxu0 %v1783
        %v2511 = vpop.f32.mrf.mxu0
        %v2512 = vadd.f32 %v2183, %v2511
        %v2513 = vpop.f32.mrf.mxu0
        %v2514 = vadd.f32 %v2185, %v2513
        %2515 = vmatmul.bf16.gmra.mxu0 %v1785
        %v2516 = vpop.f32.mrf.mxu0
        %v2517 = vadd.f32 %v2188, %v2516
        %v2518 = vpop.f32.mrf.mxu0
        %v2519 = vadd.f32 %v2190, %v2518
        %2520 = vmatmul.bf16.gmra.mxu0 %v1787
        %v2521 = vpop.f32.mrf.mxu0
        %v2522 = vadd.f32 %v2193, %v2521
        %v2523 = vpop.f32.mrf.mxu0
        %v2524 = vadd.f32 %v2195, %v2523
        %2525 = vmatmul.bf16.gmra.mxu0 %v1789
        %v2526 = vpop.f32.mrf.mxu0
        %v2527 = vadd.f32 %v2198, %v2526
        %v2528 = vpop.f32.mrf.mxu0
        %v2529 = vadd.f32 %v2200, %v2528
        %2530 = vmatmul.bf16.gmra.mxu0 %v1791
        %v2531 = vpop.f32.mrf.mxu0
        %v2532 = vadd.f32 %v2203, %v2531
        %v2533 = vpop.f32.mrf.mxu0
        %v2534 = vadd.f32 %v2205, %v2533
        %2535 = vmatmul.bf16.gmra.mxu0 %v1793
        %v2536 = vpop.f32.mrf.mxu0
        %v2537 = vadd.f32 %v2208, %v2536
        %v2538 = vpop.f32.mrf.mxu0
        %v2539 = vadd.f32 %v2210, %v2538
        %2540 = vmatmul.bf16.gmra.mxu0 %v1795
        %v2541 = vpop.f32.mrf.mxu0
        %v2542 = vadd.f32 %v2213, %v2541
        %v2543 = vpop.f32.mrf.mxu0
        %v2544 = vadd.f32 %v2215, %v2543
        %2545 = vmatmul.bf16.gmra.mxu0 %v1797
        %v2546 = vpop.f32.mrf.mxu0
        %v2547 = vadd.f32 %v2218, %v2546
        %v2548 = vpop.f32.mrf.mxu0
        %v2549 = vadd.f32 %v2220, %v2548
        %2550 = vmatmul.bf16.gmra.mxu0 %v1799
        %v2551 = vpop.f32.mrf.mxu0
        %v2552 = vadd.f32 %v2223, %v2551
        %v2553 = vpop.f32.mrf.mxu0
        %v2554 = vadd.f32 %v2225, %v2553
        %2555 = vmatmul.bf16.gmra.mxu0 %v1801
        %v2556 = vpop.f32.mrf.mxu0
        %v2557 = vadd.f32 %v2228, %v2556
        %v2558 = vpop.f32.mrf.mxu0
        %v2559 = vadd.f32 %v2230, %v2558
        %2560 = vmatmul.bf16.gmra.mxu0 %v1803
        %v2561 = vpop.f32.mrf.mxu0
        %v2562 = vadd.f32 %v2233, %v2561
        %v2563 = vpop.f32.mrf.mxu0
        %v2564 = vadd.f32 %v2235, %v2563
        %2565 = vmatmul.bf16.gmra.mxu0 %v1805
        %v2566 = vpop.f32.mrf.mxu0
        %v2567 = vadd.f32 %v2238, %v2566
        %v2568 = vpop.f32.mrf.mxu0
        %v2569 = vadd.f32 %v2240, %v2568
        %2570 = vmatmul.bf16.gmra.mxu0 %v1807
        %v2571 = vpop.f32.mrf.mxu0
        %v2572 = vadd.f32 %v2243, %v2571
        %v2573 = vpop.f32.mrf.mxu0
        %v2574 = vadd.f32 %v2245, %v2573
        %2575 = vmatmul.bf16.gmra.mxu0 %v1809
        %v2576 = vpop.f32.mrf.mxu0
        %v2577 = vadd.f32 %v2248, %v2576
        %v2578 = vpop.f32.mrf.mxu0
        %v2579 = vadd.f32 %v2250, %v2578
        %2580 = vmatmul.bf16.gmra.mxu0 %v1811
        %v2581 = vpop.f32.mrf.mxu0
        %v2582 = vadd.f32 %v2253, %v2581
        %v2583 = vpop.f32.mrf.mxu0
        %v2584 = vadd.f32 %v2255, %v2583
        %2585 = vmatmul.bf16.gmra.mxu0 %v1813
        %v2586 = vpop.f32.mrf.mxu0
        %v2587 = vadd.f32 %v2258, %v2586
        %v2588 = vpop.f32.mrf.mxu0
        %v2589 = vadd.f32 %v2260, %v2588
        %2590 = vmatmul.bf16.gmra.mxu0 %v1815
        %v2591 = vpop.f32.mrf.mxu0
        %v2592 = vadd.f32 %v2263, %v2591
        %v2593 = vpop.f32.mrf.mxu0
        %v2594 = vadd.f32 %v2265, %v2593
        %2595 = vmatmul.bf16.gmra.mxu0 %v1817
        %v2596 = vpop.f32.mrf.mxu0
        %v2597 = vadd.f32 %v2268, %v2596
        %v2598 = vpop.f32.mrf.mxu0
        %v2599 = vadd.f32 %v2270, %v2598
        %2600 = vmatmul.bf16.gmra.mxu0 %v1819
        %v2601 = vpop.f32.mrf.mxu0
        %v2602 = vadd.f32 %v2273, %v2601
        %v2603 = vpop.f32.mrf.mxu0
        %v2604 = vadd.f32 %v2275, %v2603
        %2605 = vdwg.mxu0
        %v2606 = vpack.c.bf16 %v2287, %v2287
        %v2607 = vpack.c.bf16 %v2289, %v2289
        %v2608 = vpack.c.bf16 %v2292, %v2292
        %v2609 = vpack.c.bf16 %v2294, %v2294
        %v2610 = vpack.c.bf16 %v2297, %v2297
        %v2611 = vpack.c.bf16 %v2299, %v2299
        %v2612 = vpack.c.bf16 %v2302, %v2302
        %v2613 = vpack.c.bf16 %v2304, %v2304
        %v2614 = vpack.c.bf16 %v2307, %v2307
        %v2615 = vpack.c.bf16 %v2309, %v2309
        %v2616 = vpack.c.bf16 %v2312, %v2312
        %v2617 = vpack.c.bf16 %v2314, %v2314
        %v2618 = vpack.c.bf16 %v2317, %v2317
        %v2619 = vpack.c.bf16 %v2319, %v2319
        %v2620 = vpack.c.bf16 %v2322, %v2322
        %v2621 = vpack.c.bf16 %v2324, %v2324
        %v2622 = vpack.c.bf16 %v2327, %v2327
        %v2623 = vpack.c.bf16 %v2329, %v2329
        %v2624 = vpack.c.bf16 %v2332, %v2332
        %v2625 = vpack.c.bf16 %v2334, %v2334
        %v2626 = vpack.c.bf16 %v2337, %v2337
        %v2627 = vpack.c.bf16 %v2339, %v2339
        %v2628 = vpack.c.bf16 %v2342, %v2342
        %v2629 = vpack.c.bf16 %v2344, %v2344
        %v2630 = vpack.c.bf16 %v2347, %v2347
        %v2631 = vpack.c.bf16 %v2349, %v2349
        %v2632 = vpack.c.bf16 %v2352, %v2352
        %v2633 = vpack.c.bf16 %v2354, %v2354
        %v2634 = vpack.c.bf16 %v2357, %v2357
        %v2635 = vpack.c.bf16 %v2359, %v2359
        %v2636 = vpack.c.bf16 %v2362, %v2362
        %v2637 = vpack.c.bf16 %v2364, %v2364
        %v2638 = vpack.c.bf16 %v2367, %v2367
        %v2639 = vpack.c.bf16 %v2369, %v2369
        %v2640 = vpack.c.bf16 %v2372, %v2372
        %v2641 = vpack.c.bf16 %v2374, %v2374
        %v2642 = vpack.c.bf16 %v2377, %v2377
        %v2643 = vpack.c.bf16 %v2379, %v2379
        %v2644 = vpack.c.bf16 %v2382, %v2382
        %v2645 = vpack.c.bf16 %v2384, %v2384
        %v2646 = vpack.c.bf16 %v2387, %v2387
        %v2647 = vpack.c.bf16 %v2389, %v2389
        %v2648 = vpack.c.bf16 %v2392, %v2392
        %v2649 = vpack.c.bf16 %v2394, %v2394
        %v2650 = vpack.c.bf16 %v2397, %v2397
        %v2651 = vpack.c.bf16 %v2399, %v2399
        %v2652 = vpack.c.bf16 %v2402, %v2402
        %v2653 = vpack.c.bf16 %v2404, %v2404
        %v2654 = vpack.c.bf16 %v2407, %v2407
        %v2655 = vpack.c.bf16 %v2409, %v2409
        %v2656 = vpack.c.bf16 %v2412, %v2412
        %v2657 = vpack.c.bf16 %v2414, %v2414
        %v2658 = vpack.c.bf16 %v2417, %v2417
        %v2659 = vpack.c.bf16 %v2419, %v2419
        %v2660 = vpack.c.bf16 %v2422, %v2422
        %v2661 = vpack.c.bf16 %v2424, %v2424
        %v2662 = vpack.c.bf16 %v2427, %v2427
        %v2663 = vpack.c.bf16 %v2429, %v2429
        %v2664 = vpack.c.bf16 %v2432, %v2432
        %v2665 = vpack.c.bf16 %v2434, %v2434
        %v2666 = vpack.c.bf16 %v2437, %v2437
        %v2667 = vpack.c.bf16 %v2439, %v2439
        %v2668 = vpack.c.bf16 %v2442, %v2442
        %v2669 = vpack.c.bf16 %v2444, %v2444
        %v2670 = vpack.c.bf16 %v2447, %v2447
        %v2671 = vpack.c.bf16 %v2449, %v2449
        %v2672 = vpack.c.bf16 %v2452, %v2452
        %v2673 = vpack.c.bf16 %v2454, %v2454
        %v2674 = vpack.c.bf16 %v2457, %v2457
        %v2675 = vpack.c.bf16 %v2459, %v2459
        %v2676 = vpack.c.bf16 %v2462, %v2462
        %v2677 = vpack.c.bf16 %v2464, %v2464
        %v2678 = vpack.c.bf16 %v2467, %v2467
        %v2679 = vpack.c.bf16 %v2469, %v2469
        %v2680 = vpack.c.bf16 %v2472, %v2472
        %v2681 = vpack.c.bf16 %v2474, %v2474
        %v2682 = vpack.c.bf16 %v2477, %v2477
        %v2683 = vpack.c.bf16 %v2479, %v2479
        %v2684 = vpack.c.bf16 %v2482, %v2482
        %v2685 = vpack.c.bf16 %v2484, %v2484
        %v2686 = vpack.c.bf16 %v2487, %v2487
        %v2687 = vpack.c.bf16 %v2489, %v2489
        %v2688 = vpack.c.bf16 %v2492, %v2492
        %v2689 = vpack.c.bf16 %v2494, %v2494
        %v2690 = vpack.c.bf16 %v2497, %v2497
        %v2691 = vpack.c.bf16 %v2499, %v2499
        %v2692 = vpack.c.bf16 %v2502, %v2502
        %v2693 = vpack.c.bf16 %v2504, %v2504
        %v2694 = vpack.c.bf16 %v2507, %v2507
        %v2695 = vpack.c.bf16 %v2509, %v2509
        %v2696 = vpack.c.bf16 %v2512, %v2512
        %v2697 = vpack.c.bf16 %v2514, %v2514
        %v2698 = vpack.c.bf16 %v2517, %v2517
        %v2699 = vpack.c.bf16 %v2519, %v2519
        %v2700 = vpack.c.bf16 %v2522, %v2522
        %v2701 = vpack.c.bf16 %v2524, %v2524
        %v2702 = vpack.c.bf16 %v2527, %v2527
        %v2703 = vpack.c.bf16 %v2529, %v2529
        %v2704 = vpack.c.bf16 %v2532, %v2532
        %v2705 = vpack.c.bf16 %v2534, %v2534
        %v2706 = vpack.c.bf16 %v2537, %v2537
        %v2707 = vpack.c.bf16 %v2539, %v2539
        %v2708 = vpack.c.bf16 %v2542, %v2542
        %v2709 = vpack.c.bf16 %v2544, %v2544
        %v2710 = vpack.c.bf16 %v2547, %v2547
        %v2711 = vpack.c.bf16 %v2549, %v2549
        %v2712 = vpack.c.bf16 %v2552, %v2552
        %v2713 = vpack.c.bf16 %v2554, %v2554
        %v2714 = vpack.c.bf16 %v2557, %v2557
        %v2715 = vpack.c.bf16 %v2559, %v2559
        %v2716 = vpack.c.bf16 %v2562, %v2562
        %v2717 = vpack.c.bf16 %v2564, %v2564
        %v2718 = vpack.c.bf16 %v2567, %v2567
        %v2719 = vpack.c.bf16 %v2569, %v2569
        %v2720 = vpack.c.bf16 %v2572, %v2572
        %v2721 = vpack.c.bf16 %v2574, %v2574
        %v2722 = vpack.c.bf16 %v2577, %v2577
        %v2723 = vpack.c.bf16 %v2579, %v2579
        %v2724 = vpack.c.bf16 %v2582, %v2582
        %v2725 = vpack.c.bf16 %v2584, %v2584
        %v2726 = vpack.c.bf16 %v2587, %v2587
        %v2727 = vpack.c.bf16 %v2589, %v2589
        %v2728 = vpack.c.bf16 %v2592, %v2592
        %v2729 = vpack.c.bf16 %v2594, %v2594
        %v2730 = vpack.c.bf16 %v2597, %v2597
        %v2731 = vpack.c.bf16 %v2599, %v2599
        %v2732 = vpack.c.bf16 %v2602, %v2602
        %v2733 = vpack.c.bf16 %v2604, %v2604
        %v2734 = vld [vmem:[%s4] sm:$0xf]
        %v2735 = vld [vmem:[%s4 + $0x4] sm:$0xf]
        %v2736 = vld [vmem:[%s4 + $0x8] sm:$0xf]
        %v2737 = vld [vmem:[%s4 + $0xc] sm:$0xf]
        %v2738 = vld [vmem:[%s4 + $0x10] sm:$0xf]
        %v2739 = vld [vmem:[%s4 + $0x14] sm:$0xf]
        %v2740 = vld [vmem:[%s4 + $0x18] sm:$0xf]
        %v2741 = vld [vmem:[%s4 + $0x1c] sm:$0xf]
        %v2742 = vld [vmem:[%s4 + $0x20] sm:$0xf]
        %v2743 = vld [vmem:[%s4 + $0x24] sm:$0xf]
        %v2744 = vld [vmem:[%s4 + $0x28] sm:$0xf]
        %v2745 = vld [vmem:[%s4 + $0x2c] sm:$0xf]
        %v2746 = vld [vmem:[%s4 + $0x30] sm:$0xf]
        %v2747 = vld [vmem:[%s4 + $0x34] sm:$0xf]
        %v2748 = vld [vmem:[%s4 + $0x38] sm:$0xf]
        %v2749 = vld [vmem:[%s4 + $0x3c] sm:$0xf]
        %v2750 = vld [vmem:[%s4 + $0x40] sm:$0xf]
        %v2751 = vld [vmem:[%s4 + $0x44] sm:$0xf]
        %v2752 = vld [vmem:[%s4 + $0x48] sm:$0xf]
        %v2753 = vld [vmem:[%s4 + $0x4c] sm:$0xf]
        %v2754 = vld [vmem:[%s4 + $0x50] sm:$0xf]
        %v2755 = vld [vmem:[%s4 + $0x54] sm:$0xf]
        %v2756 = vld [vmem:[%s4 + $0x58] sm:$0xf]
        %v2757 = vld [vmem:[%s4 + $0x5c] sm:$0xf]
        %v2758 = vld [vmem:[%s4 + $0x60] sm:$0xf]
        %v2759 = vld [vmem:[%s4 + $0x64] sm:$0xf]
        %v2760 = vld [vmem:[%s4 + $0x68] sm:$0xf]
        %v2761 = vld [vmem:[%s4 + $0x6c] sm:$0xf]
        %v2762 = vld [vmem:[%s4 + $0x70] sm:$0xf]
        %v2763 = vld [vmem:[%s4 + $0x74] sm:$0xf]
        %v2764 = vld [vmem:[%s4 + $0x78] sm:$0xf]
        %v2765 = vld [vmem:[%s4 + $0x7c] sm:$0xf]
        %v2766 = vld [vmem:[%s4 + $0x80] sm:$0xf]
        %v2767 = vld [vmem:[%s4 + $0x84] sm:$0xf]
        %v2768 = vld [vmem:[%s4 + $0x88] sm:$0xf]
        %v2769 = vld [vmem:[%s4 + $0x8c] sm:$0xf]
        %v2770 = vld [vmem:[%s4 + $0x90] sm:$0xf]
        %v2771 = vld [vmem:[%s4 + $0x94] sm:$0xf]
        %v2772 = vld [vmem:[%s4 + $0x98] sm:$0xf]
        %v2773 = vld [vmem:[%s4 + $0x9c] sm:$0xf]
        %v2774 = vld [vmem:[%s4 + $0xa0] sm:$0xf]
        %v2775 = vld [vmem:[%s4 + $0xa4] sm:$0xf]
        %v2776 = vld [vmem:[%s4 + $0xa8] sm:$0xf]
        %v2777 = vld [vmem:[%s4 + $0xac] sm:$0xf]
        %v2778 = vld [vmem:[%s4 + $0xb0] sm:$0xf]
        %v2779 = vld [vmem:[%s4 + $0xb4] sm:$0xf]
        %v2780 = vld [vmem:[%s4 + $0xb8] sm:$0xf]
        %v2781 = vld [vmem:[%s4 + $0xbc] sm:$0xf]
        %v2782 = vld [vmem:[%s4 + $0xc0] sm:$0xf]
        %v2783 = vld [vmem:[%s4 + $0xc4] sm:$0xf]
        %v2784 = vld [vmem:[%s4 + $0xc8] sm:$0xf]
        %v2785 = vld [vmem:[%s4 + $0xcc] sm:$0xf]
        %v2786 = vld [vmem:[%s4 + $0xd0] sm:$0xf]
        %v2787 = vld [vmem:[%s4 + $0xd4] sm:$0xf]
        %v2788 = vld [vmem:[%s4 + $0xd8] sm:$0xf]
        %v2789 = vld [vmem:[%s4 + $0xdc] sm:$0xf]
        %v2790 = vld [vmem:[%s4 + $0xe0] sm:$0xf]
        %v2791 = vld [vmem:[%s4 + $0xe4] sm:$0xf]
        %v2792 = vld [vmem:[%s4 + $0xe8] sm:$0xf]
        %v2793 = vld [vmem:[%s4 + $0xec] sm:$0xf]
        %v2794 = vld [vmem:[%s4 + $0xf0] sm:$0xf]
        %v2795 = vld [vmem:[%s4 + $0xf4] sm:$0xf]
        %v2796 = vld [vmem:[%s4 + $0xf8] sm:$0xf]
        %v2797 = vld [vmem:[%s4 + $0xfc] sm:$0xf]
        %v2798 = vld [vmem:[%s4 + $0x100] sm:$0xf]
        %v2799 = vld [vmem:[%s4 + $0x104] sm:$0xf]
        %v2800 = vld [vmem:[%s4 + $0x108] sm:$0xf]
        %v2801 = vld [vmem:[%s4 + $0x10c] sm:$0xf]
        %v2802 = vld [vmem:[%s4 + $0x110] sm:$0xf]
        %v2803 = vld [vmem:[%s4 + $0x114] sm:$0xf]
        %v2804 = vld [vmem:[%s4 + $0x118] sm:$0xf]
        %v2805 = vld [vmem:[%s4 + $0x11c] sm:$0xf]
        %v2806 = vld [vmem:[%s4 + $0x120] sm:$0xf]
        %v2807 = vld [vmem:[%s4 + $0x124] sm:$0xf]
        %v2808 = vld [vmem:[%s4 + $0x128] sm:$0xf]
        %v2809 = vld [vmem:[%s4 + $0x12c] sm:$0xf]
        %v2810 = vld [vmem:[%s4 + $0x130] sm:$0xf]
        %v2811 = vld [vmem:[%s4 + $0x134] sm:$0xf]
        %v2812 = vld [vmem:[%s4 + $0x138] sm:$0xf]
        %v2813 = vld [vmem:[%s4 + $0x13c] sm:$0xf]
        %v2814 = vld [vmem:[%s4 + $0x140] sm:$0xf]
        %v2815 = vld [vmem:[%s4 + $0x144] sm:$0xf]
        %v2816 = vld [vmem:[%s4 + $0x148] sm:$0xf]
        %v2817 = vld [vmem:[%s4 + $0x14c] sm:$0xf]
        %v2818 = vld [vmem:[%s4 + $0x150] sm:$0xf]
        %v2819 = vld [vmem:[%s4 + $0x154] sm:$0xf]
        %v2820 = vld [vmem:[%s4 + $0x158] sm:$0xf]
        %v2821 = vld [vmem:[%s4 + $0x15c] sm:$0xf]
        %v2822 = vld [vmem:[%s4 + $0x160] sm:$0xf]
        %v2823 = vld [vmem:[%s4 + $0x164] sm:$0xf]
        %v2824 = vld [vmem:[%s4 + $0x168] sm:$0xf]
        %v2825 = vld [vmem:[%s4 + $0x16c] sm:$0xf]
        %v2826 = vld [vmem:[%s4 + $0x170] sm:$0xf]
        %v2827 = vld [vmem:[%s4 + $0x174] sm:$0xf]
        %v2828 = vld [vmem:[%s4 + $0x178] sm:$0xf]
        %v2829 = vld [vmem:[%s4 + $0x17c] sm:$0xf]
        %v2830 = vld [vmem:[%s4 + $0x180] sm:$0xf]
        %v2831 = vld [vmem:[%s4 + $0x184] sm:$0xf]
        %v2832 = vld [vmem:[%s4 + $0x188] sm:$0xf]
        %v2833 = vld [vmem:[%s4 + $0x18c] sm:$0xf]
        %v2834 = vld [vmem:[%s4 + $0x190] sm:$0xf]
        %v2835 = vld [vmem:[%s4 + $0x194] sm:$0xf]
        %v2836 = vld [vmem:[%s4 + $0x198] sm:$0xf]
        %v2837 = vld [vmem:[%s4 + $0x19c] sm:$0xf]
        %v2838 = vld [vmem:[%s4 + $0x1a0] sm:$0xf]
        %v2839 = vld [vmem:[%s4 + $0x1a4] sm:$0xf]
        %v2840 = vld [vmem:[%s4 + $0x1a8] sm:$0xf]
        %v2841 = vld [vmem:[%s4 + $0x1ac] sm:$0xf]
        %v2842 = vld [vmem:[%s4 + $0x1b0] sm:$0xf]
        %v2843 = vld [vmem:[%s4 + $0x1b4] sm:$0xf]
        %v2844 = vld [vmem:[%s4 + $0x1b8] sm:$0xf]
        %v2845 = vld [vmem:[%s4 + $0x1bc] sm:$0xf]
        %v2846 = vld [vmem:[%s4 + $0x1c0] sm:$0xf]
        %v2847 = vld [vmem:[%s4 + $0x1c4] sm:$0xf]
        %v2848 = vld [vmem:[%s4 + $0x1c8] sm:$0xf]
        %v2849 = vld [vmem:[%s4 + $0x1cc] sm:$0xf]
        %v2850 = vld [vmem:[%s4 + $0x1d0] sm:$0xf]
        %v2851 = vld [vmem:[%s4 + $0x1d4] sm:$0xf]
        %v2852 = vld [vmem:[%s4 + $0x1d8] sm:$0xf]
        %v2853 = vld [vmem:[%s4 + $0x1dc] sm:$0xf]
        %v2854 = vld [vmem:[%s4 + $0x1e0] sm:$0xf]
        %v2855 = vld [vmem:[%s4 + $0x1e4] sm:$0xf]
        %v2856 = vld [vmem:[%s4 + $0x1e8] sm:$0xf]
        %v2857 = vld [vmem:[%s4 + $0x1ec] sm:$0xf]
        %v2858 = vld [vmem:[%s4 + $0x1f0] sm:$0xf]
        %v2859 = vld [vmem:[%s4 + $0x1f4] sm:$0xf]
        %v2860 = vld [vmem:[%s4 + $0x1f8] sm:$0xf]
        %v2861 = vld [vmem:[%s4 + $0x1fc] sm:$0xf]
        %2863 = vset.pattern.permute.xlu0 0
        %2864 = vperm.xlu0 %2863, %v2734
        %v2865 = vpop.permute.xlu0 %2864
        %v2868 = vunpack.c.l.s4 839922192
        %v2869 = vunpack.c.0.s8 %v2868
        %v2870 = vperm.slane %v2865, %v2869
        %2872 = vset.pattern.permute.xlu0 0
        %2873 = vperm.xlu0 %2872, %v2735
        %v2874 = vpop.permute.xlu0 %2873
        %v2877 = vunpack.c.l.s4 839922192
        %v2878 = vunpack.c.0.s8 %v2877
        %v2879 = vperm.slane %v2874, %v2878
        %2881 = vset.pattern.permute.xlu0 0
        %2882 = vperm.xlu0 %2881, %v2736
        %v2883 = vpop.permute.xlu0 %2882
        %v2886 = vunpack.c.l.s4 839922192
        %v2887 = vunpack.c.0.s8 %v2886
        %v2888 = vperm.slane %v2883, %v2887
        %2890 = vset.pattern.permute.xlu0 0
        %2891 = vperm.xlu0 %2890, %v2737
        %v2892 = vpop.permute.xlu0 %2891
        %v2895 = vunpack.c.l.s4 839922192
        %v2896 = vunpack.c.0.s8 %v2895
        %v2897 = vperm.slane %v2892, %v2896
        %2899 = vset.pattern.permute.xlu0 0
        %2900 = vperm.xlu0 %2899, %v2738
        %v2901 = vpop.permute.xlu0 %2900
        %v2904 = vunpack.c.l.s4 839922192
        %v2905 = vunpack.c.0.s8 %v2904
        %v2906 = vperm.slane %v2901, %v2905
        %2908 = vset.pattern.permute.xlu0 0
        %2909 = vperm.xlu0 %2908, %v2739
        %v2910 = vpop.permute.xlu0 %2909
        %v2913 = vunpack.c.l.s4 839922192
        %v2914 = vunpack.c.0.s8 %v2913
        %v2915 = vperm.slane %v2910, %v2914
        %2917 = vset.pattern.permute.xlu0 0
        %2918 = vperm.xlu0 %2917, %v2740
        %v2919 = vpop.permute.xlu0 %2918
        %v2922 = vunpack.c.l.s4 839922192
        %v2923 = vunpack.c.0.s8 %v2922
        %v2924 = vperm.slane %v2919, %v2923
        %2926 = vset.pattern.permute.xlu0 0
        %2927 = vperm.xlu0 %2926, %v2741
        %v2928 = vpop.permute.xlu0 %2927
        %v2931 = vunpack.c.l.s4 839922192
        %v2932 = vunpack.c.0.s8 %v2931
        %v2933 = vperm.slane %v2928, %v2932
        %2935 = vset.pattern.permute.xlu0 0
        %2936 = vperm.xlu0 %2935, %v2742
        %v2937 = vpop.permute.xlu0 %2936
        %v2940 = vunpack.c.l.s4 839922192
        %v2941 = vunpack.c.0.s8 %v2940
        %v2942 = vperm.slane %v2937, %v2941
        %2944 = vset.pattern.permute.xlu0 0
        %2945 = vperm.xlu0 %2944, %v2743
        %v2946 = vpop.permute.xlu0 %2945
        %v2949 = vunpack.c.l.s4 839922192
        %v2950 = vunpack.c.0.s8 %v2949
        %v2951 = vperm.slane %v2946, %v2950
        %2953 = vset.pattern.permute.xlu0 0
        %2954 = vperm.xlu0 %2953, %v2744
        %v2955 = vpop.permute.xlu0 %2954
        %v2958 = vunpack.c.l.s4 839922192
        %v2959 = vunpack.c.0.s8 %v2958
        %v2960 = vperm.slane %v2955, %v2959
        %2962 = vset.pattern.permute.xlu0 0
        %2963 = vperm.xlu0 %2962, %v2745
        %v2964 = vpop.permute.xlu0 %2963
        %v2967 = vunpack.c.l.s4 839922192
        %v2968 = vunpack.c.0.s8 %v2967
        %v2969 = vperm.slane %v2964, %v2968
        %2971 = vset.pattern.permute.xlu0 0
        %2972 = vperm.xlu0 %2971, %v2746
        %v2973 = vpop.permute.xlu0 %2972
        %v2976 = vunpack.c.l.s4 839922192
        %v2977 = vunpack.c.0.s8 %v2976
        %v2978 = vperm.slane %v2973, %v2977
        %2980 = vset.pattern.permute.xlu0 0
        %2981 = vperm.xlu0 %2980, %v2747
        %v2982 = vpop.permute.xlu0 %2981
        %v2985 = vunpack.c.l.s4 839922192
        %v2986 = vunpack.c.0.s8 %v2985
        %v2987 = vperm.slane %v2982, %v2986
        %2989 = vset.pattern.permute.xlu0 0
        %2990 = vperm.xlu0 %2989, %v2748
        %v2991 = vpop.permute.xlu0 %2990
        %v2994 = vunpack.c.l.s4 839922192
        %v2995 = vunpack.c.0.s8 %v2994
        %v2996 = vperm.slane %v2991, %v2995
        %2998 = vset.pattern.permute.xlu0 0
        %2999 = vperm.xlu0 %2998, %v2749
        %v3000 = vpop.permute.xlu0 %2999
        %v3003 = vunpack.c.l.s4 839922192
        %v3004 = vunpack.c.0.s8 %v3003
        %v3005 = vperm.slane %v3000, %v3004
        %3007 = vset.pattern.permute.xlu0 0
        %3008 = vperm.xlu0 %3007, %v2750
        %v3009 = vpop.permute.xlu0 %3008
        %v3012 = vunpack.c.l.s4 839922192
        %v3013 = vunpack.c.0.s8 %v3012
        %v3014 = vperm.slane %v3009, %v3013
        %3016 = vset.pattern.permute.xlu0 0
        %3017 = vperm.xlu0 %3016, %v2751
        %v3018 = vpop.permute.xlu0 %3017
        %v3021 = vunpack.c.l.s4 839922192
        %v3022 = vunpack.c.0.s8 %v3021
        %v3023 = vperm.slane %v3018, %v3022
        %3025 = vset.pattern.permute.xlu0 0
        %3026 = vperm.xlu0 %3025, %v2752
        %v3027 = vpop.permute.xlu0 %3026
        %v3030 = vunpack.c.l.s4 839922192
        %v3031 = vunpack.c.0.s8 %v3030
        %v3032 = vperm.slane %v3027, %v3031
        %3034 = vset.pattern.permute.xlu0 0
        %3035 = vperm.xlu0 %3034, %v2753
        %v3036 = vpop.permute.xlu0 %3035
        %v3039 = vunpack.c.l.s4 839922192
        %v3040 = vunpack.c.0.s8 %v3039
        %v3041 = vperm.slane %v3036, %v3040
        %3043 = vset.pattern.permute.xlu0 0
        %3044 = vperm.xlu0 %3043, %v2754
        %v3045 = vpop.permute.xlu0 %3044
        %v3048 = vunpack.c.l.s4 839922192
        %v3049 = vunpack.c.0.s8 %v3048
        %v3050 = vperm.slane %v3045, %v3049
        %3052 = vset.pattern.permute.xlu0 0
        %3053 = vperm.xlu0 %3052, %v2755
        %v3054 = vpop.permute.xlu0 %3053
        %v3057 = vunpack.c.l.s4 839922192
        %v3058 = vunpack.c.0.s8 %v3057
        %v3059 = vperm.slane %v3054, %v3058
        %3061 = vset.pattern.permute.xlu0 0
        %3062 = vperm.xlu0 %3061, %v2756
        %v3063 = vpop.permute.xlu0 %3062
        %v3066 = vunpack.c.l.s4 839922192
        %v3067 = vunpack.c.0.s8 %v3066
        %v3068 = vperm.slane %v3063, %v3067
        %3070 = vset.pattern.permute.xlu0 0
        %3071 = vperm.xlu0 %3070, %v2757
        %v3072 = vpop.permute.xlu0 %3071
        %v3075 = vunpack.c.l.s4 839922192
        %v3076 = vunpack.c.0.s8 %v3075
        %v3077 = vperm.slane %v3072, %v3076
        %3079 = vset.pattern.permute.xlu0 0
        %3080 = vperm.xlu0 %3079, %v2758
        %v3081 = vpop.permute.xlu0 %3080
        %v3084 = vunpack.c.l.s4 839922192
        %v3085 = vunpack.c.0.s8 %v3084
        %v3086 = vperm.slane %v3081, %v3085
        %3088 = vset.pattern.permute.xlu0 0
        %3089 = vperm.xlu0 %3088, %v2759
        %v3090 = vpop.permute.xlu0 %3089
        %v3093 = vunpack.c.l.s4 839922192
        %v3094 = vunpack.c.0.s8 %v3093
        %v3095 = vperm.slane %v3090, %v3094
        %3097 = vset.pattern.permute.xlu0 0
        %3098 = vperm.xlu0 %3097, %v2760
        %v3099 = vpop.permute.xlu0 %3098
        %v3102 = vunpack.c.l.s4 839922192
        %v3103 = vunpack.c.0.s8 %v3102
        %v3104 = vperm.slane %v3099, %v3103
        %3106 = vset.pattern.permute.xlu0 0
        %3107 = vperm.xlu0 %3106, %v2761
        %v3108 = vpop.permute.xlu0 %3107
        %v3111 = vunpack.c.l.s4 839922192
        %v3112 = vunpack.c.0.s8 %v3111
        %v3113 = vperm.slane %v3108, %v3112
        %3115 = vset.pattern.permute.xlu0 0
        %3116 = vperm.xlu0 %3115, %v2762
        %v3117 = vpop.permute.xlu0 %3116
        %v3120 = vunpack.c.l.s4 839922192
        %v3121 = vunpack.c.0.s8 %v3120
        %v3122 = vperm.slane %v3117, %v3121
        %3124 = vset.pattern.permute.xlu0 0
        %3125 = vperm.xlu0 %3124, %v2763
        %v3126 = vpop.permute.xlu0 %3125
        %v3129 = vunpack.c.l.s4 839922192
        %v3130 = vunpack.c.0.s8 %v3129
        %v3131 = vperm.slane %v3126, %v3130
        %3133 = vset.pattern.permute.xlu0 0
        %3134 = vperm.xlu0 %3133, %v2764
        %v3135 = vpop.permute.xlu0 %3134
        %v3138 = vunpack.c.l.s4 839922192
        %v3139 = vunpack.c.0.s8 %v3138
        %v3140 = vperm.slane %v3135, %v3139
        %3142 = vset.pattern.permute.xlu0 0
        %3143 = vperm.xlu0 %3142, %v2765
        %v3144 = vpop.permute.xlu0 %3143
        %v3147 = vunpack.c.l.s4 839922192
        %v3148 = vunpack.c.0.s8 %v3147
        %v3149 = vperm.slane %v3144, %v3148
        %3151 = vset.pattern.permute.xlu0 0
        %3152 = vperm.xlu0 %3151, %v2766
        %v3153 = vpop.permute.xlu0 %3152
        %v3156 = vunpack.c.l.s4 839922192
        %v3157 = vunpack.c.0.s8 %v3156
        %v3158 = vperm.slane %v3153, %v3157
        %3160 = vset.pattern.permute.xlu0 0
        %3161 = vperm.xlu0 %3160, %v2767
        %v3162 = vpop.permute.xlu0 %3161
        %v3165 = vunpack.c.l.s4 839922192
        %v3166 = vunpack.c.0.s8 %v3165
        %v3167 = vperm.slane %v3162, %v3166
        %3169 = vset.pattern.permute.xlu0 0
        %3170 = vperm.xlu0 %3169, %v2768
        %v3171 = vpop.permute.xlu0 %3170
        %v3174 = vunpack.c.l.s4 839922192
        %v3175 = vunpack.c.0.s8 %v3174
        %v3176 = vperm.slane %v3171, %v3175
        %3178 = vset.pattern.permute.xlu0 0
        %3179 = vperm.xlu0 %3178, %v2769
        %v3180 = vpop.permute.xlu0 %3179
        %v3183 = vunpack.c.l.s4 839922192
        %v3184 = vunpack.c.0.s8 %v3183
        %v3185 = vperm.slane %v3180, %v3184
        %3187 = vset.pattern.permute.xlu0 0
        %3188 = vperm.xlu0 %3187, %v2770
        %v3189 = vpop.permute.xlu0 %3188
        %v3192 = vunpack.c.l.s4 839922192
        %v3193 = vunpack.c.0.s8 %v3192
        %v3194 = vperm.slane %v3189, %v3193
        %3196 = vset.pattern.permute.xlu0 0
        %3197 = vperm.xlu0 %3196, %v2771
        %v3198 = vpop.permute.xlu0 %3197
        %v3201 = vunpack.c.l.s4 839922192
        %v3202 = vunpack.c.0.s8 %v3201
        %v3203 = vperm.slane %v3198, %v3202
        %3205 = vset.pattern.permute.xlu0 0
        %3206 = vperm.xlu0 %3205, %v2772
        %v3207 = vpop.permute.xlu0 %3206
        %v3210 = vunpack.c.l.s4 839922192
        %v3211 = vunpack.c.0.s8 %v3210
        %v3212 = vperm.slane %v3207, %v3211
        %3214 = vset.pattern.permute.xlu0 0
        %3215 = vperm.xlu0 %3214, %v2773
        %v3216 = vpop.permute.xlu0 %3215
        %v3219 = vunpack.c.l.s4 839922192
        %v3220 = vunpack.c.0.s8 %v3219
        %v3221 = vperm.slane %v3216, %v3220
        %3223 = vset.pattern.permute.xlu0 0
        %3224 = vperm.xlu0 %3223, %v2774
        %v3225 = vpop.permute.xlu0 %3224
        %v3228 = vunpack.c.l.s4 839922192
        %v3229 = vunpack.c.0.s8 %v3228
        %v3230 = vperm.slane %v3225, %v3229
        %3232 = vset.pattern.permute.xlu0 0
        %3233 = vperm.xlu0 %3232, %v2775
        %v3234 = vpop.permute.xlu0 %3233
        %v3237 = vunpack.c.l.s4 839922192
        %v3238 = vunpack.c.0.s8 %v3237
        %v3239 = vperm.slane %v3234, %v3238
        %3241 = vset.pattern.permute.xlu0 0
        %3242 = vperm.xlu0 %3241, %v2776
        %v3243 = vpop.permute.xlu0 %3242
        %v3246 = vunpack.c.l.s4 839922192
        %v3247 = vunpack.c.0.s8 %v3246
        %v3248 = vperm.slane %v3243, %v3247
        %3250 = vset.pattern.permute.xlu0 0
        %3251 = vperm.xlu0 %3250, %v2777
        %v3252 = vpop.permute.xlu0 %3251
        %v3255 = vunpack.c.l.s4 839922192
        %v3256 = vunpack.c.0.s8 %v3255
        %v3257 = vperm.slane %v3252, %v3256
        %3259 = vset.pattern.permute.xlu0 0
        %3260 = vperm.xlu0 %3259, %v2778
        %v3261 = vpop.permute.xlu0 %3260
        %v3264 = vunpack.c.l.s4 839922192
        %v3265 = vunpack.c.0.s8 %v3264
        %v3266 = vperm.slane %v3261, %v3265
        %3268 = vset.pattern.permute.xlu0 0
        %3269 = vperm.xlu0 %3268, %v2779
        %v3270 = vpop.permute.xlu0 %3269
        %v3273 = vunpack.c.l.s4 839922192
        %v3274 = vunpack.c.0.s8 %v3273
        %v3275 = vperm.slane %v3270, %v3274
        %3277 = vset.pattern.permute.xlu0 0
        %3278 = vperm.xlu0 %3277, %v2780
        %v3279 = vpop.permute.xlu0 %3278
        %v3282 = vunpack.c.l.s4 839922192
        %v3283 = vunpack.c.0.s8 %v3282
        %v3284 = vperm.slane %v3279, %v3283
        %3286 = vset.pattern.permute.xlu0 0
        %3287 = vperm.xlu0 %3286, %v2781
        %v3288 = vpop.permute.xlu0 %3287
        %v3291 = vunpack.c.l.s4 839922192
        %v3292 = vunpack.c.0.s8 %v3291
        %v3293 = vperm.slane %v3288, %v3292
        %3295 = vset.pattern.permute.xlu0 0
        %3296 = vperm.xlu0 %3295, %v2782
        %v3297 = vpop.permute.xlu0 %3296
        %v3300 = vunpack.c.l.s4 839922192
        %v3301 = vunpack.c.0.s8 %v3300
        %v3302 = vperm.slane %v3297, %v3301
        %3304 = vset.pattern.permute.xlu0 0
        %3305 = vperm.xlu0 %3304, %v2783
        %v3306 = vpop.permute.xlu0 %3305
        %v3309 = vunpack.c.l.s4 839922192
        %v3310 = vunpack.c.0.s8 %v3309
        %v3311 = vperm.slane %v3306, %v3310
        %3313 = vset.pattern.permute.xlu0 0
        %3314 = vperm.xlu0 %3313, %v2784
        %v3315 = vpop.permute.xlu0 %3314
        %v3318 = vunpack.c.l.s4 839922192
        %v3319 = vunpack.c.0.s8 %v3318
        %v3320 = vperm.slane %v3315, %v3319
        %3322 = vset.pattern.permute.xlu0 0
        %3323 = vperm.xlu0 %3322, %v2785
        %v3324 = vpop.permute.xlu0 %3323
        %v3327 = vunpack.c.l.s4 839922192
        %v3328 = vunpack.c.0.s8 %v3327
        %v3329 = vperm.slane %v3324, %v3328
        %3331 = vset.pattern.permute.xlu0 0
        %3332 = vperm.xlu0 %3331, %v2786
        %v3333 = vpop.permute.xlu0 %3332
        %v3336 = vunpack.c.l.s4 839922192
        %v3337 = vunpack.c.0.s8 %v3336
        %v3338 = vperm.slane %v3333, %v3337
        %3340 = vset.pattern.permute.xlu0 0
        %3341 = vperm.xlu0 %3340, %v2787
        %v3342 = vpop.permute.xlu0 %3341
        %v3345 = vunpack.c.l.s4 839922192
        %v3346 = vunpack.c.0.s8 %v3345
        %v3347 = vperm.slane %v3342, %v3346
        %3349 = vset.pattern.permute.xlu0 0
        %3350 = vperm.xlu0 %3349, %v2788
        %v3351 = vpop.permute.xlu0 %3350
        %v3354 = vunpack.c.l.s4 839922192
        %v3355 = vunpack.c.0.s8 %v3354
        %v3356 = vperm.slane %v3351, %v3355
        %3358 = vset.pattern.permute.xlu0 0
        %3359 = vperm.xlu0 %3358, %v2789
        %v3360 = vpop.permute.xlu0 %3359
        %v3363 = vunpack.c.l.s4 839922192
        %v3364 = vunpack.c.0.s8 %v3363
        %v3365 = vperm.slane %v3360, %v3364
        %3367 = vset.pattern.permute.xlu0 0
        %3368 = vperm.xlu0 %3367, %v2790
        %v3369 = vpop.permute.xlu0 %3368
        %v3372 = vunpack.c.l.s4 839922192
        %v3373 = vunpack.c.0.s8 %v3372
        %v3374 = vperm.slane %v3369, %v3373
        %3376 = vset.pattern.permute.xlu0 0
        %3377 = vperm.xlu0 %3376, %v2791
        %v3378 = vpop.permute.xlu0 %3377
        %v3381 = vunpack.c.l.s4 839922192
        %v3382 = vunpack.c.0.s8 %v3381
        %v3383 = vperm.slane %v3378, %v3382
        %3385 = vset.pattern.permute.xlu0 0
        %3386 = vperm.xlu0 %3385, %v2792
        %v3387 = vpop.permute.xlu0 %3386
        %v3390 = vunpack.c.l.s4 839922192
        %v3391 = vunpack.c.0.s8 %v3390
        %v3392 = vperm.slane %v3387, %v3391
        %3394 = vset.pattern.permute.xlu0 0
        %3395 = vperm.xlu0 %3394, %v2793
        %v3396 = vpop.permute.xlu0 %3395
        %v3399 = vunpack.c.l.s4 839922192
        %v3400 = vunpack.c.0.s8 %v3399
        %v3401 = vperm.slane %v3396, %v3400
        %3403 = vset.pattern.permute.xlu0 0
        %3404 = vperm.xlu0 %3403, %v2794
        %v3405 = vpop.permute.xlu0 %3404
        %v3408 = vunpack.c.l.s4 839922192
        %v3409 = vunpack.c.0.s8 %v3408
        %v3410 = vperm.slane %v3405, %v3409
        %3412 = vset.pattern.permute.xlu0 0
        %3413 = vperm.xlu0 %3412, %v2795
        %v3414 = vpop.permute.xlu0 %3413
        %v3417 = vunpack.c.l.s4 839922192
        %v3418 = vunpack.c.0.s8 %v3417
        %v3419 = vperm.slane %v3414, %v3418
        %3421 = vset.pattern.permute.xlu0 0
        %3422 = vperm.xlu0 %3421, %v2796
        %v3423 = vpop.permute.xlu0 %3422
        %v3426 = vunpack.c.l.s4 839922192
        %v3427 = vunpack.c.0.s8 %v3426
        %v3428 = vperm.slane %v3423, %v3427
        %3430 = vset.pattern.permute.xlu0 0
        %3431 = vperm.xlu0 %3430, %v2797
        %v3432 = vpop.permute.xlu0 %3431
        %v3435 = vunpack.c.l.s4 839922192
        %v3436 = vunpack.c.0.s8 %v3435
        %v3437 = vperm.slane %v3432, %v3436
        %3439 = vset.pattern.permute.xlu0 0
        %3440 = vperm.xlu0 %3439, %v2798
        %v3441 = vpop.permute.xlu0 %3440
        %v3444 = vunpack.c.l.s4 839922192
        %v3445 = vunpack.c.0.s8 %v3444
        %v3446 = vperm.slane %v3441, %v3445
        %3448 = vset.pattern.permute.xlu0 0
        %3449 = vperm.xlu0 %3448, %v2799
        %v3450 = vpop.permute.xlu0 %3449
        %v3453 = vunpack.c.l.s4 839922192
        %v3454 = vunpack.c.0.s8 %v3453
        %v3455 = vperm.slane %v3450, %v3454
        %3457 = vset.pattern.permute.xlu0 0
        %3458 = vperm.xlu0 %3457, %v2800
        %v3459 = vpop.permute.xlu0 %3458
        %v3462 = vunpack.c.l.s4 839922192
        %v3463 = vunpack.c.0.s8 %v3462
        %v3464 = vperm.slane %v3459, %v3463
        %3466 = vset.pattern.permute.xlu0 0
        %3467 = vperm.xlu0 %3466, %v2801
        %v3468 = vpop.permute.xlu0 %3467
        %v3471 = vunpack.c.l.s4 839922192
        %v3472 = vunpack.c.0.s8 %v3471
        %v3473 = vperm.slane %v3468, %v3472
        %3475 = vset.pattern.permute.xlu0 0
        %3476 = vperm.xlu0 %3475, %v2802
        %v3477 = vpop.permute.xlu0 %3476
        %v3480 = vunpack.c.l.s4 839922192
        %v3481 = vunpack.c.0.s8 %v3480
        %v3482 = vperm.slane %v3477, %v3481
        %3484 = vset.pattern.permute.xlu0 0
        %3485 = vperm.xlu0 %3484, %v2803
        %v3486 = vpop.permute.xlu0 %3485
        %v3489 = vunpack.c.l.s4 839922192
        %v3490 = vunpack.c.0.s8 %v3489
        %v3491 = vperm.slane %v3486, %v3490
        %3493 = vset.pattern.permute.xlu0 0
        %3494 = vperm.xlu0 %3493, %v2804
        %v3495 = vpop.permute.xlu0 %3494
        %v3498 = vunpack.c.l.s4 839922192
        %v3499 = vunpack.c.0.s8 %v3498
        %v3500 = vperm.slane %v3495, %v3499
        %3502 = vset.pattern.permute.xlu0 0
        %3503 = vperm.xlu0 %3502, %v2805
        %v3504 = vpop.permute.xlu0 %3503
        %v3507 = vunpack.c.l.s4 839922192
        %v3508 = vunpack.c.0.s8 %v3507
        %v3509 = vperm.slane %v3504, %v3508
        %3511 = vset.pattern.permute.xlu0 0
        %3512 = vperm.xlu0 %3511, %v2806
        %v3513 = vpop.permute.xlu0 %3512
        %v3516 = vunpack.c.l.s4 839922192
        %v3517 = vunpack.c.0.s8 %v3516
        %v3518 = vperm.slane %v3513, %v3517
        %3520 = vset.pattern.permute.xlu0 0
        %3521 = vperm.xlu0 %3520, %v2807
        %v3522 = vpop.permute.xlu0 %3521
        %v3525 = vunpack.c.l.s4 839922192
        %v3526 = vunpack.c.0.s8 %v3525
        %v3527 = vperm.slane %v3522, %v3526
        %3529 = vset.pattern.permute.xlu0 0
        %3530 = vperm.xlu0 %3529, %v2808
        %v3531 = vpop.permute.xlu0 %3530
        %v3534 = vunpack.c.l.s4 839922192
        %v3535 = vunpack.c.0.s8 %v3534
        %v3536 = vperm.slane %v3531, %v3535
        %3538 = vset.pattern.permute.xlu0 0
        %3539 = vperm.xlu0 %3538, %v2809
        %v3540 = vpop.permute.xlu0 %3539
        %v3543 = vunpack.c.l.s4 839922192
        %v3544 = vunpack.c.0.s8 %v3543
        %v3545 = vperm.slane %v3540, %v3544
        %3547 = vset.pattern.permute.xlu0 0
        %3548 = vperm.xlu0 %3547, %v2810
        %v3549 = vpop.permute.xlu0 %3548
        %v3552 = vunpack.c.l.s4 839922192
        %v3553 = vunpack.c.0.s8 %v3552
        %v3554 = vperm.slane %v3549, %v3553
        %3556 = vset.pattern.permute.xlu0 0
        %3557 = vperm.xlu0 %3556, %v2811
        %v3558 = vpop.permute.xlu0 %3557
        %v3561 = vunpack.c.l.s4 839922192
        %v3562 = vunpack.c.0.s8 %v3561
        %v3563 = vperm.slane %v3558, %v3562
        %3565 = vset.pattern.permute.xlu0 0
        %3566 = vperm.xlu0 %3565, %v2812
        %v3567 = vpop.permute.xlu0 %3566
        %v3570 = vunpack.c.l.s4 839922192
        %v3571 = vunpack.c.0.s8 %v3570
        %v3572 = vperm.slane %v3567, %v3571
        %3574 = vset.pattern.permute.xlu0 0
        %3575 = vperm.xlu0 %3574, %v2813
        %v3576 = vpop.permute.xlu0 %3575
        %v3579 = vunpack.c.l.s4 839922192
        %v3580 = vunpack.c.0.s8 %v3579
        %v3581 = vperm.slane %v3576, %v3580
        %3583 = vset.pattern.permute.xlu0 0
        %3584 = vperm.xlu0 %3583, %v2814
        %v3585 = vpop.permute.xlu0 %3584
        %v3588 = vunpack.c.l.s4 839922192
        %v3589 = vunpack.c.0.s8 %v3588
        %v3590 = vperm.slane %v3585, %v3589
        %3592 = vset.pattern.permute.xlu0 0
        %3593 = vperm.xlu0 %3592, %v2815
        %v3594 = vpop.permute.xlu0 %3593
        %v3597 = vunpack.c.l.s4 839922192
        %v3598 = vunpack.c.0.s8 %v3597
        %v3599 = vperm.slane %v3594, %v3598
        %3601 = vset.pattern.permute.xlu0 0
        %3602 = vperm.xlu0 %3601, %v2816
        %v3603 = vpop.permute.xlu0 %3602
        %v3606 = vunpack.c.l.s4 839922192
        %v3607 = vunpack.c.0.s8 %v3606
        %v3608 = vperm.slane %v3603, %v3607
        %3610 = vset.pattern.permute.xlu0 0
        %3611 = vperm.xlu0 %3610, %v2817
        %v3612 = vpop.permute.xlu0 %3611
        %v3615 = vunpack.c.l.s4 839922192
        %v3616 = vunpack.c.0.s8 %v3615
        %v3617 = vperm.slane %v3612, %v3616
        %3619 = vset.pattern.permute.xlu0 0
        %3620 = vperm.xlu0 %3619, %v2818
        %v3621 = vpop.permute.xlu0 %3620
        %v3624 = vunpack.c.l.s4 839922192
        %v3625 = vunpack.c.0.s8 %v3624
        %v3626 = vperm.slane %v3621, %v3625
        %3628 = vset.pattern.permute.xlu0 0
        %3629 = vperm.xlu0 %3628, %v2819
        %v3630 = vpop.permute.xlu0 %3629
        %v3633 = vunpack.c.l.s4 839922192
        %v3634 = vunpack.c.0.s8 %v3633
        %v3635 = vperm.slane %v3630, %v3634
        %3637 = vset.pattern.permute.xlu0 0
        %3638 = vperm.xlu0 %3637, %v2820
        %v3639 = vpop.permute.xlu0 %3638
        %v3642 = vunpack.c.l.s4 839922192
        %v3643 = vunpack.c.0.s8 %v3642
        %v3644 = vperm.slane %v3639, %v3643
        %3646 = vset.pattern.permute.xlu0 0
        %3647 = vperm.xlu0 %3646, %v2821
        %v3648 = vpop.permute.xlu0 %3647
        %v3651 = vunpack.c.l.s4 839922192
        %v3652 = vunpack.c.0.s8 %v3651
        %v3653 = vperm.slane %v3648, %v3652
        %3655 = vset.pattern.permute.xlu0 0
        %3656 = vperm.xlu0 %3655, %v2822
        %v3657 = vpop.permute.xlu0 %3656
        %v3660 = vunpack.c.l.s4 839922192
        %v3661 = vunpack.c.0.s8 %v3660
        %v3662 = vperm.slane %v3657, %v3661
        %3664 = vset.pattern.permute.xlu0 0
        %3665 = vperm.xlu0 %3664, %v2823
        %v3666 = vpop.permute.xlu0 %3665
        %v3669 = vunpack.c.l.s4 839922192
        %v3670 = vunpack.c.0.s8 %v3669
        %v3671 = vperm.slane %v3666, %v3670
        %3673 = vset.pattern.permute.xlu0 0
        %3674 = vperm.xlu0 %3673, %v2824
        %v3675 = vpop.permute.xlu0 %3674
        %v3678 = vunpack.c.l.s4 839922192
        %v3679 = vunpack.c.0.s8 %v3678
        %v3680 = vperm.slane %v3675, %v3679
        %3682 = vset.pattern.permute.xlu0 0
        %3683 = vperm.xlu0 %3682, %v2825
        %v3684 = vpop.permute.xlu0 %3683
        %v3687 = vunpack.c.l.s4 839922192
        %v3688 = vunpack.c.0.s8 %v3687
        %v3689 = vperm.slane %v3684, %v3688
        %3691 = vset.pattern.permute.xlu0 0
        %3692 = vperm.xlu0 %3691, %v2826
        %v3693 = vpop.permute.xlu0 %3692
        %v3696 = vunpack.c.l.s4 839922192
        %v3697 = vunpack.c.0.s8 %v3696
        %v3698 = vperm.slane %v3693, %v3697
        %3700 = vset.pattern.permute.xlu0 0
        %3701 = vperm.xlu0 %3700, %v2827
        %v3702 = vpop.permute.xlu0 %3701
        %v3705 = vunpack.c.l.s4 839922192
        %v3706 = vunpack.c.0.s8 %v3705
        %v3707 = vperm.slane %v3702, %v3706
        %3709 = vset.pattern.permute.xlu0 0
        %3710 = vperm.xlu0 %3709, %v2828
        %v3711 = vpop.permute.xlu0 %3710
        %v3714 = vunpack.c.l.s4 839922192
        %v3715 = vunpack.c.0.s8 %v3714
        %v3716 = vperm.slane %v3711, %v3715
        %3718 = vset.pattern.permute.xlu0 0
        %3719 = vperm.xlu0 %3718, %v2829
        %v3720 = vpop.permute.xlu0 %3719
        %v3723 = vunpack.c.l.s4 839922192
        %v3724 = vunpack.c.0.s8 %v3723
        %v3725 = vperm.slane %v3720, %v3724
        %3727 = vset.pattern.permute.xlu0 0
        %3728 = vperm.xlu0 %3727, %v2830
        %v3729 = vpop.permute.xlu0 %3728
        %v3732 = vunpack.c.l.s4 839922192
        %v3733 = vunpack.c.0.s8 %v3732
        %v3734 = vperm.slane %v3729, %v3733
        %3736 = vset.pattern.permute.xlu0 0
        %3737 = vperm.xlu0 %3736, %v2831
        %v3738 = vpop.permute.xlu0 %3737
        %v3741 = vunpack.c.l.s4 839922192
        %v3742 = vunpack.c.0.s8 %v3741
        %v3743 = vperm.slane %v3738, %v3742
        %3745 = vset.pattern.permute.xlu0 0
        %3746 = vperm.xlu0 %3745, %v2832
        %v3747 = vpop.permute.xlu0 %3746
        %v3750 = vunpack.c.l.s4 839922192
        %v3751 = vunpack.c.0.s8 %v3750
        %v3752 = vperm.slane %v3747, %v3751
        %3754 = vset.pattern.permute.xlu0 0
        %3755 = vperm.xlu0 %3754, %v2833
        %v3756 = vpop.permute.xlu0 %3755
        %v3759 = vunpack.c.l.s4 839922192
        %v3760 = vunpack.c.0.s8 %v3759
        %v3761 = vperm.slane %v3756, %v3760
        %3763 = vset.pattern.permute.xlu0 0
        %3764 = vperm.xlu0 %3763, %v2834
        %v3765 = vpop.permute.xlu0 %3764
        %v3768 = vunpack.c.l.s4 839922192
        %v3769 = vunpack.c.0.s8 %v3768
        %v3770 = vperm.slane %v3765, %v3769
        %3772 = vset.pattern.permute.xlu0 0
        %3773 = vperm.xlu0 %3772, %v2835
        %v3774 = vpop.permute.xlu0 %3773
        %v3777 = vunpack.c.l.s4 839922192
        %v3778 = vunpack.c.0.s8 %v3777
        %v3779 = vperm.slane %v3774, %v3778
        %3781 = vset.pattern.permute.xlu0 0
        %3782 = vperm.xlu0 %3781, %v2836
        %v3783 = vpop.permute.xlu0 %3782
        %v3786 = vunpack.c.l.s4 839922192
        %v3787 = vunpack.c.0.s8 %v3786
        %v3788 = vperm.slane %v3783, %v3787
        %3790 = vset.pattern.permute.xlu0 0
        %3791 = vperm.xlu0 %3790, %v2837
        %v3792 = vpop.permute.xlu0 %3791
        %v3795 = vunpack.c.l.s4 839922192
        %v3796 = vunpack.c.0.s8 %v3795
        %v3797 = vperm.slane %v3792, %v3796
        %3799 = vset.pattern.permute.xlu0 0
        %3800 = vperm.xlu0 %3799, %v2838
        %v3801 = vpop.permute.xlu0 %3800
        %v3804 = vunpack.c.l.s4 839922192
        %v3805 = vunpack.c.0.s8 %v3804
        %v3806 = vperm.slane %v3801, %v3805
        %3808 = vset.pattern.permute.xlu0 0
        %3809 = vperm.xlu0 %3808, %v2839
        %v3810 = vpop.permute.xlu0 %3809
        %v3813 = vunpack.c.l.s4 839922192
        %v3814 = vunpack.c.0.s8 %v3813
        %v3815 = vperm.slane %v3810, %v3814
        %3817 = vset.pattern.permute.xlu0 0
        %3818 = vperm.xlu0 %3817, %v2840
        %v3819 = vpop.permute.xlu0 %3818
        %v3822 = vunpack.c.l.s4 839922192
        %v3823 = vunpack.c.0.s8 %v3822
        %v3824 = vperm.slane %v3819, %v3823
        %3826 = vset.pattern.permute.xlu0 0
        %3827 = vperm.xlu0 %3826, %v2841
        %v3828 = vpop.permute.xlu0 %3827
        %v3831 = vunpack.c.l.s4 839922192
        %v3832 = vunpack.c.0.s8 %v3831
        %v3833 = vperm.slane %v3828, %v3832
        %3835 = vset.pattern.permute.xlu0 0
        %3836 = vperm.xlu0 %3835, %v2842
        %v3837 = vpop.permute.xlu0 %3836
        %v3840 = vunpack.c.l.s4 839922192
        %v3841 = vunpack.c.0.s8 %v3840
        %v3842 = vperm.slane %v3837, %v3841
        %3844 = vset.pattern.permute.xlu0 0
        %3845 = vperm.xlu0 %3844, %v2843
        %v3846 = vpop.permute.xlu0 %3845
        %v3849 = vunpack.c.l.s4 839922192
        %v3850 = vunpack.c.0.s8 %v3849
        %v3851 = vperm.slane %v3846, %v3850
        %3853 = vset.pattern.permute.xlu0 0
        %3854 = vperm.xlu0 %3853, %v2844
        %v3855 = vpop.permute.xlu0 %3854
        %v3858 = vunpack.c.l.s4 839922192
        %v3859 = vunpack.c.0.s8 %v3858
        %v3860 = vperm.slane %v3855, %v3859
        %3862 = vset.pattern.permute.xlu0 0
        %3863 = vperm.xlu0 %3862, %v2845
        %v3864 = vpop.permute.xlu0 %3863
        %v3867 = vunpack.c.l.s4 839922192
        %v3868 = vunpack.c.0.s8 %v3867
        %v3869 = vperm.slane %v3864, %v3868
        %3871 = vset.pattern.permute.xlu0 0
        %3872 = vperm.xlu0 %3871, %v2846
        %v3873 = vpop.permute.xlu0 %3872
        %v3876 = vunpack.c.l.s4 839922192
        %v3877 = vunpack.c.0.s8 %v3876
        %v3878 = vperm.slane %v3873, %v3877
        %3880 = vset.pattern.permute.xlu0 0
        %3881 = vperm.xlu0 %3880, %v2847
        %v3882 = vpop.permute.xlu0 %3881
        %v3885 = vunpack.c.l.s4 839922192
        %v3886 = vunpack.c.0.s8 %v3885
        %v3887 = vperm.slane %v3882, %v3886
        %3889 = vset.pattern.permute.xlu0 0
        %3890 = vperm.xlu0 %3889, %v2848
        %v3891 = vpop.permute.xlu0 %3890
        %v3894 = vunpack.c.l.s4 839922192
        %v3895 = vunpack.c.0.s8 %v3894
        %v3896 = vperm.slane %v3891, %v3895
        %3898 = vset.pattern.permute.xlu0 0
        %3899 = vperm.xlu0 %3898, %v2849
        %v3900 = vpop.permute.xlu0 %3899
        %v3903 = vunpack.c.l.s4 839922192
        %v3904 = vunpack.c.0.s8 %v3903
        %v3905 = vperm.slane %v3900, %v3904
        %3907 = vset.pattern.permute.xlu0 0
        %3908 = vperm.xlu0 %3907, %v2850
        %v3909 = vpop.permute.xlu0 %3908
        %v3912 = vunpack.c.l.s4 839922192
        %v3913 = vunpack.c.0.s8 %v3912
        %v3914 = vperm.slane %v3909, %v3913
        %3916 = vset.pattern.permute.xlu0 0
        %3917 = vperm.xlu0 %3916, %v2851
        %v3918 = vpop.permute.xlu0 %3917
        %v3921 = vunpack.c.l.s4 839922192
        %v3922 = vunpack.c.0.s8 %v3921
        %v3923 = vperm.slane %v3918, %v3922
        %3925 = vset.pattern.permute.xlu0 0
        %3926 = vperm.xlu0 %3925, %v2852
        %v3927 = vpop.permute.xlu0 %3926
        %v3930 = vunpack.c.l.s4 839922192
        %v3931 = vunpack.c.0.s8 %v3930
        %v3932 = vperm.slane %v3927, %v3931
        %3934 = vset.pattern.permute.xlu0 0
        %3935 = vperm.xlu0 %3934, %v2853
        %v3936 = vpop.permute.xlu0 %3935
        %v3939 = vunpack.c.l.s4 839922192
        %v3940 = vunpack.c.0.s8 %v3939
        %v3941 = vperm.slane %v3936, %v3940
        %3943 = vset.pattern.permute.xlu0 0
        %3944 = vperm.xlu0 %3943, %v2854
        %v3945 = vpop.permute.xlu0 %3944
        %v3948 = vunpack.c.l.s4 839922192
        %v3949 = vunpack.c.0.s8 %v3948
        %v3950 = vperm.slane %v3945, %v3949
        %3952 = vset.pattern.permute.xlu0 0
        %3953 = vperm.xlu0 %3952, %v2855
        %v3954 = vpop.permute.xlu0 %3953
        %v3957 = vunpack.c.l.s4 839922192
        %v3958 = vunpack.c.0.s8 %v3957
        %v3959 = vperm.slane %v3954, %v3958
        %3961 = vset.pattern.permute.xlu0 0
        %3962 = vperm.xlu0 %3961, %v2856
        %v3963 = vpop.permute.xlu0 %3962
        %v3966 = vunpack.c.l.s4 839922192
        %v3967 = vunpack.c.0.s8 %v3966
        %v3968 = vperm.slane %v3963, %v3967
        %3970 = vset.pattern.permute.xlu0 0
        %3971 = vperm.xlu0 %3970, %v2857
        %v3972 = vpop.permute.xlu0 %3971
        %v3975 = vunpack.c.l.s4 839922192
        %v3976 = vunpack.c.0.s8 %v3975
        %v3977 = vperm.slane %v3972, %v3976
        %3979 = vset.pattern.permute.xlu0 0
        %3980 = vperm.xlu0 %3979, %v2858
        %v3981 = vpop.permute.xlu0 %3980
        %v3984 = vunpack.c.l.s4 839922192
        %v3985 = vunpack.c.0.s8 %v3984
        %v3986 = vperm.slane %v3981, %v3985
        %3988 = vset.pattern.permute.xlu0 0
        %3989 = vperm.xlu0 %3988, %v2859
        %v3990 = vpop.permute.xlu0 %3989
        %v3993 = vunpack.c.l.s4 839922192
        %v3994 = vunpack.c.0.s8 %v3993
        %v3995 = vperm.slane %v3990, %v3994
        %3997 = vset.pattern.permute.xlu0 0
        %3998 = vperm.xlu0 %3997, %v2860
        %v3999 = vpop.permute.xlu0 %3998
        %v4002 = vunpack.c.l.s4 839922192
        %v4003 = vunpack.c.0.s8 %v4002
        %v4004 = vperm.slane %v3999, %v4003
        %4006 = vset.pattern.permute.xlu0 0
        %4007 = vperm.xlu0 %4006, %v2861
        %v4008 = vpop.permute.xlu0 %4007
        %v4011 = vunpack.c.l.s4 839922192
        %v4012 = vunpack.c.0.s8 %v4011
        %v4013 = vperm.slane %v4008, %v4012
        %v4014 = vunpack.c.l.bf16 %v2606
        %v4015 = vunpack.c.l.bf16 %v2607
        %v4016 = vunpack.c.l.bf16 %v2608
        %v4017 = vunpack.c.l.bf16 %v2609
        %v4018 = vunpack.c.l.bf16 %v2610
        %v4019 = vunpack.c.l.bf16 %v2611
        %v4020 = vunpack.c.l.bf16 %v2612
        %v4021 = vunpack.c.l.bf16 %v2613
        %v4022 = vunpack.c.l.bf16 %v2614
        %v4023 = vunpack.c.l.bf16 %v2615
        %v4024 = vunpack.c.l.bf16 %v2616
        %v4025 = vunpack.c.l.bf16 %v2617
        %v4026 = vunpack.c.l.bf16 %v2618
        %v4027 = vunpack.c.l.bf16 %v2619
        %v4028 = vunpack.c.l.bf16 %v2620
        %v4029 = vunpack.c.l.bf16 %v2621
        %v4030 = vunpack.c.l.bf16 %v2622
        %v4031 = vunpack.c.l.bf16 %v2623
        %v4032 = vunpack.c.l.bf16 %v2624
        %v4033 = vunpack.c.l.bf16 %v2625
        %v4034 = vunpack.c.l.bf16 %v2626
        %v4035 = vunpack.c.l.bf16 %v2627
        %v4036 = vunpack.c.l.bf16 %v2628
        %v4037 = vunpack.c.l.bf16 %v2629
        %v4038 = vunpack.c.l.bf16 %v2630
        %v4039 = vunpack.c.l.bf16 %v2631
        %v4040 = vunpack.c.l.bf16 %v2632
        %v4041 = vunpack.c.l.bf16 %v2633
        %v4042 = vunpack.c.l.bf16 %v2634
        %v4043 = vunpack.c.l.bf16 %v2635
        %v4044 = vunpack.c.l.bf16 %v2636
        %v4045 = vunpack.c.l.bf16 %v2637
        %v4046 = vunpack.c.l.bf16 %v2638
        %v4047 = vunpack.c.l.bf16 %v2639
        %v4048 = vunpack.c.l.bf16 %v2640
        %v4049 = vunpack.c.l.bf16 %v2641
        %v4050 = vunpack.c.l.bf16 %v2642
        %v4051 = vunpack.c.l.bf16 %v2643
        %v4052 = vunpack.c.l.bf16 %v2644
        %v4053 = vunpack.c.l.bf16 %v2645
        %v4054 = vunpack.c.l.bf16 %v2646
        %v4055 = vunpack.c.l.bf16 %v2647
        %v4056 = vunpack.c.l.bf16 %v2648
        %v4057 = vunpack.c.l.bf16 %v2649
        %v4058 = vunpack.c.l.bf16 %v2650
        %v4059 = vunpack.c.l.bf16 %v2651
        %v4060 = vunpack.c.l.bf16 %v2652
        %v4061 = vunpack.c.l.bf16 %v2653
        %v4062 = vunpack.c.l.bf16 %v2654
        %v4063 = vunpack.c.l.bf16 %v2655
        %v4064 = vunpack.c.l.bf16 %v2656
        %v4065 = vunpack.c.l.bf16 %v2657
        %v4066 = vunpack.c.l.bf16 %v2658
        %v4067 = vunpack.c.l.bf16 %v2659
        %v4068 = vunpack.c.l.bf16 %v2660
        %v4069 = vunpack.c.l.bf16 %v2661
        %v4070 = vunpack.c.l.bf16 %v2662
        %v4071 = vunpack.c.l.bf16 %v2663
        %v4072 = vunpack.c.l.bf16 %v2664
        %v4073 = vunpack.c.l.bf16 %v2665
        %v4074 = vunpack.c.l.bf16 %v2666
        %v4075 = vunpack.c.l.bf16 %v2667
        %v4076 = vunpack.c.l.bf16 %v2668
        %v4077 = vunpack.c.l.bf16 %v2669
        %v4078 = vunpack.c.l.bf16 %v2670
        %v4079 = vunpack.c.l.bf16 %v2671
        %v4080 = vunpack.c.l.bf16 %v2672
        %v4081 = vunpack.c.l.bf16 %v2673
        %v4082 = vunpack.c.l.bf16 %v2674
        %v4083 = vunpack.c.l.bf16 %v2675
        %v4084 = vunpack.c.l.bf16 %v2676
        %v4085 = vunpack.c.l.bf16 %v2677
        %v4086 = vunpack.c.l.bf16 %v2678
        %v4087 = vunpack.c.l.bf16 %v2679
        %v4088 = vunpack.c.l.bf16 %v2680
        %v4089 = vunpack.c.l.bf16 %v2681
        %v4090 = vunpack.c.l.bf16 %v2682
        %v4091 = vunpack.c.l.bf16 %v2683
        %v4092 = vunpack.c.l.bf16 %v2684
        %v4093 = vunpack.c.l.bf16 %v2685
        %v4094 = vunpack.c.l.bf16 %v2686
        %v4095 = vunpack.c.l.bf16 %v2687
        %v4096 = vunpack.c.l.bf16 %v2688
        %v4097 = vunpack.c.l.bf16 %v2689
        %v4098 = vunpack.c.l.bf16 %v2690
        %v4099 = vunpack.c.l.bf16 %v2691
        %v4100 = vunpack.c.l.bf16 %v2692
        %v4101 = vunpack.c.l.bf16 %v2693
        %v4102 = vunpack.c.l.bf16 %v2694
        %v4103 = vunpack.c.l.bf16 %v2695
        %v4104 = vunpack.c.l.bf16 %v2696
        %v4105 = vunpack.c.l.bf16 %v2697
        %v4106 = vunpack.c.l.bf16 %v2698
        %v4107 = vunpack.c.l.bf16 %v2699
        %v4108 = vunpack.c.l.bf16 %v2700
        %v4109 = vunpack.c.l.bf16 %v2701
        %v4110 = vunpack.c.l.bf16 %v2702
        %v4111 = vunpack.c.l.bf16 %v2703
        %v4112 = vunpack.c.l.bf16 %v2704
        %v4113 = vunpack.c.l.bf16 %v2705
        %v4114 = vunpack.c.l.bf16 %v2706
        %v4115 = vunpack.c.l.bf16 %v2707
        %v4116 = vunpack.c.l.bf16 %v2708
        %v4117 = vunpack.c.l.bf16 %v2709
        %v4118 = vunpack.c.l.bf16 %v2710
        %v4119 = vunpack.c.l.bf16 %v2711
        %v4120 = vunpack.c.l.bf16 %v2712
        %v4121 = vunpack.c.l.bf16 %v2713
        %v4122 = vunpack.c.l.bf16 %v2714
        %v4123 = vunpack.c.l.bf16 %v2715
        %v4124 = vunpack.c.l.bf16 %v2716
        %v4125 = vunpack.c.l.bf16 %v2717
        %v4126 = vunpack.c.l.bf16 %v2718
        %v4127 = vunpack.c.l.bf16 %v2719
        %v4128 = vunpack.c.l.bf16 %v2720
        %v4129 = vunpack.c.l.bf16 %v2721
        %v4130 = vunpack.c.l.bf16 %v2722
        %v4131 = vunpack.c.l.bf16 %v2723
        %v4132 = vunpack.c.l.bf16 %v2724
        %v4133 = vunpack.c.l.bf16 %v2725
        %v4134 = vunpack.c.l.bf16 %v2726
        %v4135 = vunpack.c.l.bf16 %v2727
        %v4136 = vunpack.c.l.bf16 %v2728
        %v4137 = vunpack.c.l.bf16 %v2729
        %v4138 = vunpack.c.l.bf16 %v2730
        %v4139 = vunpack.c.l.bf16 %v2731
        %v4140 = vunpack.c.l.bf16 %v2732
        %v4141 = vunpack.c.l.bf16 %v2733
        %v4142 = vunpack.c.l.bf16 %v2870
        %v4143 = vunpack.c.l.bf16 %v2879
        %v4144 = vunpack.c.l.bf16 %v2888
        %v4145 = vunpack.c.l.bf16 %v2897
        %v4146 = vunpack.c.l.bf16 %v2906
        %v4147 = vunpack.c.l.bf16 %v2915
        %v4148 = vunpack.c.l.bf16 %v2924
        %v4149 = vunpack.c.l.bf16 %v2933
        %v4150 = vunpack.c.l.bf16 %v2942
        %v4151 = vunpack.c.l.bf16 %v2951
        %v4152 = vunpack.c.l.bf16 %v2960
        %v4153 = vunpack.c.l.bf16 %v2969
        %v4154 = vunpack.c.l.bf16 %v2978
        %v4155 = vunpack.c.l.bf16 %v2987
        %v4156 = vunpack.c.l.bf16 %v2996
        %v4157 = vunpack.c.l.bf16 %v3005
        %v4158 = vunpack.c.l.bf16 %v3014
        %v4159 = vunpack.c.l.bf16 %v3023
        %v4160 = vunpack.c.l.bf16 %v3032
        %v4161 = vunpack.c.l.bf16 %v3041
        %v4162 = vunpack.c.l.bf16 %v3050
        %v4163 = vunpack.c.l.bf16 %v3059
        %v4164 = vunpack.c.l.bf16 %v3068
        %v4165 = vunpack.c.l.bf16 %v3077
        %v4166 = vunpack.c.l.bf16 %v3086
        %v4167 = vunpack.c.l.bf16 %v3095
        %v4168 = vunpack.c.l.bf16 %v3104
        %v4169 = vunpack.c.l.bf16 %v3113
        %v4170 = vunpack.c.l.bf16 %v3122
        %v4171 = vunpack.c.l.bf16 %v3131
        %v4172 = vunpack.c.l.bf16 %v3140
        %v4173 = vunpack.c.l.bf16 %v3149
        %v4174 = vunpack.c.l.bf16 %v3158
        %v4175 = vunpack.c.l.bf16 %v3167
        %v4176 = vunpack.c.l.bf16 %v3176
        %v4177 = vunpack.c.l.bf16 %v3185
        %v4178 = vunpack.c.l.bf16 %v3194
        %v4179 = vunpack.c.l.bf16 %v3203
        %v4180 = vunpack.c.l.bf16 %v3212
        %v4181 = vunpack.c.l.bf16 %v3221
        %v4182 = vunpack.c.l.bf16 %v3230
        %v4183 = vunpack.c.l.bf16 %v3239
        %v4184 = vunpack.c.l.bf16 %v3248
        %v4185 = vunpack.c.l.bf16 %v3257
        %v4186 = vunpack.c.l.bf16 %v3266
        %v4187 = vunpack.c.l.bf16 %v3275
        %v4188 = vunpack.c.l.bf16 %v3284
        %v4189 = vunpack.c.l.bf16 %v3293
        %v4190 = vunpack.c.l.bf16 %v3302
        %v4191 = vunpack.c.l.bf16 %v3311
        %v4192 = vunpack.c.l.bf16 %v3320
        %v4193 = vunpack.c.l.bf16 %v3329
        %v4194 = vunpack.c.l.bf16 %v3338
        %v4195 = vunpack.c.l.bf16 %v3347
        %v4196 = vunpack.c.l.bf16 %v3356
        %v4197 = vunpack.c.l.bf16 %v3365
        %v4198 = vunpack.c.l.bf16 %v3374
        %v4199 = vunpack.c.l.bf16 %v3383
        %v4200 = vunpack.c.l.bf16 %v3392
        %v4201 = vunpack.c.l.bf16 %v3401
        %v4202 = vunpack.c.l.bf16 %v3410
        %v4203 = vunpack.c.l.bf16 %v3419
        %v4204 = vunpack.c.l.bf16 %v3428
        %v4205 = vunpack.c.l.bf16 %v3437
        %v4206 = vunpack.c.l.bf16 %v3446
        %v4207 = vunpack.c.l.bf16 %v3455
        %v4208 = vunpack.c.l.bf16 %v3464
        %v4209 = vunpack.c.l.bf16 %v3473
        %v4210 = vunpack.c.l.bf16 %v3482
        %v4211 = vunpack.c.l.bf16 %v3491
        %v4212 = vunpack.c.l.bf16 %v3500
        %v4213 = vunpack.c.l.bf16 %v3509
        %v4214 = vunpack.c.l.bf16 %v3518
        %v4215 = vunpack.c.l.bf16 %v3527
        %v4216 = vunpack.c.l.bf16 %v3536
        %v4217 = vunpack.c.l.bf16 %v3545
        %v4218 = vunpack.c.l.bf16 %v3554
        %v4219 = vunpack.c.l.bf16 %v3563
        %v4220 = vunpack.c.l.bf16 %v3572
        %v4221 = vunpack.c.l.bf16 %v3581
        %v4222 = vunpack.c.l.bf16 %v3590
        %v4223 = vunpack.c.l.bf16 %v3599
        %v4224 = vunpack.c.l.bf16 %v3608
        %v4225 = vunpack.c.l.bf16 %v3617
        %v4226 = vunpack.c.l.bf16 %v3626
        %v4227 = vunpack.c.l.bf16 %v3635
        %v4228 = vunpack.c.l.bf16 %v3644
        %v4229 = vunpack.c.l.bf16 %v3653
        %v4230 = vunpack.c.l.bf16 %v3662
        %v4231 = vunpack.c.l.bf16 %v3671
        %v4232 = vunpack.c.l.bf16 %v3680
        %v4233 = vunpack.c.l.bf16 %v3689
        %v4234 = vunpack.c.l.bf16 %v3698
        %v4235 = vunpack.c.l.bf16 %v3707
        %v4236 = vunpack.c.l.bf16 %v3716
        %v4237 = vunpack.c.l.bf16 %v3725
        %v4238 = vunpack.c.l.bf16 %v3734
        %v4239 = vunpack.c.l.bf16 %v3743
        %v4240 = vunpack.c.l.bf16 %v3752
        %v4241 = vunpack.c.l.bf16 %v3761
        %v4242 = vunpack.c.l.bf16 %v3770
        %v4243 = vunpack.c.l.bf16 %v3779
        %v4244 = vunpack.c.l.bf16 %v3788
        %v4245 = vunpack.c.l.bf16 %v3797
        %v4246 = vunpack.c.l.bf16 %v3806
        %v4247 = vunpack.c.l.bf16 %v3815
        %v4248 = vunpack.c.l.bf16 %v3824
        %v4249 = vunpack.c.l.bf16 %v3833
        %v4250 = vunpack.c.l.bf16 %v3842
        %v4251 = vunpack.c.l.bf16 %v3851
        %v4252 = vunpack.c.l.bf16 %v3860
        %v4253 = vunpack.c.l.bf16 %v3869
        %v4254 = vunpack.c.l.bf16 %v3878
        %v4255 = vunpack.c.l.bf16 %v3887
        %v4256 = vunpack.c.l.bf16 %v3896
        %v4257 = vunpack.c.l.bf16 %v3905
        %v4258 = vunpack.c.l.bf16 %v3914
        %v4259 = vunpack.c.l.bf16 %v3923
        %v4260 = vunpack.c.l.bf16 %v3932
        %v4261 = vunpack.c.l.bf16 %v3941
        %v4262 = vunpack.c.l.bf16 %v3950
        %v4263 = vunpack.c.l.bf16 %v3959
        %v4264 = vunpack.c.l.bf16 %v3968
        %v4265 = vunpack.c.l.bf16 %v3977
        %v4266 = vunpack.c.l.bf16 %v3986
        %v4267 = vunpack.c.l.bf16 %v3995
        %v4268 = vunpack.c.l.bf16 %v4004
        %v4269 = vunpack.c.l.bf16 %v4013
        %v4270 = vadd.f32 %v4014, %v4142
        %v4271 = vadd.f32 %v4015, %v4143
        %v4272 = vadd.f32 %v4016, %v4144
        %v4273 = vadd.f32 %v4017, %v4145
        %v4274 = vadd.f32 %v4018, %v4146
        %v4275 = vadd.f32 %v4019, %v4147
        %v4276 = vadd.f32 %v4020, %v4148
        %v4277 = vadd.f32 %v4021, %v4149
        %v4278 = vadd.f32 %v4022, %v4150
        %v4279 = vadd.f32 %v4023, %v4151
        %v4280 = vadd.f32 %v4024, %v4152
        %v4281 = vadd.f32 %v4025, %v4153
        %v4282 = vadd.f32 %v4026, %v4154
        %v4283 = vadd.f32 %v4027, %v4155
        %v4284 = vadd.f32 %v4028, %v4156
        %v4285 = vadd.f32 %v4029, %v4157
        %v4286 = vadd.f32 %v4030, %v4158
        %v4287 = vadd.f32 %v4031, %v4159
        %v4288 = vadd.f32 %v4032, %v4160
        %v4289 = vadd.f32 %v4033, %v4161
        %v4290 = vadd.f32 %v4034, %v4162
        %v4291 = vadd.f32 %v4035, %v4163
        %v4292 = vadd.f32 %v4036, %v4164
        %v4293 = vadd.f32 %v4037, %v4165
        %v4294 = vadd.f32 %v4038, %v4166
        %v4295 = vadd.f32 %v4039, %v4167
        %v4296 = vadd.f32 %v4040, %v4168
        %v4297 = vadd.f32 %v4041, %v4169
        %v4298 = vadd.f32 %v4042, %v4170
        %v4299 = vadd.f32 %v4043, %v4171
        %v4300 = vadd.f32 %v4044, %v4172
        %v4301 = vadd.f32 %v4045, %v4173
        %v4302 = vadd.f32 %v4046, %v4174
        %v4303 = vadd.f32 %v4047, %v4175
        %v4304 = vadd.f32 %v4048, %v4176
        %v4305 = vadd.f32 %v4049, %v4177
        %v4306 = vadd.f32 %v4050, %v4178
        %v4307 = vadd.f32 %v4051, %v4179
        %v4308 = vadd.f32 %v4052, %v4180
        %v4309 = vadd.f32 %v4053, %v4181
        %v4310 = vadd.f32 %v4054, %v4182
        %v4311 = vadd.f32 %v4055, %v4183
        %v4312 = vadd.f32 %v4056, %v4184
        %v4313 = vadd.f32 %v4057, %v4185
        %v4314 = vadd.f32 %v4058, %v4186
        %v4315 = vadd.f32 %v4059, %v4187
        %v4316 = vadd.f32 %v4060, %v4188
        %v4317 = vadd.f32 %v4061, %v4189
        %v4318 = vadd.f32 %v4062, %v4190
        %v4319 = vadd.f32 %v4063, %v4191
        %v4320 = vadd.f32 %v4064, %v4192
        %v4321 = vadd.f32 %v4065, %v4193
        %v4322 = vadd.f32 %v4066, %v4194
        %v4323 = vadd.f32 %v4067, %v4195
        %v4324 = vadd.f32 %v4068, %v4196
        %v4325 = vadd.f32 %v4069, %v4197
        %v4326 = vadd.f32 %v4070, %v4198
        %v4327 = vadd.f32 %v4071, %v4199
        %v4328 = vadd.f32 %v4072, %v4200
        %v4329 = vadd.f32 %v4073, %v4201
        %v4330 = vadd.f32 %v4074, %v4202
        %v4331 = vadd.f32 %v4075, %v4203
        %v4332 = vadd.f32 %v4076, %v4204
        %v4333 = vadd.f32 %v4077, %v4205
        %v4334 = vadd.f32 %v4078, %v4206
        %v4335 = vadd.f32 %v4079, %v4207
        %v4336 = vadd.f32 %v4080, %v4208
        %v4337 = vadd.f32 %v4081, %v4209
        %v4338 = vadd.f32 %v4082, %v4210
        %v4339 = vadd.f32 %v4083, %v4211
        %v4340 = vadd.f32 %v4084, %v4212
        %v4341 = vadd.f32 %v4085, %v4213
        %v4342 = vadd.f32 %v4086, %v4214
        %v4343 = vadd.f32 %v4087, %v4215
        %v4344 = vadd.f32 %v4088, %v4216
        %v4345 = vadd.f32 %v4089, %v4217
        %v4346 = vadd.f32 %v4090, %v4218
        %v4347 = vadd.f32 %v4091, %v4219
        %v4348 = vadd.f32 %v4092, %v4220
        %v4349 = vadd.f32 %v4093, %v4221
        %v4350 = vadd.f32 %v4094, %v4222
        %v4351 = vadd.f32 %v4095, %v4223
        %v4352 = vadd.f32 %v4096, %v4224
        %v4353 = vadd.f32 %v4097, %v4225
        %v4354 = vadd.f32 %v4098, %v4226
        %v4355 = vadd.f32 %v4099, %v4227
        %v4356 = vadd.f32 %v4100, %v4228
        %v4357 = vadd.f32 %v4101, %v4229
        %v4358 = vadd.f32 %v4102, %v4230
        %v4359 = vadd.f32 %v4103, %v4231
        %v4360 = vadd.f32 %v4104, %v4232
        %v4361 = vadd.f32 %v4105, %v4233
        %v4362 = vadd.f32 %v4106, %v4234
        %v4363 = vadd.f32 %v4107, %v4235
        %v4364 = vadd.f32 %v4108, %v4236
        %v4365 = vadd.f32 %v4109, %v4237
        %v4366 = vadd.f32 %v4110, %v4238
        %v4367 = vadd.f32 %v4111, %v4239
        %v4368 = vadd.f32 %v4112, %v4240
        %v4369 = vadd.f32 %v4113, %v4241
        %v4370 = vadd.f32 %v4114, %v4242
        %v4371 = vadd.f32 %v4115, %v4243
        %v4372 = vadd.f32 %v4116, %v4244
        %v4373 = vadd.f32 %v4117, %v4245
        %v4374 = vadd.f32 %v4118, %v4246
        %v4375 = vadd.f32 %v4119, %v4247
        %v4376 = vadd.f32 %v4120, %v4248
        %v4377 = vadd.f32 %v4121, %v4249
        %v4378 = vadd.f32 %v4122, %v4250
        %v4379 = vadd.f32 %v4123, %v4251
        %v4380 = vadd.f32 %v4124, %v4252
        %v4381 = vadd.f32 %v4125, %v4253
        %v4382 = vadd.f32 %v4126, %v4254
        %v4383 = vadd.f32 %v4127, %v4255
        %v4384 = vadd.f32 %v4128, %v4256
        %v4385 = vadd.f32 %v4129, %v4257
        %v4386 = vadd.f32 %v4130, %v4258
        %v4387 = vadd.f32 %v4131, %v4259
        %v4388 = vadd.f32 %v4132, %v4260
        %v4389 = vadd.f32 %v4133, %v4261
        %v4390 = vadd.f32 %v4134, %v4262
        %v4391 = vadd.f32 %v4135, %v4263
        %v4392 = vadd.f32 %v4136, %v4264
        %v4393 = vadd.f32 %v4137, %v4265
        %v4394 = vadd.f32 %v4138, %v4266
        %v4395 = vadd.f32 %v4139, %v4267
        %v4396 = vadd.f32 %v4140, %v4268
        %v4397 = vadd.f32 %v4141, %v4269
        %v4398 = vpack.c.bf16 %v4270, %v4270
        %v4399 = vpack.c.bf16 %v4271, %v4271
        %v4400 = vpack.c.bf16 %v4272, %v4272
        %v4401 = vpack.c.bf16 %v4273, %v4273
        %v4402 = vpack.c.bf16 %v4274, %v4274
        %v4403 = vpack.c.bf16 %v4275, %v4275
        %v4404 = vpack.c.bf16 %v4276, %v4276
        %v4405 = vpack.c.bf16 %v4277, %v4277
        %v4406 = vpack.c.bf16 %v4278, %v4278
        %v4407 = vpack.c.bf16 %v4279, %v4279
        %v4408 = vpack.c.bf16 %v4280, %v4280
        %v4409 = vpack.c.bf16 %v4281, %v4281
        %v4410 = vpack.c.bf16 %v4282, %v4282
        %v4411 = vpack.c.bf16 %v4283, %v4283
        %v4412 = vpack.c.bf16 %v4284, %v4284
        %v4413 = vpack.c.bf16 %v4285, %v4285
        %v4414 = vpack.c.bf16 %v4286, %v4286
        %v4415 = vpack.c.bf16 %v4287, %v4287
        %v4416 = vpack.c.bf16 %v4288, %v4288
        %v4417 = vpack.c.bf16 %v4289, %v4289
        %v4418 = vpack.c.bf16 %v4290, %v4290
        %v4419 = vpack.c.bf16 %v4291, %v4291
        %v4420 = vpack.c.bf16 %v4292, %v4292
        %v4421 = vpack.c.bf16 %v4293, %v4293
        %v4422 = vpack.c.bf16 %v4294, %v4294
        %v4423 = vpack.c.bf16 %v4295, %v4295
        %v4424 = vpack.c.bf16 %v4296, %v4296
        %v4425 = vpack.c.bf16 %v4297, %v4297
        %v4426 = vpack.c.bf16 %v4298, %v4298
        %v4427 = vpack.c.bf16 %v4299, %v4299
        %v4428 = vpack.c.bf16 %v4300, %v4300
        %v4429 = vpack.c.bf16 %v4301, %v4301
        %v4430 = vpack.c.bf16 %v4302, %v4302
        %v4431 = vpack.c.bf16 %v4303, %v4303
        %v4432 = vpack.c.bf16 %v4304, %v4304
        %v4433 = vpack.c.bf16 %v4305, %v4305
        %v4434 = vpack.c.bf16 %v4306, %v4306
        %v4435 = vpack.c.bf16 %v4307, %v4307
        %v4436 = vpack.c.bf16 %v4308, %v4308
        %v4437 = vpack.c.bf16 %v4309, %v4309
        %v4438 = vpack.c.bf16 %v4310, %v4310
        %v4439 = vpack.c.bf16 %v4311, %v4311
        %v4440 = vpack.c.bf16 %v4312, %v4312
        %v4441 = vpack.c.bf16 %v4313, %v4313
        %v4442 = vpack.c.bf16 %v4314, %v4314
        %v4443 = vpack.c.bf16 %v4315, %v4315
        %v4444 = vpack.c.bf16 %v4316, %v4316
        %v4445 = vpack.c.bf16 %v4317, %v4317
        %v4446 = vpack.c.bf16 %v4318, %v4318
        %v4447 = vpack.c.bf16 %v4319, %v4319
        %v4448 = vpack.c.bf16 %v4320, %v4320
        %v4449 = vpack.c.bf16 %v4321, %v4321
        %v4450 = vpack.c.bf16 %v4322, %v4322
        %v4451 = vpack.c.bf16 %v4323, %v4323
        %v4452 = vpack.c.bf16 %v4324, %v4324
        %v4453 = vpack.c.bf16 %v4325, %v4325
        %v4454 = vpack.c.bf16 %v4326, %v4326
        %v4455 = vpack.c.bf16 %v4327, %v4327
        %v4456 = vpack.c.bf16 %v4328, %v4328
        %v4457 = vpack.c.bf16 %v4329, %v4329
        %v4458 = vpack.c.bf16 %v4330, %v4330
        %v4459 = vpack.c.bf16 %v4331, %v4331
        %v4460 = vpack.c.bf16 %v4332, %v4332
        %v4461 = vpack.c.bf16 %v4333, %v4333
        %v4462 = vpack.c.bf16 %v4334, %v4334
        %v4463 = vpack.c.bf16 %v4335, %v4335
        %v4464 = vpack.c.bf16 %v4336, %v4336
        %v4465 = vpack.c.bf16 %v4337, %v4337
        %v4466 = vpack.c.bf16 %v4338, %v4338
        %v4467 = vpack.c.bf16 %v4339, %v4339
        %v4468 = vpack.c.bf16 %v4340, %v4340
        %v4469 = vpack.c.bf16 %v4341, %v4341
        %v4470 = vpack.c.bf16 %v4342, %v4342
        %v4471 = vpack.c.bf16 %v4343, %v4343
        %v4472 = vpack.c.bf16 %v4344, %v4344
        %v4473 = vpack.c.bf16 %v4345, %v4345
        %v4474 = vpack.c.bf16 %v4346, %v4346
        %v4475 = vpack.c.bf16 %v4347, %v4347
        %v4476 = vpack.c.bf16 %v4348, %v4348
        %v4477 = vpack.c.bf16 %v4349, %v4349
        %v4478 = vpack.c.bf16 %v4350, %v4350
        %v4479 = vpack.c.bf16 %v4351, %v4351
        %v4480 = vpack.c.bf16 %v4352, %v4352
        %v4481 = vpack.c.bf16 %v4353, %v4353
        %v4482 = vpack.c.bf16 %v4354, %v4354
        %v4483 = vpack.c.bf16 %v4355, %v4355
        %v4484 = vpack.c.bf16 %v4356, %v4356
        %v4485 = vpack.c.bf16 %v4357, %v4357
        %v4486 = vpack.c.bf16 %v4358, %v4358
        %v4487 = vpack.c.bf16 %v4359, %v4359
        %v4488 = vpack.c.bf16 %v4360, %v4360
        %v4489 = vpack.c.bf16 %v4361, %v4361
        %v4490 = vpack.c.bf16 %v4362, %v4362
        %v4491 = vpack.c.bf16 %v4363, %v4363
        %v4492 = vpack.c.bf16 %v4364, %v4364
        %v4493 = vpack.c.bf16 %v4365, %v4365
        %v4494 = vpack.c.bf16 %v4366, %v4366
        %v4495 = vpack.c.bf16 %v4367, %v4367
        %v4496 = vpack.c.bf16 %v4368, %v4368
        %v4497 = vpack.c.bf16 %v4369, %v4369
        %v4498 = vpack.c.bf16 %v4370, %v4370
        %v4499 = vpack.c.bf16 %v4371, %v4371
        %v4500 = vpack.c.bf16 %v4372, %v4372
        %v4501 = vpack.c.bf16 %v4373, %v4373
        %v4502 = vpack.c.bf16 %v4374, %v4374
        %v4503 = vpack.c.bf16 %v4375, %v4375
        %v4504 = vpack.c.bf16 %v4376, %v4376
        %v4505 = vpack.c.bf16 %v4377, %v4377
        %v4506 = vpack.c.bf16 %v4378, %v4378
        %v4507 = vpack.c.bf16 %v4379, %v4379
        %v4508 = vpack.c.bf16 %v4380, %v4380
        %v4509 = vpack.c.bf16 %v4381, %v4381
        %v4510 = vpack.c.bf16 %v4382, %v4382
        %v4511 = vpack.c.bf16 %v4383, %v4383
        %v4512 = vpack.c.bf16 %v4384, %v4384
        %v4513 = vpack.c.bf16 %v4385, %v4385
        %v4514 = vpack.c.bf16 %v4386, %v4386
        %v4515 = vpack.c.bf16 %v4387, %v4387
        %v4516 = vpack.c.bf16 %v4388, %v4388
        %v4517 = vpack.c.bf16 %v4389, %v4389
        %v4518 = vpack.c.bf16 %v4390, %v4390
        %v4519 = vpack.c.bf16 %v4391, %v4391
        %v4520 = vpack.c.bf16 %v4392, %v4392
        %v4521 = vpack.c.bf16 %v4393, %v4393
        %v4522 = vpack.c.bf16 %v4394, %v4394
        %v4523 = vpack.c.bf16 %v4395, %v4395
        %v4524 = vpack.c.bf16 %v4396, %v4396
        %v4525 = vpack.c.bf16 %v4397, %v4397
        %v4526 = vunpack.c.l.bf16 %v4398
        %v4527 = vunpack.c.l.bf16 %v4399
        %v4528 = vunpack.c.l.bf16 %v4400
        %v4529 = vunpack.c.l.bf16 %v4401
        %v4530 = vunpack.c.l.bf16 %v4402
        %v4531 = vunpack.c.l.bf16 %v4403
        %v4532 = vunpack.c.l.bf16 %v4404
        %v4533 = vunpack.c.l.bf16 %v4405
        %v4534 = vunpack.c.l.bf16 %v4406
        %v4535 = vunpack.c.l.bf16 %v4407
        %v4536 = vunpack.c.l.bf16 %v4408
        %v4537 = vunpack.c.l.bf16 %v4409
        %v4538 = vunpack.c.l.bf16 %v4410
        %v4539 = vunpack.c.l.bf16 %v4411
        %v4540 = vunpack.c.l.bf16 %v4412
        %v4541 = vunpack.c.l.bf16 %v4413
        %v4542 = vunpack.c.l.bf16 %v4414
        %v4543 = vunpack.c.l.bf16 %v4415
        %v4544 = vunpack.c.l.bf16 %v4416
        %v4545 = vunpack.c.l.bf16 %v4417
        %v4546 = vunpack.c.l.bf16 %v4418
        %v4547 = vunpack.c.l.bf16 %v4419
        %v4548 = vunpack.c.l.bf16 %v4420
        %v4549 = vunpack.c.l.bf16 %v4421
        %v4550 = vunpack.c.l.bf16 %v4422
        %v4551 = vunpack.c.l.bf16 %v4423
        %v4552 = vunpack.c.l.bf16 %v4424
        %v4553 = vunpack.c.l.bf16 %v4425
        %v4554 = vunpack.c.l.bf16 %v4426
        %v4555 = vunpack.c.l.bf16 %v4427
        %v4556 = vunpack.c.l.bf16 %v4428
        %v4557 = vunpack.c.l.bf16 %v4429
        %v4558 = vunpack.c.l.bf16 %v4430
        %v4559 = vunpack.c.l.bf16 %v4431
        %v4560 = vunpack.c.l.bf16 %v4432
        %v4561 = vunpack.c.l.bf16 %v4433
        %v4562 = vunpack.c.l.bf16 %v4434
        %v4563 = vunpack.c.l.bf16 %v4435
        %v4564 = vunpack.c.l.bf16 %v4436
        %v4565 = vunpack.c.l.bf16 %v4437
        %v4566 = vunpack.c.l.bf16 %v4438
        %v4567 = vunpack.c.l.bf16 %v4439
        %v4568 = vunpack.c.l.bf16 %v4440
        %v4569 = vunpack.c.l.bf16 %v4441
        %v4570 = vunpack.c.l.bf16 %v4442
        %v4571 = vunpack.c.l.bf16 %v4443
        %v4572 = vunpack.c.l.bf16 %v4444
        %v4573 = vunpack.c.l.bf16 %v4445
        %v4574 = vunpack.c.l.bf16 %v4446
        %v4575 = vunpack.c.l.bf16 %v4447
        %v4576 = vunpack.c.l.bf16 %v4448
        %v4577 = vunpack.c.l.bf16 %v4449
        %v4578 = vunpack.c.l.bf16 %v4450
        %v4579 = vunpack.c.l.bf16 %v4451
        %v4580 = vunpack.c.l.bf16 %v4452
        %v4581 = vunpack.c.l.bf16 %v4453
        %v4582 = vunpack.c.l.bf16 %v4454
        %v4583 = vunpack.c.l.bf16 %v4455
        %v4584 = vunpack.c.l.bf16 %v4456
        %v4585 = vunpack.c.l.bf16 %v4457
        %v4586 = vunpack.c.l.bf16 %v4458
        %v4587 = vunpack.c.l.bf16 %v4459
        %v4588 = vunpack.c.l.bf16 %v4460
        %v4589 = vunpack.c.l.bf16 %v4461
        %v4590 = vunpack.c.l.bf16 %v4462
        %v4591 = vunpack.c.l.bf16 %v4463
        %v4592 = vunpack.c.l.bf16 %v4464
        %v4593 = vunpack.c.l.bf16 %v4465
        %v4594 = vunpack.c.l.bf16 %v4466
        %v4595 = vunpack.c.l.bf16 %v4467
        %v4596 = vunpack.c.l.bf16 %v4468
        %v4597 = vunpack.c.l.bf16 %v4469
        %v4598 = vunpack.c.l.bf16 %v4470
        %v4599 = vunpack.c.l.bf16 %v4471
        %v4600 = vunpack.c.l.bf16 %v4472
        %v4601 = vunpack.c.l.bf16 %v4473
        %v4602 = vunpack.c.l.bf16 %v4474
        %v4603 = vunpack.c.l.bf16 %v4475
        %v4604 = vunpack.c.l.bf16 %v4476
        %v4605 = vunpack.c.l.bf16 %v4477
        %v4606 = vunpack.c.l.bf16 %v4478
        %v4607 = vunpack.c.l.bf16 %v4479
        %v4608 = vunpack.c.l.bf16 %v4480
        %v4609 = vunpack.c.l.bf16 %v4481
        %v4610 = vunpack.c.l.bf16 %v4482
        %v4611 = vunpack.c.l.bf16 %v4483
        %v4612 = vunpack.c.l.bf16 %v4484
        %v4613 = vunpack.c.l.bf16 %v4485
        %v4614 = vunpack.c.l.bf16 %v4486
        %v4615 = vunpack.c.l.bf16 %v4487
        %v4616 = vunpack.c.l.bf16 %v4488
        %v4617 = vunpack.c.l.bf16 %v4489
        %v4618 = vunpack.c.l.bf16 %v4490
        %v4619 = vunpack.c.l.bf16 %v4491
        %v4620 = vunpack.c.l.bf16 %v4492
        %v4621 = vunpack.c.l.bf16 %v4493
        %v4622 = vunpack.c.l.bf16 %v4494
        %v4623 = vunpack.c.l.bf16 %v4495
        %v4624 = vunpack.c.l.bf16 %v4496
        %v4625 = vunpack.c.l.bf16 %v4497
        %v4626 = vunpack.c.l.bf16 %v4498
        %v4627 = vunpack.c.l.bf16 %v4499
        %v4628 = vunpack.c.l.bf16 %v4500
        %v4629 = vunpack.c.l.bf16 %v4501
        %v4630 = vunpack.c.l.bf16 %v4502
        %v4631 = vunpack.c.l.bf16 %v4503
        %v4632 = vunpack.c.l.bf16 %v4504
        %v4633 = vunpack.c.l.bf16 %v4505
        %v4634 = vunpack.c.l.bf16 %v4506
        %v4635 = vunpack.c.l.bf16 %v4507
        %v4636 = vunpack.c.l.bf16 %v4508
        %v4637 = vunpack.c.l.bf16 %v4509
        %v4638 = vunpack.c.l.bf16 %v4510
        %v4639 = vunpack.c.l.bf16 %v4511
        %v4640 = vunpack.c.l.bf16 %v4512
        %v4641 = vunpack.c.l.bf16 %v4513
        %v4642 = vunpack.c.l.bf16 %v4514
        %v4643 = vunpack.c.l.bf16 %v4515
        %v4644 = vunpack.c.l.bf16 %v4516
        %v4645 = vunpack.c.l.bf16 %v4517
        %v4646 = vunpack.c.l.bf16 %v4518
        %v4647 = vunpack.c.l.bf16 %v4519
        %v4648 = vunpack.c.l.bf16 %v4520
        %v4649 = vunpack.c.l.bf16 %v4521
        %v4650 = vunpack.c.l.bf16 %v4522
        %v4651 = vunpack.c.l.bf16 %v4523
        %v4652 = vunpack.c.l.bf16 %v4524
        %v4653 = vunpack.c.l.bf16 %v4525
        %v4654 = vmax.f32 %v4526, 0.0
        %v4655 = vmax.f32 %v4527, 0.0
        %v4656 = vmax.f32 %v4528, 0.0
        %v4657 = vmax.f32 %v4529, 0.0
        %v4658 = vmax.f32 %v4530, 0.0
        %v4659 = vmax.f32 %v4531, 0.0
        %v4660 = vmax.f32 %v4532, 0.0
        %v4661 = vmax.f32 %v4533, 0.0
        %v4662 = vmax.f32 %v4534, 0.0
        %v4663 = vmax.f32 %v4535, 0.0
        %v4664 = vmax.f32 %v4536, 0.0
        %v4665 = vmax.f32 %v4537, 0.0
        %v4666 = vmax.f32 %v4538, 0.0
        %v4667 = vmax.f32 %v4539, 0.0
        %v4668 = vmax.f32 %v4540, 0.0
        %v4669 = vmax.f32 %v4541, 0.0
        %v4670 = vmax.f32 %v4542, 0.0
        %v4671 = vmax.f32 %v4543, 0.0
        %v4672 = vmax.f32 %v4544, 0.0
        %v4673 = vmax.f32 %v4545, 0.0
        %v4674 = vmax.f32 %v4546, 0.0
        %v4675 = vmax.f32 %v4547, 0.0
        %v4676 = vmax.f32 %v4548, 0.0
        %v4677 = vmax.f32 %v4549, 0.0
        %v4678 = vmax.f32 %v4550, 0.0
        %v4679 = vmax.f32 %v4551, 0.0
        %v4680 = vmax.f32 %v4552, 0.0
        %v4681 = vmax.f32 %v4553, 0.0
        %v4682 = vmax.f32 %v4554, 0.0
        %v4683 = vmax.f32 %v4555, 0.0
        %v4684 = vmax.f32 %v4556, 0.0
        %v4685 = vmax.f32 %v4557, 0.0
        %v4686 = vmax.f32 %v4558, 0.0
        %v4687 = vmax.f32 %v4559, 0.0
        %v4688 = vmax.f32 %v4560, 0.0
        %v4689 = vmax.f32 %v4561, 0.0
        %v4690 = vmax.f32 %v4562, 0.0
        %v4691 = vmax.f32 %v4563, 0.0
        %v4692 = vmax.f32 %v4564, 0.0
        %v4693 = vmax.f32 %v4565, 0.0
        %v4694 = vmax.f32 %v4566, 0.0
        %v4695 = vmax.f32 %v4567, 0.0
        %v4696 = vmax.f32 %v4568, 0.0
        %v4697 = vmax.f32 %v4569, 0.0
        %v4698 = vmax.f32 %v4570, 0.0
        %v4699 = vmax.f32 %v4571, 0.0
        %v4700 = vmax.f32 %v4572, 0.0
        %v4701 = vmax.f32 %v4573, 0.0
        %v4702 = vmax.f32 %v4574, 0.0
        %v4703 = vmax.f32 %v4575, 0.0
        %v4704 = vmax.f32 %v4576, 0.0
        %v4705 = vmax.f32 %v4577, 0.0
        %v4706 = vmax.f32 %v4578, 0.0
        %v4707 = vmax.f32 %v4579, 0.0
        %v4708 = vmax.f32 %v4580, 0.0
        %v4709 = vmax.f32 %v4581, 0.0
        %v4710 = vmax.f32 %v4582, 0.0
        %v4711 = vmax.f32 %v4583, 0.0
        %v4712 = vmax.f32 %v4584, 0.0
        %v4713 = vmax.f32 %v4585, 0.0
        %v4714 = vmax.f32 %v4586, 0.0
        %v4715 = vmax.f32 %v4587, 0.0
        %v4716 = vmax.f32 %v4588, 0.0
        %v4717 = vmax.f32 %v4589, 0.0
        %v4718 = vmax.f32 %v4590, 0.0
        %v4719 = vmax.f32 %v4591, 0.0
        %v4720 = vmax.f32 %v4592, 0.0
        %v4721 = vmax.f32 %v4593, 0.0
        %v4722 = vmax.f32 %v4594, 0.0
        %v4723 = vmax.f32 %v4595, 0.0
        %v4724 = vmax.f32 %v4596, 0.0
        %v4725 = vmax.f32 %v4597, 0.0
        %v4726 = vmax.f32 %v4598, 0.0
        %v4727 = vmax.f32 %v4599, 0.0
        %v4728 = vmax.f32 %v4600, 0.0
        %v4729 = vmax.f32 %v4601, 0.0
        %v4730 = vmax.f32 %v4602, 0.0
        %v4731 = vmax.f32 %v4603, 0.0
        %v4732 = vmax.f32 %v4604, 0.0
        %v4733 = vmax.f32 %v4605, 0.0
        %v4734 = vmax.f32 %v4606, 0.0
        %v4735 = vmax.f32 %v4607, 0.0
        %v4736 = vmax.f32 %v4608, 0.0
        %v4737 = vmax.f32 %v4609, 0.0
        %v4738 = vmax.f32 %v4610, 0.0
        %v4739 = vmax.f32 %v4611, 0.0
        %v4740 = vmax.f32 %v4612, 0.0
        %v4741 = vmax.f32 %v4613, 0.0
        %v4742 = vmax.f32 %v4614, 0.0
        %v4743 = vmax.f32 %v4615, 0.0
        %v4744 = vmax.f32 %v4616, 0.0
        %v4745 = vmax.f32 %v4617, 0.0
        %v4746 = vmax.f32 %v4618, 0.0
        %v4747 = vmax.f32 %v4619, 0.0
        %v4748 = vmax.f32 %v4620, 0.0
        %v4749 = vmax.f32 %v4621, 0.0
        %v4750 = vmax.f32 %v4622, 0.0
        %v4751 = vmax.f32 %v4623, 0.0
        %v4752 = vmax.f32 %v4624, 0.0
        %v4753 = vmax.f32 %v4625, 0.0
        %v4754 = vmax.f32 %v4626, 0.0
        %v4755 = vmax.f32 %v4627, 0.0
        %v4756 = vmax.f32 %v4628, 0.0
        %v4757 = vmax.f32 %v4629, 0.0
        %v4758 = vmax.f32 %v4630, 0.0
        %v4759 = vmax.f32 %v4631, 0.0
        %v4760 = vmax.f32 %v4632, 0.0
        %v4761 = vmax.f32 %v4633, 0.0
        %v4762 = vmax.f32 %v4634, 0.0
        %v4763 = vmax.f32 %v4635, 0.0
        %v4764 = vmax.f32 %v4636, 0.0
        %v4765 = vmax.f32 %v4637, 0.0
        %v4766 = vmax.f32 %v4638, 0.0
        %v4767 = vmax.f32 %v4639, 0.0
        %v4768 = vmax.f32 %v4640, 0.0
        %v4769 = vmax.f32 %v4641, 0.0
        %v4770 = vmax.f32 %v4642, 0.0
        %v4771 = vmax.f32 %v4643, 0.0
        %v4772 = vmax.f32 %v4644, 0.0
        %v4773 = vmax.f32 %v4645, 0.0
        %v4774 = vmax.f32 %v4646, 0.0
        %v4775 = vmax.f32 %v4647, 0.0
        %v4776 = vmax.f32 %v4648, 0.0
        %v4777 = vmax.f32 %v4649, 0.0
        %v4778 = vmax.f32 %v4650, 0.0
        %v4779 = vmax.f32 %v4651, 0.0
        %v4780 = vmax.f32 %v4652, 0.0
        %v4781 = vmax.f32 %v4653, 0.0
        %v4782 = vpack.c.bf16 %v4655, %v4654
        %v4783 = vpack.c.bf16 %v4657, %v4656
        %v4784 = vpack.c.bf16 %v4659, %v4658
        %v4785 = vpack.c.bf16 %v4661, %v4660
        %v4786 = vpack.c.bf16 %v4663, %v4662
        %v4787 = vpack.c.bf16 %v4665, %v4664
        %v4788 = vpack.c.bf16 %v4667, %v4666
        %v4789 = vpack.c.bf16 %v4669, %v4668
        %v4790 = vpack.c.bf16 %v4671, %v4670
        %v4791 = vpack.c.bf16 %v4673, %v4672
        %v4792 = vpack.c.bf16 %v4675, %v4674
        %v4793 = vpack.c.bf16 %v4677, %v4676
        %v4794 = vpack.c.bf16 %v4679, %v4678
        %v4795 = vpack.c.bf16 %v4681, %v4680
        %v4796 = vpack.c.bf16 %v4683, %v4682
        %v4797 = vpack.c.bf16 %v4685, %v4684
        %v4798 = vpack.c.bf16 %v4687, %v4686
        %v4799 = vpack.c.bf16 %v4689, %v4688
        %v4800 = vpack.c.bf16 %v4691, %v4690
        %v4801 = vpack.c.bf16 %v4693, %v4692
        %v4802 = vpack.c.bf16 %v4695, %v4694
        %v4803 = vpack.c.bf16 %v4697, %v4696
        %v4804 = vpack.c.bf16 %v4699, %v4698
        %v4805 = vpack.c.bf16 %v4701, %v4700
        %v4806 = vpack.c.bf16 %v4703, %v4702
        %v4807 = vpack.c.bf16 %v4705, %v4704
        %v4808 = vpack.c.bf16 %v4707, %v4706
        %v4809 = vpack.c.bf16 %v4709, %v4708
        %v4810 = vpack.c.bf16 %v4711, %v4710
        %v4811 = vpack.c.bf16 %v4713, %v4712
        %v4812 = vpack.c.bf16 %v4715, %v4714
        %v4813 = vpack.c.bf16 %v4717, %v4716
        %v4814 = vpack.c.bf16 %v4719, %v4718
        %v4815 = vpack.c.bf16 %v4721, %v4720
        %v4816 = vpack.c.bf16 %v4723, %v4722
        %v4817 = vpack.c.bf16 %v4725, %v4724
        %v4818 = vpack.c.bf16 %v4727, %v4726
        %v4819 = vpack.c.bf16 %v4729, %v4728
        %v4820 = vpack.c.bf16 %v4731, %v4730
        %v4821 = vpack.c.bf16 %v4733, %v4732
        %v4822 = vpack.c.bf16 %v4735, %v4734
        %v4823 = vpack.c.bf16 %v4737, %v4736
        %v4824 = vpack.c.bf16 %v4739, %v4738
        %v4825 = vpack.c.bf16 %v4741, %v4740
        %v4826 = vpack.c.bf16 %v4743, %v4742
        %v4827 = vpack.c.bf16 %v4745, %v4744
        %v4828 = vpack.c.bf16 %v4747, %v4746
        %v4829 = vpack.c.bf16 %v4749, %v4748
        %v4830 = vpack.c.bf16 %v4751, %v4750
        %v4831 = vpack.c.bf16 %v4753, %v4752
        %v4832 = vpack.c.bf16 %v4755, %v4754
        %v4833 = vpack.c.bf16 %v4757, %v4756
        %v4834 = vpack.c.bf16 %v4759, %v4758
        %v4835 = vpack.c.bf16 %v4761, %v4760
        %v4836 = vpack.c.bf16 %v4763, %v4762
        %v4837 = vpack.c.bf16 %v4765, %v4764
        %v4838 = vpack.c.bf16 %v4767, %v4766
        %v4839 = vpack.c.bf16 %v4769, %v4768
        %v4840 = vpack.c.bf16 %v4771, %v4770
        %v4841 = vpack.c.bf16 %v4773, %v4772
        %v4842 = vpack.c.bf16 %v4775, %v4774
        %v4843 = vpack.c.bf16 %v4777, %v4776
        %v4844 = vpack.c.bf16 %v4779, %v4778
        %v4845 = vpack.c.bf16 %v4781, %v4780
        %v4846 = vld [vmem:[#allocation6] sm:$0xff]
        %v4847 = vld [vmem:[#allocation6 + $0x8] sm:$0xff]
        %v4848 = vld [vmem:[#allocation6 + $0x10] sm:$0xff]
        %v4849 = vld [vmem:[#allocation6 + $0x18] sm:$0xff]
        %v4850 = vld [vmem:[#allocation6 + $0x20] sm:$0xff]
        %v4851 = vld [vmem:[#allocation6 + $0x28] sm:$0xff]
        %v4852 = vld [vmem:[#allocation6 + $0x30] sm:$0xff]
        %v4853 = vld [vmem:[#allocation6 + $0x38] sm:$0xff]
        %v4854 = vld [vmem:[#allocation6 + $0x40] sm:$0xff]
        %v4855 = vld [vmem:[#allocation6 + $0x48] sm:$0xff]
        %v4856 = vld [vmem:[#allocation6 + $0x50] sm:$0xff]
        %v4857 = vld [vmem:[#allocation6 + $0x58] sm:$0xff]
        %v4858 = vld [vmem:[#allocation6 + $0x60] sm:$0xff]
        %v4859 = vld [vmem:[#allocation6 + $0x68] sm:$0xff]
        %v4860 = vld [vmem:[#allocation6 + $0x70] sm:$0xff]
        %v4861 = vld [vmem:[#allocation6 + $0x78] sm:$0xff]
        %v4862 = vld [vmem:[#allocation6 + $0x80] sm:$0xff]
        %v4863 = vld [vmem:[#allocation6 + $0x88] sm:$0xff]
        %v4864 = vld [vmem:[#allocation6 + $0x90] sm:$0xff]
        %v4865 = vld [vmem:[#allocation6 + $0x98] sm:$0xff]
        %v4866 = vld [vmem:[#allocation6 + $0xa0] sm:$0xff]
        %v4867 = vld [vmem:[#allocation6 + $0xa8] sm:$0xff]
        %v4868 = vld [vmem:[#allocation6 + $0xb0] sm:$0xff]
        %v4869 = vld [vmem:[#allocation6 + $0xb8] sm:$0xff]
        %v4870 = vld [vmem:[#allocation6 + $0xc0] sm:$0xff]
        %v4871 = vld [vmem:[#allocation6 + $0xc8] sm:$0xff]
        %v4872 = vld [vmem:[#allocation6 + $0xd0] sm:$0xff]
        %v4873 = vld [vmem:[#allocation6 + $0xd8] sm:$0xff]
        %v4874 = vld [vmem:[#allocation6 + $0xe0] sm:$0xff]
        %v4875 = vld [vmem:[#allocation6 + $0xe8] sm:$0xff]
        %v4876 = vld [vmem:[#allocation6 + $0xf0] sm:$0xff]
        %v4877 = vld [vmem:[#allocation6 + $0xf8] sm:$0xff]
        %v4878 = vld [vmem:[#allocation6 + $0x100] sm:$0xff]
        %v4879 = vld [vmem:[#allocation6 + $0x108] sm:$0xff]
        %v4880 = vld [vmem:[#allocation6 + $0x110] sm:$0xff]
        %v4881 = vld [vmem:[#allocation6 + $0x118] sm:$0xff]
        %v4882 = vld [vmem:[#allocation6 + $0x120] sm:$0xff]
        %v4883 = vld [vmem:[#allocation6 + $0x128] sm:$0xff]
        %v4884 = vld [vmem:[#allocation6 + $0x130] sm:$0xff]
        %v4885 = vld [vmem:[#allocation6 + $0x138] sm:$0xff]
        %v4886 = vld [vmem:[#allocation6 + $0x140] sm:$0xff]
        %v4887 = vld [vmem:[#allocation6 + $0x148] sm:$0xff]
        %v4888 = vld [vmem:[#allocation6 + $0x150] sm:$0xff]
        %v4889 = vld [vmem:[#allocation6 + $0x158] sm:$0xff]
        %v4890 = vld [vmem:[#allocation6 + $0x160] sm:$0xff]
        %v4891 = vld [vmem:[#allocation6 + $0x168] sm:$0xff]
        %v4892 = vld [vmem:[#allocation6 + $0x170] sm:$0xff]
        %v4893 = vld [vmem:[#allocation6 + $0x178] sm:$0xff]
        %v4894 = vld [vmem:[#allocation6 + $0x180] sm:$0xff]
        %v4895 = vld [vmem:[#allocation6 + $0x188] sm:$0xff]
        %v4896 = vld [vmem:[#allocation6 + $0x190] sm:$0xff]
        %v4897 = vld [vmem:[#allocation6 + $0x198] sm:$0xff]
        %v4898 = vld [vmem:[#allocation6 + $0x1a0] sm:$0xff]
        %v4899 = vld [vmem:[#allocation6 + $0x1a8] sm:$0xff]
        %v4900 = vld [vmem:[#allocation6 + $0x1b0] sm:$0xff]
        %v4901 = vld [vmem:[#allocation6 + $0x1b8] sm:$0xff]
        %v4902 = vld [vmem:[#allocation6 + $0x1c0] sm:$0xff]
        %v4903 = vld [vmem:[#allocation6 + $0x1c8] sm:$0xff]
        %v4904 = vld [vmem:[#allocation6 + $0x1d0] sm:$0xff]
        %v4905 = vld [vmem:[#allocation6 + $0x1d8] sm:$0xff]
        %v4906 = vld [vmem:[#allocation6 + $0x1e0] sm:$0xff]
        %v4907 = vld [vmem:[#allocation6 + $0x1e8] sm:$0xff]
        %v4908 = vld [vmem:[#allocation6 + $0x1f0] sm:$0xff]
        %v4909 = vld [vmem:[#allocation6 + $0x1f8] sm:$0xff]
        %v4910 = vld [vmem:[#allocation6 + $0x200] sm:$0xff]
        %v4911 = vld [vmem:[#allocation6 + $0x208] sm:$0xff]
        %v4912 = vld [vmem:[#allocation6 + $0x210] sm:$0xff]
        %v4913 = vld [vmem:[#allocation6 + $0x218] sm:$0xff]
        %v4914 = vld [vmem:[#allocation6 + $0x220] sm:$0xff]
        %v4915 = vld [vmem:[#allocation6 + $0x228] sm:$0xff]
        %v4916 = vld [vmem:[#allocation6 + $0x230] sm:$0xff]
        %v4917 = vld [vmem:[#allocation6 + $0x238] sm:$0xff]
        %v4918 = vld [vmem:[#allocation6 + $0x240] sm:$0xff]
        %v4919 = vld [vmem:[#allocation6 + $0x248] sm:$0xff]
        %v4920 = vld [vmem:[#allocation6 + $0x250] sm:$0xff]
        %v4921 = vld [vmem:[#allocation6 + $0x258] sm:$0xff]
        %v4922 = vld [vmem:[#allocation6 + $0x260] sm:$0xff]
        %v4923 = vld [vmem:[#allocation6 + $0x268] sm:$0xff]
        %v4924 = vld [vmem:[#allocation6 + $0x270] sm:$0xff]
        %v4925 = vld [vmem:[#allocation6 + $0x278] sm:$0xff]
        %v4926 = vld [vmem:[#allocation6 + $0x280] sm:$0xff]
        %v4927 = vld [vmem:[#allocation6 + $0x288] sm:$0xff]
        %v4928 = vld [vmem:[#allocation6 + $0x290] sm:$0xff]
        %v4929 = vld [vmem:[#allocation6 + $0x298] sm:$0xff]
        %v4930 = vld [vmem:[#allocation6 + $0x2a0] sm:$0xff]
        %v4931 = vld [vmem:[#allocation6 + $0x2a8] sm:$0xff]
        %v4932 = vld [vmem:[#allocation6 + $0x2b0] sm:$0xff]
        %v4933 = vld [vmem:[#allocation6 + $0x2b8] sm:$0xff]
        %v4934 = vld [vmem:[#allocation6 + $0x2c0] sm:$0xff]
        %v4935 = vld [vmem:[#allocation6 + $0x2c8] sm:$0xff]
        %v4936 = vld [vmem:[#allocation6 + $0x2d0] sm:$0xff]
        %v4937 = vld [vmem:[#allocation6 + $0x2d8] sm:$0xff]
        %v4938 = vld [vmem:[#allocation6 + $0x2e0] sm:$0xff]
        %v4939 = vld [vmem:[#allocation6 + $0x2e8] sm:$0xff]
        %v4940 = vld [vmem:[#allocation6 + $0x2f0] sm:$0xff]
        %v4941 = vld [vmem:[#allocation6 + $0x2f8] sm:$0xff]
        %v4942 = vld [vmem:[#allocation6 + $0x300] sm:$0xff]
        %v4943 = vld [vmem:[#allocation6 + $0x308] sm:$0xff]
        %v4944 = vld [vmem:[#allocation6 + $0x310] sm:$0xff]
        %v4945 = vld [vmem:[#allocation6 + $0x318] sm:$0xff]
        %v4946 = vld [vmem:[#allocation6 + $0x320] sm:$0xff]
        %v4947 = vld [vmem:[#allocation6 + $0x328] sm:$0xff]
        %v4948 = vld [vmem:[#allocation6 + $0x330] sm:$0xff]
        %v4949 = vld [vmem:[#allocation6 + $0x338] sm:$0xff]
        %v4950 = vld [vmem:[#allocation6 + $0x340] sm:$0xff]
        %v4951 = vld [vmem:[#allocation6 + $0x348] sm:$0xff]
        %v4952 = vld [vmem:[#allocation6 + $0x350] sm:$0xff]
        %v4953 = vld [vmem:[#allocation6 + $0x358] sm:$0xff]
        %v4954 = vld [vmem:[#allocation6 + $0x360] sm:$0xff]
        %v4955 = vld [vmem:[#allocation6 + $0x368] sm:$0xff]
        %v4956 = vld [vmem:[#allocation6 + $0x370] sm:$0xff]
        %v4957 = vld [vmem:[#allocation6 + $0x378] sm:$0xff]
        %v4958 = vld [vmem:[#allocation6 + $0x380] sm:$0xff]
        %v4959 = vld [vmem:[#allocation6 + $0x388] sm:$0xff]
        %v4960 = vld [vmem:[#allocation6 + $0x390] sm:$0xff]
        %v4961 = vld [vmem:[#allocation6 + $0x398] sm:$0xff]
        %v4962 = vld [vmem:[#allocation6 + $0x3a0] sm:$0xff]
        %v4963 = vld [vmem:[#allocation6 + $0x3a8] sm:$0xff]
        %v4964 = vld [vmem:[#allocation6 + $0x3b0] sm:$0xff]
        %v4965 = vld [vmem:[#allocation6 + $0x3b8] sm:$0xff]
        %v4966 = vld [vmem:[#allocation6 + $0x3c0] sm:$0xff]
        %v4967 = vld [vmem:[#allocation6 + $0x3c8] sm:$0xff]
        %v4968 = vld [vmem:[#allocation6 + $0x3d0] sm:$0xff]
        %v4969 = vld [vmem:[#allocation6 + $0x3d8] sm:$0xff]
        %v4970 = vld [vmem:[#allocation6 + $0x3e0] sm:$0xff]
        %v4971 = vld [vmem:[#allocation6 + $0x3e8] sm:$0xff]
        %v4972 = vld [vmem:[#allocation6 + $0x3f0] sm:$0xff]
        %v4973 = vld [vmem:[#allocation6 + $0x3f8] sm:$0xff]
        %v4974 = vld [vmem:[%s6] sm:$0xff]
        %v4975 = vld [vmem:[%s6 + $0x8] sm:$0xff]
        %v4976 = vld [vmem:[%s6 + $0x10] sm:$0xff]
        %v4977 = vld [vmem:[%s6 + $0x18] sm:$0xff]
        %v4978 = vld [vmem:[%s6 + $0x20] sm:$0xff]
        %v4979 = vld [vmem:[%s6 + $0x28] sm:$0xff]
        %v4980 = vld [vmem:[%s6 + $0x30] sm:$0xff]
        %v4981 = vld [vmem:[%s6 + $0x38] sm:$0xff]
        %v4982 = vld [vmem:[%s6 + $0x40] sm:$0xff]
        %v4983 = vld [vmem:[%s6 + $0x48] sm:$0xff]
        %v4984 = vld [vmem:[%s6 + $0x50] sm:$0xff]
        %v4985 = vld [vmem:[%s6 + $0x58] sm:$0xff]
        %v4986 = vld [vmem:[%s6 + $0x60] sm:$0xff]
        %v4987 = vld [vmem:[%s6 + $0x68] sm:$0xff]
        %v4988 = vld [vmem:[%s6 + $0x70] sm:$0xff]
        %v4989 = vld [vmem:[%s6 + $0x78] sm:$0xff]
        %v4990 = vld [vmem:[%s6 + $0x80] sm:$0xff]
        %v4991 = vld [vmem:[%s6 + $0x88] sm:$0xff]
        %v4992 = vld [vmem:[%s6 + $0x90] sm:$0xff]
        %v4993 = vld [vmem:[%s6 + $0x98] sm:$0xff]
        %v4994 = vld [vmem:[%s6 + $0xa0] sm:$0xff]
        %v4995 = vld [vmem:[%s6 + $0xa8] sm:$0xff]
        %v4996 = vld [vmem:[%s6 + $0xb0] sm:$0xff]
        %v4997 = vld [vmem:[%s6 + $0xb8] sm:$0xff]
        %v4998 = vld [vmem:[%s6 + $0xc0] sm:$0xff]
        %v4999 = vld [vmem:[%s6 + $0xc8] sm:$0xff]
        %v5000 = vld [vmem:[%s6 + $0xd0] sm:$0xff]
        %v5001 = vld [vmem:[%s6 + $0xd8] sm:$0xff]
        %v5002 = vld [vmem:[%s6 + $0xe0] sm:$0xff]
        %v5003 = vld [vmem:[%s6 + $0xe8] sm:$0xff]
        %v5004 = vld [vmem:[%s6 + $0xf0] sm:$0xff]
        %v5005 = vld [vmem:[%s6 + $0xf8] sm:$0xff]
        %5007 = vset.pattern.permute.xlu0 0
        %5008 = vperm.xlu0 %5007, %v4974
        %v5009 = vpop.permute.xlu0 %5008
        %5012 = vset.pattern.permute.xlu0 0
        %5013 = vperm.xlu0 %5012, %v4975
        %v5014 = vpop.permute.xlu0 %5013
        %5017 = vset.pattern.permute.xlu0 0
        %5018 = vperm.xlu0 %5017, %v4976
        %v5019 = vpop.permute.xlu0 %5018
        %5022 = vset.pattern.permute.xlu0 0
        %5023 = vperm.xlu0 %5022, %v4977
        %v5024 = vpop.permute.xlu0 %5023
        %5027 = vset.pattern.permute.xlu0 0
        %5028 = vperm.xlu0 %5027, %v4978
        %v5029 = vpop.permute.xlu0 %5028
        %5032 = vset.pattern.permute.xlu0 0
        %5033 = vperm.xlu0 %5032, %v4979
        %v5034 = vpop.permute.xlu0 %5033
        %5037 = vset.pattern.permute.xlu0 0
        %5038 = vperm.xlu0 %5037, %v4980
        %v5039 = vpop.permute.xlu0 %5038
        %5042 = vset.pattern.permute.xlu0 0
        %5043 = vperm.xlu0 %5042, %v4981
        %v5044 = vpop.permute.xlu0 %5043
        %5047 = vset.pattern.permute.xlu0 0
        %5048 = vperm.xlu0 %5047, %v4982
        %v5049 = vpop.permute.xlu0 %5048
        %5052 = vset.pattern.permute.xlu0 0
        %5053 = vperm.xlu0 %5052, %v4983
        %v5054 = vpop.permute.xlu0 %5053
        %5057 = vset.pattern.permute.xlu0 0
        %5058 = vperm.xlu0 %5057, %v4984
        %v5059 = vpop.permute.xlu0 %5058
        %5062 = vset.pattern.permute.xlu0 0
        %5063 = vperm.xlu0 %5062, %v4985
        %v5064 = vpop.permute.xlu0 %5063
        %5067 = vset.pattern.permute.xlu0 0
        %5068 = vperm.xlu0 %5067, %v4986
        %v5069 = vpop.permute.xlu0 %5068
        %5072 = vset.pattern.permute.xlu0 0
        %5073 = vperm.xlu0 %5072, %v4987
        %v5074 = vpop.permute.xlu0 %5073
        %5077 = vset.pattern.permute.xlu0 0
        %5078 = vperm.xlu0 %5077, %v4988
        %v5079 = vpop.permute.xlu0 %5078
        %5082 = vset.pattern.permute.xlu0 0
        %5083 = vperm.xlu0 %5082, %v4989
        %v5084 = vpop.permute.xlu0 %5083
        %5087 = vset.pattern.permute.xlu0 0
        %5088 = vperm.xlu0 %5087, %v4990
        %v5089 = vpop.permute.xlu0 %5088
        %5092 = vset.pattern.permute.xlu0 0
        %5093 = vperm.xlu0 %5092, %v4991
        %v5094 = vpop.permute.xlu0 %5093
        %5097 = vset.pattern.permute.xlu0 0
        %5098 = vperm.xlu0 %5097, %v4992
        %v5099 = vpop.permute.xlu0 %5098
        %5102 = vset.pattern.permute.xlu0 0
        %5103 = vperm.xlu0 %5102, %v4993
        %v5104 = vpop.permute.xlu0 %5103
        %5107 = vset.pattern.permute.xlu0 0
        %5108 = vperm.xlu0 %5107, %v4994
        %v5109 = vpop.permute.xlu0 %5108
        %5112 = vset.pattern.permute.xlu0 0
        %5113 = vperm.xlu0 %5112, %v4995
        %v5114 = vpop.permute.xlu0 %5113
        %5117 = vset.pattern.permute.xlu0 0
        %5118 = vperm.xlu0 %5117, %v4996
        %v5119 = vpop.permute.xlu0 %5118
        %5122 = vset.pattern.permute.xlu0 0
        %5123 = vperm.xlu0 %5122, %v4997
        %v5124 = vpop.permute.xlu0 %5123
        %5127 = vset.pattern.permute.xlu0 0
        %5128 = vperm.xlu0 %5127, %v4998
        %v5129 = vpop.permute.xlu0 %5128
        %5132 = vset.pattern.permute.xlu0 0
        %5133 = vperm.xlu0 %5132, %v4999
        %v5134 = vpop.permute.xlu0 %5133
        %5137 = vset.pattern.permute.xlu0 0
        %5138 = vperm.xlu0 %5137, %v5000
        %v5139 = vpop.permute.xlu0 %5138
        %5142 = vset.pattern.permute.xlu0 0
        %5143 = vperm.xlu0 %5142, %v5001
        %v5144 = vpop.permute.xlu0 %5143
        %5147 = vset.pattern.permute.xlu0 0
        %5148 = vperm.xlu0 %5147, %v5002
        %v5149 = vpop.permute.xlu0 %5148
        %5152 = vset.pattern.permute.xlu0 0
        %5153 = vperm.xlu0 %5152, %v5003
        %v5154 = vpop.permute.xlu0 %5153
        %5157 = vset.pattern.permute.xlu0 0
        %5158 = vperm.xlu0 %5157, %v5004
        %v5159 = vpop.permute.xlu0 %5158
        %5162 = vset.pattern.permute.xlu0 0
        %5163 = vperm.xlu0 %5162, %v5005
        %v5164 = vpop.permute.xlu0 %5163
        %v5294 = vunpack.c.l.b16 %v4846
        %v5295 = vunpack.c.h.b16 %v4846
        %v5296 = vunpack.c.l.b16 %v4847
        %v5297 = vunpack.c.h.b16 %v4847
        %v5298 = vunpack.c.l.b16 %v4848
        %v5299 = vunpack.c.h.b16 %v4848
        %v5300 = vunpack.c.l.b16 %v4849
        %v5301 = vunpack.c.h.b16 %v4849
        %v5302 = vunpack.c.l.b16 %v4850
        %v5303 = vunpack.c.h.b16 %v4850
        %v5304 = vunpack.c.l.b16 %v4851
        %v5305 = vunpack.c.h.b16 %v4851
        %v5306 = vunpack.c.l.b16 %v4852
        %v5307 = vunpack.c.h.b16 %v4852
        %v5308 = vunpack.c.l.b16 %v4853
        %v5309 = vunpack.c.h.b16 %v4853
        %v5310 = vunpack.c.l.b16 %v4854
        %v5311 = vunpack.c.h.b16 %v4854
        %v5312 = vunpack.c.l.b16 %v4855
        %v5313 = vunpack.c.h.b16 %v4855
        %v5314 = vunpack.c.l.b16 %v4856
        %v5315 = vunpack.c.h.b16 %v4856
        %v5316 = vunpack.c.l.b16 %v4857
        %v5317 = vunpack.c.h.b16 %v4857
        %v5318 = vunpack.c.l.b16 %v4858
        %v5319 = vunpack.c.h.b16 %v4858
        %v5320 = vunpack.c.l.b16 %v4859
        %v5321 = vunpack.c.h.b16 %v4859
        %v5322 = vunpack.c.l.b16 %v4860
        %v5323 = vunpack.c.h.b16 %v4860
        %v5324 = vunpack.c.l.b16 %v4861
        %v5325 = vunpack.c.h.b16 %v4861
        %v5326 = vunpack.c.l.b16 %v4862
        %v5327 = vunpack.c.h.b16 %v4862
        %v5328 = vunpack.c.l.b16 %v4863
        %v5329 = vunpack.c.h.b16 %v4863
        %v5330 = vunpack.c.l.b16 %v4864
        %v5331 = vunpack.c.h.b16 %v4864
        %v5332 = vunpack.c.l.b16 %v4865
        %v5333 = vunpack.c.h.b16 %v4865
        %v5334 = vunpack.c.l.b16 %v4866
        %v5335 = vunpack.c.h.b16 %v4866
        %v5336 = vunpack.c.l.b16 %v4867
        %v5337 = vunpack.c.h.b16 %v4867
        %v5338 = vunpack.c.l.b16 %v4868
        %v5339 = vunpack.c.h.b16 %v4868
        %v5340 = vunpack.c.l.b16 %v4869
        %v5341 = vunpack.c.h.b16 %v4869
        %v5342 = vunpack.c.l.b16 %v4870
        %v5343 = vunpack.c.h.b16 %v4870
        %v5344 = vunpack.c.l.b16 %v4871
        %v5345 = vunpack.c.h.b16 %v4871
        %v5346 = vunpack.c.l.b16 %v4872
        %v5347 = vunpack.c.h.b16 %v4872
        %v5348 = vunpack.c.l.b16 %v4873
        %v5349 = vunpack.c.h.b16 %v4873
        %v5350 = vunpack.c.l.b16 %v4874
        %v5351 = vunpack.c.h.b16 %v4874
        %v5352 = vunpack.c.l.b16 %v4875
        %v5353 = vunpack.c.h.b16 %v4875
        %v5354 = vunpack.c.l.b16 %v4876
        %v5355 = vunpack.c.h.b16 %v4876
        %v5356 = vunpack.c.l.b16 %v4877
        %v5357 = vunpack.c.h.b16 %v4877
        %v5358 = vunpack.c.l.b16 %v4878
        %v5359 = vunpack.c.h.b16 %v4878
        %v5360 = vunpack.c.l.b16 %v4879
        %v5361 = vunpack.c.h.b16 %v4879
        %v5362 = vunpack.c.l.b16 %v4880
        %v5363 = vunpack.c.h.b16 %v4880
        %v5364 = vunpack.c.l.b16 %v4881
        %v5365 = vunpack.c.h.b16 %v4881
        %v5366 = vunpack.c.l.b16 %v4882
        %v5367 = vunpack.c.h.b16 %v4882
        %v5368 = vunpack.c.l.b16 %v4883
        %v5369 = vunpack.c.h.b16 %v4883
        %v5370 = vunpack.c.l.b16 %v4884
        %v5371 = vunpack.c.h.b16 %v4884
        %v5372 = vunpack.c.l.b16 %v4885
        %v5373 = vunpack.c.h.b16 %v4885
        %v5374 = vunpack.c.l.b16 %v4886
        %v5375 = vunpack.c.h.b16 %v4886
        %v5376 = vunpack.c.l.b16 %v4887
        %v5377 = vunpack.c.h.b16 %v4887
        %v5378 = vunpack.c.l.b16 %v4888
        %v5379 = vunpack.c.h.b16 %v4888
        %v5380 = vunpack.c.l.b16 %v4889
        %v5381 = vunpack.c.h.b16 %v4889
        %v5382 = vunpack.c.l.b16 %v4890
        %v5383 = vunpack.c.h.b16 %v4890
        %v5384 = vunpack.c.l.b16 %v4891
        %v5385 = vunpack.c.h.b16 %v4891
        %v5386 = vunpack.c.l.b16 %v4892
        %v5387 = vunpack.c.h.b16 %v4892
        %v5388 = vunpack.c.l.b16 %v4893
        %v5389 = vunpack.c.h.b16 %v4893
        %v5390 = vunpack.c.l.b16 %v4894
        %v5391 = vunpack.c.h.b16 %v4894
        %v5392 = vunpack.c.l.b16 %v4895
        %v5393 = vunpack.c.h.b16 %v4895
        %v5394 = vunpack.c.l.b16 %v4896
        %v5395 = vunpack.c.h.b16 %v4896
        %v5396 = vunpack.c.l.b16 %v4897
        %v5397 = vunpack.c.h.b16 %v4897
        %v5398 = vunpack.c.l.b16 %v4898
        %v5399 = vunpack.c.h.b16 %v4898
        %v5400 = vunpack.c.l.b16 %v4899
        %v5401 = vunpack.c.h.b16 %v4899
        %v5402 = vunpack.c.l.b16 %v4900
        %v5403 = vunpack.c.h.b16 %v4900
        %v5404 = vunpack.c.l.b16 %v4901
        %v5405 = vunpack.c.h.b16 %v4901
        %v5406 = vunpack.c.l.b16 %v4902
        %v5407 = vunpack.c.h.b16 %v4902
        %v5408 = vunpack.c.l.b16 %v4903
        %v5409 = vunpack.c.h.b16 %v4903
        %v5410 = vunpack.c.l.b16 %v4904
        %v5411 = vunpack.c.h.b16 %v4904
        %v5412 = vunpack.c.l.b16 %v4905
        %v5413 = vunpack.c.h.b16 %v4905
        %v5414 = vunpack.c.l.b16 %v4906
        %v5415 = vunpack.c.h.b16 %v4906
        %v5416 = vunpack.c.l.b16 %v4907
        %v5417 = vunpack.c.h.b16 %v4907
        %v5418 = vunpack.c.l.b16 %v4908
        %v5419 = vunpack.c.h.b16 %v4908
        %v5420 = vunpack.c.l.b16 %v4909
        %v5421 = vunpack.c.h.b16 %v4909
        %v5422 = vunpack.c.l.b16 %v4910
        %v5423 = vunpack.c.h.b16 %v4910
        %v5424 = vunpack.c.l.b16 %v4911
        %v5425 = vunpack.c.h.b16 %v4911
        %v5426 = vunpack.c.l.b16 %v4912
        %v5427 = vunpack.c.h.b16 %v4912
        %v5428 = vunpack.c.l.b16 %v4913
        %v5429 = vunpack.c.h.b16 %v4913
        %v5430 = vunpack.c.l.b16 %v4914
        %v5431 = vunpack.c.h.b16 %v4914
        %v5432 = vunpack.c.l.b16 %v4915
        %v5433 = vunpack.c.h.b16 %v4915
        %v5434 = vunpack.c.l.b16 %v4916
        %v5435 = vunpack.c.h.b16 %v4916
        %v5436 = vunpack.c.l.b16 %v4917
        %v5437 = vunpack.c.h.b16 %v4917
        %v5438 = vunpack.c.l.b16 %v4918
        %v5439 = vunpack.c.h.b16 %v4918
        %v5440 = vunpack.c.l.b16 %v4919
        %v5441 = vunpack.c.h.b16 %v4919
        %v5442 = vunpack.c.l.b16 %v4920
        %v5443 = vunpack.c.h.b16 %v4920
        %v5444 = vunpack.c.l.b16 %v4921
        %v5445 = vunpack.c.h.b16 %v4921
        %v5446 = vunpack.c.l.b16 %v4922
        %v5447 = vunpack.c.h.b16 %v4922
        %v5448 = vunpack.c.l.b16 %v4923
        %v5449 = vunpack.c.h.b16 %v4923
        %v5450 = vunpack.c.l.b16 %v4924
        %v5451 = vunpack.c.h.b16 %v4924
        %v5452 = vunpack.c.l.b16 %v4925
        %v5453 = vunpack.c.h.b16 %v4925
        %v5454 = vunpack.c.l.b16 %v4926
        %v5455 = vunpack.c.h.b16 %v4926
        %v5456 = vunpack.c.l.b16 %v4927
        %v5457 = vunpack.c.h.b16 %v4927
        %v5458 = vunpack.c.l.b16 %v4928
        %v5459 = vunpack.c.h.b16 %v4928
        %v5460 = vunpack.c.l.b16 %v4929
        %v5461 = vunpack.c.h.b16 %v4929
        %v5462 = vunpack.c.l.b16 %v4930
        %v5463 = vunpack.c.h.b16 %v4930
        %v5464 = vunpack.c.l.b16 %v4931
        %v5465 = vunpack.c.h.b16 %v4931
        %v5466 = vunpack.c.l.b16 %v4932
        %v5467 = vunpack.c.h.b16 %v4932
        %v5468 = vunpack.c.l.b16 %v4933
        %v5469 = vunpack.c.h.b16 %v4933
        %v5470 = vunpack.c.l.b16 %v4934
        %v5471 = vunpack.c.h.b16 %v4934
        %v5472 = vunpack.c.l.b16 %v4935
        %v5473 = vunpack.c.h.b16 %v4935
        %v5474 = vunpack.c.l.b16 %v4936
        %v5475 = vunpack.c.h.b16 %v4936
        %v5476 = vunpack.c.l.b16 %v4937
        %v5477 = vunpack.c.h.b16 %v4937
        %v5478 = vunpack.c.l.b16 %v4938
        %v5479 = vunpack.c.h.b16 %v4938
        %v5480 = vunpack.c.l.b16 %v4939
        %v5481 = vunpack.c.h.b16 %v4939
        %v5482 = vunpack.c.l.b16 %v4940
        %v5483 = vunpack.c.h.b16 %v4940
        %v5484 = vunpack.c.l.b16 %v4941
        %v5485 = vunpack.c.h.b16 %v4941
        %v5486 = vunpack.c.l.b16 %v4942
        %v5487 = vunpack.c.h.b16 %v4942
        %v5488 = vunpack.c.l.b16 %v4943
        %v5489 = vunpack.c.h.b16 %v4943
        %v5490 = vunpack.c.l.b16 %v4944
        %v5491 = vunpack.c.h.b16 %v4944
        %v5492 = vunpack.c.l.b16 %v4945
        %v5493 = vunpack.c.h.b16 %v4945
        %v5494 = vunpack.c.l.b16 %v4946
        %v5495 = vunpack.c.h.b16 %v4946
        %v5496 = vunpack.c.l.b16 %v4947
        %v5497 = vunpack.c.h.b16 %v4947
        %v5498 = vunpack.c.l.b16 %v4948
        %v5499 = vunpack.c.h.b16 %v4948
        %v5500 = vunpack.c.l.b16 %v4949
        %v5501 = vunpack.c.h.b16 %v4949
        %v5502 = vunpack.c.l.b16 %v4950
        %v5503 = vunpack.c.h.b16 %v4950
        %v5504 = vunpack.c.l.b16 %v4951
        %v5505 = vunpack.c.h.b16 %v4951
        %v5506 = vunpack.c.l.b16 %v4952
        %v5507 = vunpack.c.h.b16 %v4952
        %v5508 = vunpack.c.l.b16 %v4953
        %v5509 = vunpack.c.h.b16 %v4953
        %v5510 = vunpack.c.l.b16 %v4954
        %v5511 = vunpack.c.h.b16 %v4954
        %v5512 = vunpack.c.l.b16 %v4955
        %v5513 = vunpack.c.h.b16 %v4955
        %v5514 = vunpack.c.l.b16 %v4956
        %v5515 = vunpack.c.h.b16 %v4956
        %v5516 = vunpack.c.l.b16 %v4957
        %v5517 = vunpack.c.h.b16 %v4957
        %v5518 = vunpack.c.l.b16 %v4958
        %v5519 = vunpack.c.h.b16 %v4958
        %v5520 = vunpack.c.l.b16 %v4959
        %v5521 = vunpack.c.h.b16 %v4959
        %v5522 = vunpack.c.l.b16 %v4960
        %v5523 = vunpack.c.h.b16 %v4960
        %v5524 = vunpack.c.l.b16 %v4961
        %v5525 = vunpack.c.h.b16 %v4961
        %v5526 = vunpack.c.l.b16 %v4962
        %v5527 = vunpack.c.h.b16 %v4962
        %v5528 = vunpack.c.l.b16 %v4963
        %v5529 = vunpack.c.h.b16 %v4963
        %v5530 = vunpack.c.l.b16 %v4964
        %v5531 = vunpack.c.h.b16 %v4964
        %v5532 = vunpack.c.l.b16 %v4965
        %v5533 = vunpack.c.h.b16 %v4965
        %v5534 = vunpack.c.l.b16 %v4966
        %v5535 = vunpack.c.h.b16 %v4966
        %v5536 = vunpack.c.l.b16 %v4967
        %v5537 = vunpack.c.h.b16 %v4967
        %v5538 = vunpack.c.l.b16 %v4968
        %v5539 = vunpack.c.h.b16 %v4968
        %v5540 = vunpack.c.l.b16 %v4969
        %v5541 = vunpack.c.h.b16 %v4969
        %v5542 = vunpack.c.l.b16 %v4970
        %v5543 = vunpack.c.h.b16 %v4970
        %v5544 = vunpack.c.l.b16 %v4971
        %v5545 = vunpack.c.h.b16 %v4971
        %v5546 = vunpack.c.l.b16 %v4972
        %v5547 = vunpack.c.h.b16 %v4972
        %v5548 = vunpack.c.l.b16 %v4973
        %v5549 = vunpack.c.h.b16 %v4973
        %v5550 = vpack.c.b16 %v5302, %v5294
        %v5551 = vpack.c.b16 %v5303, %v5295
        %v5552 = vpack.c.b16 %v5304, %v5296
        %v5553 = vpack.c.b16 %v5305, %v5297
        %v5554 = vpack.c.b16 %v5306, %v5298
        %v5555 = vpack.c.b16 %v5307, %v5299
        %v5556 = vpack.c.b16 %v5308, %v5300
        %v5557 = vpack.c.b16 %v5309, %v5301
        %v5558 = vpack.c.b16 %v5318, %v5310
        %v5559 = vpack.c.b16 %v5319, %v5311
        %v5560 = vpack.c.b16 %v5320, %v5312
        %v5561 = vpack.c.b16 %v5321, %v5313
        %v5562 = vpack.c.b16 %v5322, %v5314
        %v5563 = vpack.c.b16 %v5323, %v5315
        %v5564 = vpack.c.b16 %v5324, %v5316
        %v5565 = vpack.c.b16 %v5325, %v5317
        %v5566 = vpack.c.b16 %v5334, %v5326
        %v5567 = vpack.c.b16 %v5335, %v5327
        %v5568 = vpack.c.b16 %v5336, %v5328
        %v5569 = vpack.c.b16 %v5337, %v5329
        %v5570 = vpack.c.b16 %v5338, %v5330
        %v5571 = vpack.c.b16 %v5339, %v5331
        %v5572 = vpack.c.b16 %v5340, %v5332
        %v5573 = vpack.c.b16 %v5341, %v5333
        %v5574 = vpack.c.b16 %v5350, %v5342
        %v5575 = vpack.c.b16 %v5351, %v5343
        %v5576 = vpack.c.b16 %v5352, %v5344
        %v5577 = vpack.c.b16 %v5353, %v5345
        %v5578 = vpack.c.b16 %v5354, %v5346
        %v5579 = vpack.c.b16 %v5355, %v5347
        %v5580 = vpack.c.b16 %v5356, %v5348
        %v5581 = vpack.c.b16 %v5357, %v5349
        %v5582 = vpack.c.b16 %v5366, %v5358
        %v5583 = vpack.c.b16 %v5367, %v5359
        %v5584 = vpack.c.b16 %v5368, %v5360
        %v5585 = vpack.c.b16 %v5369, %v5361
        %v5586 = vpack.c.b16 %v5370, %v5362
        %v5587 = vpack.c.b16 %v5371, %v5363
        %v5588 = vpack.c.b16 %v5372, %v5364
        %v5589 = vpack.c.b16 %v5373, %v5365
        %v5590 = vpack.c.b16 %v5382, %v5374
        %v5591 = vpack.c.b16 %v5383, %v5375
        %v5592 = vpack.c.b16 %v5384, %v5376
        %v5593 = vpack.c.b16 %v5385, %v5377
        %v5594 = vpack.c.b16 %v5386, %v5378
        %v5595 = vpack.c.b16 %v5387, %v5379
        %v5596 = vpack.c.b16 %v5388, %v5380
        %v5597 = vpack.c.b16 %v5389, %v5381
        %v5598 = vpack.c.b16 %v5398, %v5390
        %v5599 = vpack.c.b16 %v5399, %v5391
        %v5600 = vpack.c.b16 %v5400, %v5392
        %v5601 = vpack.c.b16 %v5401, %v5393
        %v5602 = vpack.c.b16 %v5402, %v5394
        %v5603 = vpack.c.b16 %v5403, %v5395
        %v5604 = vpack.c.b16 %v5404, %v5396
        %v5605 = vpack.c.b16 %v5405, %v5397
        %v5606 = vpack.c.b16 %v5414, %v5406
        %v5607 = vpack.c.b16 %v5415, %v5407
        %v5608 = vpack.c.b16 %v5416, %v5408
        %v5609 = vpack.c.b16 %v5417, %v5409
        %v5610 = vpack.c.b16 %v5418, %v5410
        %v5611 = vpack.c.b16 %v5419, %v5411
        %v5612 = vpack.c.b16 %v5420, %v5412
        %v5613 = vpack.c.b16 %v5421, %v5413
        %v5614 = vpack.c.b16 %v5430, %v5422
        %v5615 = vpack.c.b16 %v5431, %v5423
        %v5616 = vpack.c.b16 %v5432, %v5424
        %v5617 = vpack.c.b16 %v5433, %v5425
        %v5618 = vpack.c.b16 %v5434, %v5426
        %v5619 = vpack.c.b16 %v5435, %v5427
        %v5620 = vpack.c.b16 %v5436, %v5428
        %v5621 = vpack.c.b16 %v5437, %v5429
        %v5622 = vpack.c.b16 %v5446, %v5438
        %v5623 = vpack.c.b16 %v5447, %v5439
        %v5624 = vpack.c.b16 %v5448, %v5440
        %v5625 = vpack.c.b16 %v5449, %v5441
        %v5626 = vpack.c.b16 %v5450, %v5442
        %v5627 = vpack.c.b16 %v5451, %v5443
        %v5628 = vpack.c.b16 %v5452, %v5444
        %v5629 = vpack.c.b16 %v5453, %v5445
        %v5630 = vpack.c.b16 %v5462, %v5454
        %v5631 = vpack.c.b16 %v5463, %v5455
        %v5632 = vpack.c.b16 %v5464, %v5456
        %v5633 = vpack.c.b16 %v5465, %v5457
        %v5634 = vpack.c.b16 %v5466, %v5458
        %v5635 = vpack.c.b16 %v5467, %v5459
        %v5636 = vpack.c.b16 %v5468, %v5460
        %v5637 = vpack.c.b16 %v5469, %v5461
        %v5638 = vpack.c.b16 %v5478, %v5470
        %v5639 = vpack.c.b16 %v5479, %v5471
        %v5640 = vpack.c.b16 %v5480, %v5472
        %v5641 = vpack.c.b16 %v5481, %v5473
        %v5642 = vpack.c.b16 %v5482, %v5474
        %v5643 = vpack.c.b16 %v5483, %v5475
        %v5644 = vpack.c.b16 %v5484, %v5476
        %v5645 = vpack.c.b16 %v5485, %v5477
        %v5646 = vpack.c.b16 %v5494, %v5486
        %v5647 = vpack.c.b16 %v5495, %v5487
        %v5648 = vpack.c.b16 %v5496, %v5488
        %v5649 = vpack.c.b16 %v5497, %v5489
        %v5650 = vpack.c.b16 %v5498, %v5490
        %v5651 = vpack.c.b16 %v5499, %v5491
        %v5652 = vpack.c.b16 %v5500, %v5492
        %v5653 = vpack.c.b16 %v5501, %v5493
        %v5654 = vpack.c.b16 %v5510, %v5502
        %v5655 = vpack.c.b16 %v5511, %v5503
        %v5656 = vpack.c.b16 %v5512, %v5504
        %v5657 = vpack.c.b16 %v5513, %v5505
        %v5658 = vpack.c.b16 %v5514, %v5506
        %v5659 = vpack.c.b16 %v5515, %v5507
        %v5660 = vpack.c.b16 %v5516, %v5508
        %v5661 = vpack.c.b16 %v5517, %v5509
        %v5662 = vpack.c.b16 %v5526, %v5518
        %v5663 = vpack.c.b16 %v5527, %v5519
        %v5664 = vpack.c.b16 %v5528, %v5520
        %v5665 = vpack.c.b16 %v5529, %v5521
        %v5666 = vpack.c.b16 %v5530, %v5522
        %v5667 = vpack.c.b16 %v5531, %v5523
        %v5668 = vpack.c.b16 %v5532, %v5524
        %v5669 = vpack.c.b16 %v5533, %v5525
        %v5670 = vpack.c.b16 %v5542, %v5534
        %v5671 = vpack.c.b16 %v5543, %v5535
        %v5672 = vpack.c.b16 %v5544, %v5536
        %v5673 = vpack.c.b16 %v5545, %v5537
        %v5674 = vpack.c.b16 %v5546, %v5538
        %v5675 = vpack.c.b16 %v5547, %v5539
        %v5676 = vpack.c.b16 %v5548, %v5540
        %v5677 = vpack.c.b16 %v5549, %v5541
        %5806 = vmatpush.bf16.msra.mxu0 %v4789
        %5807 = vmatpush.bf16.msra.mxu0 %v4788
        %5808 = vmatpush.bf16.msra.mxu0 %v4787
        %5809 = vmatpush.bf16.msra.mxu0 %v4786
        %5810 = vmatpush.bf16.msra.mxu0 %v4785
        %5811 = vmatpush.bf16.msra.mxu0 %v4784
        %5812 = vmatpush.bf16.msra.mxu0 %v4783
        %5813 = vmatpush.bf16.msra.mxu0 %v4782
        %5814 = vmatmul.bf16.gmra.mxu0 %v5550
        %v5815 = vpop.f32.mrf.mxu0
        %v5816 = vadd.f32 %v5009, %v5815
        %v5817 = vpop.f32.mrf.mxu0
        %v5818 = vadd.f32 %v5014, %v5817
        %5819 = vmatmul.bf16.gmra.mxu0 %v5558
        %v5820 = vpop.f32.mrf.mxu0
        %v5821 = vadd.f32 %v5019, %v5820
        %v5822 = vpop.f32.mrf.mxu0
        %v5823 = vadd.f32 %v5024, %v5822
        %5824 = vmatmul.bf16.gmra.mxu0 %v5566
        %v5825 = vpop.f32.mrf.mxu0
        %v5826 = vadd.f32 %v5029, %v5825
        %v5827 = vpop.f32.mrf.mxu0
        %v5828 = vadd.f32 %v5034, %v5827
        %5829 = vmatmul.bf16.gmra.mxu0 %v5574
        %v5830 = vpop.f32.mrf.mxu0
        %v5831 = vadd.f32 %v5039, %v5830
        %v5832 = vpop.f32.mrf.mxu0
        %v5833 = vadd.f32 %v5044, %v5832
        %5834 = vmatmul.bf16.gmra.mxu0 %v5582
        %v5835 = vpop.f32.mrf.mxu0
        %v5836 = vadd.f32 %v5049, %v5835
        %v5837 = vpop.f32.mrf.mxu0
        %v5838 = vadd.f32 %v5054, %v5837
        %5839 = vmatmul.bf16.gmra.mxu0 %v5590
        %v5840 = vpop.f32.mrf.mxu0
        %v5841 = vadd.f32 %v5059, %v5840
        %v5842 = vpop.f32.mrf.mxu0
        %v5843 = vadd.f32 %v5064, %v5842
        %5844 = vmatmul.bf16.gmra.mxu0 %v5598
        %v5845 = vpop.f32.mrf.mxu0
        %v5846 = vadd.f32 %v5069, %v5845
        %v5847 = vpop.f32.mrf.mxu0
        %v5848 = vadd.f32 %v5074, %v5847
        %5849 = vmatmul.bf16.gmra.mxu0 %v5606
        %v5850 = vpop.f32.mrf.mxu0
        %v5851 = vadd.f32 %v5079, %v5850
        %v5852 = vpop.f32.mrf.mxu0
        %v5853 = vadd.f32 %v5084, %v5852
        %5854 = vmatmul.bf16.gmra.mxu0 %v5614
        %v5855 = vpop.f32.mrf.mxu0
        %v5856 = vadd.f32 %v5089, %v5855
        %v5857 = vpop.f32.mrf.mxu0
        %v5858 = vadd.f32 %v5094, %v5857
        %5859 = vmatmul.bf16.gmra.mxu0 %v5622
        %v5860 = vpop.f32.mrf.mxu0
        %v5861 = vadd.f32 %v5099, %v5860
        %v5862 = vpop.f32.mrf.mxu0
        %v5863 = vadd.f32 %v5104, %v5862
        %5864 = vmatmul.bf16.gmra.mxu0 %v5630
        %v5865 = vpop.f32.mrf.mxu0
        %v5866 = vadd.f32 %v5109, %v5865
        %v5867 = vpop.f32.mrf.mxu0
        %v5868 = vadd.f32 %v5114, %v5867
        %5869 = vmatmul.bf16.gmra.mxu0 %v5638
        %v5870 = vpop.f32.mrf.mxu0
        %v5871 = vadd.f32 %v5119, %v5870
        %v5872 = vpop.f32.mrf.mxu0
        %v5873 = vadd.f32 %v5124, %v5872
        %5874 = vmatmul.bf16.gmra.mxu0 %v5646
        %v5875 = vpop.f32.mrf.mxu0
        %v5876 = vadd.f32 %v5129, %v5875
        %v5877 = vpop.f32.mrf.mxu0
        %v5878 = vadd.f32 %v5134, %v5877
        %5879 = vmatmul.bf16.gmra.mxu0 %v5654
        %v5880 = vpop.f32.mrf.mxu0
        %v5881 = vadd.f32 %v5139, %v5880
        %v5882 = vpop.f32.mrf.mxu0
        %v5883 = vadd.f32 %v5144, %v5882
        %5884 = vmatmul.bf16.gmra.mxu0 %v5662
        %v5885 = vpop.f32.mrf.mxu0
        %v5886 = vadd.f32 %v5149, %v5885
        %v5887 = vpop.f32.mrf.mxu0
        %v5888 = vadd.f32 %v5154, %v5887
        %5889 = vmatmul.bf16.gmra.mxu0 %v5670
        %v5890 = vpop.f32.mrf.mxu0
        %v5891 = vadd.f32 %v5159, %v5890
        %v5892 = vpop.f32.mrf.mxu0
        %v5893 = vadd.f32 %v5164, %v5892
        %5894 = vdwg.mxu0
        %5895 = vmatpush.bf16.msra.mxu0 %v4797
        %5896 = vmatpush.bf16.msra.mxu0 %v4796
        %5897 = vmatpush.bf16.msra.mxu0 %v4795
        %5898 = vmatpush.bf16.msra.mxu0 %v4794
        %5899 = vmatpush.bf16.msra.mxu0 %v4793
        %5900 = vmatpush.bf16.msra.mxu0 %v4792
        %5901 = vmatpush.bf16.msra.mxu0 %v4791
        %5902 = vmatpush.bf16.msra.mxu0 %v4790
        %5903 = vmatmul.bf16.gmra.mxu0 %v5551
        %v5904 = vpop.f32.mrf.mxu0
        %v5905 = vadd.f32 %v5816, %v5904
        %v5906 = vpop.f32.mrf.mxu0
        %v5907 = vadd.f32 %v5818, %v5906
        %5908 = vmatmul.bf16.gmra.mxu0 %v5559
        %v5909 = vpop.f32.mrf.mxu0
        %v5910 = vadd.f32 %v5821, %v5909
        %v5911 = vpop.f32.mrf.mxu0
        %v5912 = vadd.f32 %v5823, %v5911
        %5913 = vmatmul.bf16.gmra.mxu0 %v5567
        %v5914 = vpop.f32.mrf.mxu0
        %v5915 = vadd.f32 %v5826, %v5914
        %v5916 = vpop.f32.mrf.mxu0
        %v5917 = vadd.f32 %v5828, %v5916
        %5918 = vmatmul.bf16.gmra.mxu0 %v5575
        %v5919 = vpop.f32.mrf.mxu0
        %v5920 = vadd.f32 %v5831, %v5919
        %v5921 = vpop.f32.mrf.mxu0
        %v5922 = vadd.f32 %v5833, %v5921
        %5923 = vmatmul.bf16.gmra.mxu0 %v5583
        %v5924 = vpop.f32.mrf.mxu0
        %v5925 = vadd.f32 %v5836, %v5924
        %v5926 = vpop.f32.mrf.mxu0
        %v5927 = vadd.f32 %v5838, %v5926
        %5928 = vmatmul.bf16.gmra.mxu0 %v5591
        %v5929 = vpop.f32.mrf.mxu0
        %v5930 = vadd.f32 %v5841, %v5929
        %v5931 = vpop.f32.mrf.mxu0
        %v5932 = vadd.f32 %v5843, %v5931
        %5933 = vmatmul.bf16.gmra.mxu0 %v5599
        %v5934 = vpop.f32.mrf.mxu0
        %v5935 = vadd.f32 %v5846, %v5934
        %v5936 = vpop.f32.mrf.mxu0
        %v5937 = vadd.f32 %v5848, %v5936
        %5938 = vmatmul.bf16.gmra.mxu0 %v5607
        %v5939 = vpop.f32.mrf.mxu0
        %v5940 = vadd.f32 %v5851, %v5939
        %v5941 = vpop.f32.mrf.mxu0
        %v5942 = vadd.f32 %v5853, %v5941
        %5943 = vmatmul.bf16.gmra.mxu0 %v5615
        %v5944 = vpop.f32.mrf.mxu0
        %v5945 = vadd.f32 %v5856, %v5944
        %v5946 = vpop.f32.mrf.mxu0
        %v5947 = vadd.f32 %v5858, %v5946
        %5948 = vmatmul.bf16.gmra.mxu0 %v5623
        %v5949 = vpop.f32.mrf.mxu0
        %v5950 = vadd.f32 %v5861, %v5949
        %v5951 = vpop.f32.mrf.mxu0
        %v5952 = vadd.f32 %v5863, %v5951
        %5953 = vmatmul.bf16.gmra.mxu0 %v5631
        %v5954 = vpop.f32.mrf.mxu0
        %v5955 = vadd.f32 %v5866, %v5954
        %v5956 = vpop.f32.mrf.mxu0
        %v5957 = vadd.f32 %v5868, %v5956
        %5958 = vmatmul.bf16.gmra.mxu0 %v5639
        %v5959 = vpop.f32.mrf.mxu0
        %v5960 = vadd.f32 %v5871, %v5959
        %v5961 = vpop.f32.mrf.mxu0
        %v5962 = vadd.f32 %v5873, %v5961
        %5963 = vmatmul.bf16.gmra.mxu0 %v5647
        %v5964 = vpop.f32.mrf.mxu0
        %v5965 = vadd.f32 %v5876, %v5964
        %v5966 = vpop.f32.mrf.mxu0
        %v5967 = vadd.f32 %v5878, %v5966
        %5968 = vmatmul.bf16.gmra.mxu0 %v5655
        %v5969 = vpop.f32.mrf.mxu0
        %v5970 = vadd.f32 %v5881, %v5969
        %v5971 = vpop.f32.mrf.mxu0
        %v5972 = vadd.f32 %v5883, %v5971
        %5973 = vmatmul.bf16.gmra.mxu0 %v5663
        %v5974 = vpop.f32.mrf.mxu0
        %v5975 = vadd.f32 %v5886, %v5974
        %v5976 = vpop.f32.mrf.mxu0
        %v5977 = vadd.f32 %v5888, %v5976
        %5978 = vmatmul.bf16.gmra.mxu0 %v5671
        %v5979 = vpop.f32.mrf.mxu0
        %v5980 = vadd.f32 %v5891, %v5979
        %v5981 = vpop.f32.mrf.mxu0
        %v5982 = vadd.f32 %v5893, %v5981
        %5983 = vdwg.mxu0
        %5984 = vmatpush.bf16.msra.mxu0 %v4805
        %5985 = vmatpush.bf16.msra.mxu0 %v4804
        %5986 = vmatpush.bf16.msra.mxu0 %v4803
        %5987 = vmatpush.bf16.msra.mxu0 %v4802
        %5988 = vmatpush.bf16.msra.mxu0 %v4801
        %5989 = vmatpush.bf16.msra.mxu0 %v4800
        %5990 = vmatpush.bf16.msra.mxu0 %v4799
        %5991 = vmatpush.bf16.msra.mxu0 %v4798
        %5992 = vmatmul.bf16.gmra.mxu0 %v5552
        %v5993 = vpop.f32.mrf.mxu0
        %v5994 = vadd.f32 %v5905, %v5993
        %v5995 = vpop.f32.mrf.mxu0
        %v5996 = vadd.f32 %v5907, %v5995
        %5997 = vmatmul.bf16.gmra.mxu0 %v5560
        %v5998 = vpop.f32.mrf.mxu0
        %v5999 = vadd.f32 %v5910, %v5998
        %v6000 = vpop.f32.mrf.mxu0
        %v6001 = vadd.f32 %v5912, %v6000
        %6002 = vmatmul.bf16.gmra.mxu0 %v5568
        %v6003 = vpop.f32.mrf.mxu0
        %v6004 = vadd.f32 %v5915, %v6003
        %v6005 = vpop.f32.mrf.mxu0
        %v6006 = vadd.f32 %v5917, %v6005
        %6007 = vmatmul.bf16.gmra.mxu0 %v5576
        %v6008 = vpop.f32.mrf.mxu0
        %v6009 = vadd.f32 %v5920, %v6008
        %v6010 = vpop.f32.mrf.mxu0
        %v6011 = vadd.f32 %v5922, %v6010
        %6012 = vmatmul.bf16.gmra.mxu0 %v5584
        %v6013 = vpop.f32.mrf.mxu0
        %v6014 = vadd.f32 %v5925, %v6013
        %v6015 = vpop.f32.mrf.mxu0
        %v6016 = vadd.f32 %v5927, %v6015
        %6017 = vmatmul.bf16.gmra.mxu0 %v5592
        %v6018 = vpop.f32.mrf.mxu0
        %v6019 = vadd.f32 %v5930, %v6018
        %v6020 = vpop.f32.mrf.mxu0
        %v6021 = vadd.f32 %v5932, %v6020
        %6022 = vmatmul.bf16.gmra.mxu0 %v5600
        %v6023 = vpop.f32.mrf.mxu0
        %v6024 = vadd.f32 %v5935, %v6023
        %v6025 = vpop.f32.mrf.mxu0
        %v6026 = vadd.f32 %v5937, %v6025
        %6027 = vmatmul.bf16.gmra.mxu0 %v5608
        %v6028 = vpop.f32.mrf.mxu0
        %v6029 = vadd.f32 %v5940, %v6028
        %v6030 = vpop.f32.mrf.mxu0
        %v6031 = vadd.f32 %v5942, %v6030
        %6032 = vmatmul.bf16.gmra.mxu0 %v5616
        %v6033 = vpop.f32.mrf.mxu0
        %v6034 = vadd.f32 %v5945, %v6033
        %v6035 = vpop.f32.mrf.mxu0
        %v6036 = vadd.f32 %v5947, %v6035
        %6037 = vmatmul.bf16.gmra.mxu0 %v5624
        %v6038 = vpop.f32.mrf.mxu0
        %v6039 = vadd.f32 %v5950, %v6038
        %v6040 = vpop.f32.mrf.mxu0
        %v6041 = vadd.f32 %v5952, %v6040
        %6042 = vmatmul.bf16.gmra.mxu0 %v5632
        %v6043 = vpop.f32.mrf.mxu0
        %v6044 = vadd.f32 %v5955, %v6043
        %v6045 = vpop.f32.mrf.mxu0
        %v6046 = vadd.f32 %v5957, %v6045
        %6047 = vmatmul.bf16.gmra.mxu0 %v5640
        %v6048 = vpop.f32.mrf.mxu0
        %v6049 = vadd.f32 %v5960, %v6048
        %v6050 = vpop.f32.mrf.mxu0
        %v6051 = vadd.f32 %v5962, %v6050
        %6052 = vmatmul.bf16.gmra.mxu0 %v5648
        %v6053 = vpop.f32.mrf.mxu0
        %v6054 = vadd.f32 %v5965, %v6053
        %v6055 = vpop.f32.mrf.mxu0
        %v6056 = vadd.f32 %v5967, %v6055
        %6057 = vmatmul.bf16.gmra.mxu0 %v5656
        %v6058 = vpop.f32.mrf.mxu0
        %v6059 = vadd.f32 %v5970, %v6058
        %v6060 = vpop.f32.mrf.mxu0
        %v6061 = vadd.f32 %v5972, %v6060
        %6062 = vmatmul.bf16.gmra.mxu0 %v5664
        %v6063 = vpop.f32.mrf.mxu0
        %v6064 = vadd.f32 %v5975, %v6063
        %v6065 = vpop.f32.mrf.mxu0
        %v6066 = vadd.f32 %v5977, %v6065
        %6067 = vmatmul.bf16.gmra.mxu0 %v5672
        %v6068 = vpop.f32.mrf.mxu0
        %v6069 = vadd.f32 %v5980, %v6068
        %v6070 = vpop.f32.mrf.mxu0
        %v6071 = vadd.f32 %v5982, %v6070
        %6072 = vdwg.mxu0
        %6073 = vmatpush.bf16.msra.mxu0 %v4813
        %6074 = vmatpush.bf16.msra.mxu0 %v4812
        %6075 = vmatpush.bf16.msra.mxu0 %v4811
        %6076 = vmatpush.bf16.msra.mxu0 %v4810
        %6077 = vmatpush.bf16.msra.mxu0 %v4809
        %6078 = vmatpush.bf16.msra.mxu0 %v4808
        %6079 = vmatpush.bf16.msra.mxu0 %v4807
        %6080 = vmatpush.bf16.msra.mxu0 %v4806
        %6081 = vmatmul.bf16.gmra.mxu0 %v5553
        %v6082 = vpop.f32.mrf.mxu0
        %v6083 = vadd.f32 %v5994, %v6082
        %v6084 = vpop.f32.mrf.mxu0
        %v6085 = vadd.f32 %v5996, %v6084
        %6086 = vmatmul.bf16.gmra.mxu0 %v5561
        %v6087 = vpop.f32.mrf.mxu0
        %v6088 = vadd.f32 %v5999, %v6087
        %v6089 = vpop.f32.mrf.mxu0
        %v6090 = vadd.f32 %v6001, %v6089
        %6091 = vmatmul.bf16.gmra.mxu0 %v5569
        %v6092 = vpop.f32.mrf.mxu0
        %v6093 = vadd.f32 %v6004, %v6092
        %v6094 = vpop.f32.mrf.mxu0
        %v6095 = vadd.f32 %v6006, %v6094
        %6096 = vmatmul.bf16.gmra.mxu0 %v5577
        %v6097 = vpop.f32.mrf.mxu0
        %v6098 = vadd.f32 %v6009, %v6097
        %v6099 = vpop.f32.mrf.mxu0
        %v6100 = vadd.f32 %v6011, %v6099
        %6101 = vmatmul.bf16.gmra.mxu0 %v5585
        %v6102 = vpop.f32.mrf.mxu0
        %v6103 = vadd.f32 %v6014, %v6102
        %v6104 = vpop.f32.mrf.mxu0
        %v6105 = vadd.f32 %v6016, %v6104
        %6106 = vmatmul.bf16.gmra.mxu0 %v5593
        %v6107 = vpop.f32.mrf.mxu0
        %v6108 = vadd.f32 %v6019, %v6107
        %v6109 = vpop.f32.mrf.mxu0
        %v6110 = vadd.f32 %v6021, %v6109
        %6111 = vmatmul.bf16.gmra.mxu0 %v5601
        %v6112 = vpop.f32.mrf.mxu0
        %v6113 = vadd.f32 %v6024, %v6112
        %v6114 = vpop.f32.mrf.mxu0
        %v6115 = vadd.f32 %v6026, %v6114
        %6116 = vmatmul.bf16.gmra.mxu0 %v5609
        %v6117 = vpop.f32.mrf.mxu0
        %v6118 = vadd.f32 %v6029, %v6117
        %v6119 = vpop.f32.mrf.mxu0
        %v6120 = vadd.f32 %v6031, %v6119
        %6121 = vmatmul.bf16.gmra.mxu0 %v5617
        %v6122 = vpop.f32.mrf.mxu0
        %v6123 = vadd.f32 %v6034, %v6122
        %v6124 = vpop.f32.mrf.mxu0
        %v6125 = vadd.f32 %v6036, %v6124
        %6126 = vmatmul.bf16.gmra.mxu0 %v5625
        %v6127 = vpop.f32.mrf.mxu0
        %v6128 = vadd.f32 %v6039, %v6127
        %v6129 = vpop.f32.mrf.mxu0
        %v6130 = vadd.f32 %v6041, %v6129
        %6131 = vmatmul.bf16.gmra.mxu0 %v5633
        %v6132 = vpop.f32.mrf.mxu0
        %v6133 = vadd.f32 %v6044, %v6132
        %v6134 = vpop.f32.mrf.mxu0
        %v6135 = vadd.f32 %v6046, %v6134
        %6136 = vmatmul.bf16.gmra.mxu0 %v5641
        %v6137 = vpop.f32.mrf.mxu0
        %v6138 = vadd.f32 %v6049, %v6137
        %v6139 = vpop.f32.mrf.mxu0
        %v6140 = vadd.f32 %v6051, %v6139
        %6141 = vmatmul.bf16.gmra.mxu0 %v5649
        %v6142 = vpop.f32.mrf.mxu0
        %v6143 = vadd.f32 %v6054, %v6142
        %v6144 = vpop.f32.mrf.mxu0
        %v6145 = vadd.f32 %v6056, %v6144
        %6146 = vmatmul.bf16.gmra.mxu0 %v5657
        %v6147 = vpop.f32.mrf.mxu0
        %v6148 = vadd.f32 %v6059, %v6147
        %v6149 = vpop.f32.mrf.mxu0
        %v6150 = vadd.f32 %v6061, %v6149
        %6151 = vmatmul.bf16.gmra.mxu0 %v5665
        %v6152 = vpop.f32.mrf.mxu0
        %v6153 = vadd.f32 %v6064, %v6152
        %v6154 = vpop.f32.mrf.mxu0
        %v6155 = vadd.f32 %v6066, %v6154
        %6156 = vmatmul.bf16.gmra.mxu0 %v5673
        %v6157 = vpop.f32.mrf.mxu0
        %v6158 = vadd.f32 %v6069, %v6157
        %v6159 = vpop.f32.mrf.mxu0
        %v6160 = vadd.f32 %v6071, %v6159
        %6161 = vdwg.mxu0
        %6162 = vmatpush.bf16.msra.mxu0 %v4821
        %6163 = vmatpush.bf16.msra.mxu0 %v4820
        %6164 = vmatpush.bf16.msra.mxu0 %v4819
        %6165 = vmatpush.bf16.msra.mxu0 %v4818
        %6166 = vmatpush.bf16.msra.mxu0 %v4817
        %6167 = vmatpush.bf16.msra.mxu0 %v4816
        %6168 = vmatpush.bf16.msra.mxu0 %v4815
        %6169 = vmatpush.bf16.msra.mxu0 %v4814
        %6170 = vmatmul.bf16.gmra.mxu0 %v5554
        %v6171 = vpop.f32.mrf.mxu0
        %v6172 = vadd.f32 %v6083, %v6171
        %v6173 = vpop.f32.mrf.mxu0
        %v6174 = vadd.f32 %v6085, %v6173
        %6175 = vmatmul.bf16.gmra.mxu0 %v5562
        %v6176 = vpop.f32.mrf.mxu0
        %v6177 = vadd.f32 %v6088, %v6176
        %v6178 = vpop.f32.mrf.mxu0
        %v6179 = vadd.f32 %v6090, %v6178
        %6180 = vmatmul.bf16.gmra.mxu0 %v5570
        %v6181 = vpop.f32.mrf.mxu0
        %v6182 = vadd.f32 %v6093, %v6181
        %v6183 = vpop.f32.mrf.mxu0
        %v6184 = vadd.f32 %v6095, %v6183
        %6185 = vmatmul.bf16.gmra.mxu0 %v5578
        %v6186 = vpop.f32.mrf.mxu0
        %v6187 = vadd.f32 %v6098, %v6186
        %v6188 = vpop.f32.mrf.mxu0
        %v6189 = vadd.f32 %v6100, %v6188
        %6190 = vmatmul.bf16.gmra.mxu0 %v5586
        %v6191 = vpop.f32.mrf.mxu0
        %v6192 = vadd.f32 %v6103, %v6191
        %v6193 = vpop.f32.mrf.mxu0
        %v6194 = vadd.f32 %v6105, %v6193
        %6195 = vmatmul.bf16.gmra.mxu0 %v5594
        %v6196 = vpop.f32.mrf.mxu0
        %v6197 = vadd.f32 %v6108, %v6196
        %v6198 = vpop.f32.mrf.mxu0
        %v6199 = vadd.f32 %v6110, %v6198
        %6200 = vmatmul.bf16.gmra.mxu0 %v5602
        %v6201 = vpop.f32.mrf.mxu0
        %v6202 = vadd.f32 %v6113, %v6201
        %v6203 = vpop.f32.mrf.mxu0
        %v6204 = vadd.f32 %v6115, %v6203
        %6205 = vmatmul.bf16.gmra.mxu0 %v5610
        %v6206 = vpop.f32.mrf.mxu0
        %v6207 = vadd.f32 %v6118, %v6206
        %v6208 = vpop.f32.mrf.mxu0
        %v6209 = vadd.f32 %v6120, %v6208
        %6210 = vmatmul.bf16.gmra.mxu0 %v5618
        %v6211 = vpop.f32.mrf.mxu0
        %v6212 = vadd.f32 %v6123, %v6211
        %v6213 = vpop.f32.mrf.mxu0
        %v6214 = vadd.f32 %v6125, %v6213
        %6215 = vmatmul.bf16.gmra.mxu0 %v5626
        %v6216 = vpop.f32.mrf.mxu0
        %v6217 = vadd.f32 %v6128, %v6216
        %v6218 = vpop.f32.mrf.mxu0
        %v6219 = vadd.f32 %v6130, %v6218
        %6220 = vmatmul.bf16.gmra.mxu0 %v5634
        %v6221 = vpop.f32.mrf.mxu0
        %v6222 = vadd.f32 %v6133, %v6221
        %v6223 = vpop.f32.mrf.mxu0
        %v6224 = vadd.f32 %v6135, %v6223
        %6225 = vmatmul.bf16.gmra.mxu0 %v5642
        %v6226 = vpop.f32.mrf.mxu0
        %v6227 = vadd.f32 %v6138, %v6226
        %v6228 = vpop.f32.mrf.mxu0
        %v6229 = vadd.f32 %v6140, %v6228
        %6230 = vmatmul.bf16.gmra.mxu0 %v5650
        %v6231 = vpop.f32.mrf.mxu0
        %v6232 = vadd.f32 %v6143, %v6231
        %v6233 = vpop.f32.mrf.mxu0
        %v6234 = vadd.f32 %v6145, %v6233
        %6235 = vmatmul.bf16.gmra.mxu0 %v5658
        %v6236 = vpop.f32.mrf.mxu0
        %v6237 = vadd.f32 %v6148, %v6236
        %v6238 = vpop.f32.mrf.mxu0
        %v6239 = vadd.f32 %v6150, %v6238
        %6240 = vmatmul.bf16.gmra.mxu0 %v5666
        %v6241 = vpop.f32.mrf.mxu0
        %v6242 = vadd.f32 %v6153, %v6241
        %v6243 = vpop.f32.mrf.mxu0
        %v6244 = vadd.f32 %v6155, %v6243
        %6245 = vmatmul.bf16.gmra.mxu0 %v5674
        %v6246 = vpop.f32.mrf.mxu0
        %v6247 = vadd.f32 %v6158, %v6246
        %v6248 = vpop.f32.mrf.mxu0
        %v6249 = vadd.f32 %v6160, %v6248
        %6250 = vdwg.mxu0
        %6251 = vmatpush.bf16.msra.mxu0 %v4829
        %6252 = vmatpush.bf16.msra.mxu0 %v4828
        %6253 = vmatpush.bf16.msra.mxu0 %v4827
        %6254 = vmatpush.bf16.msra.mxu0 %v4826
        %6255 = vmatpush.bf16.msra.mxu0 %v4825
        %6256 = vmatpush.bf16.msra.mxu0 %v4824
        %6257 = vmatpush.bf16.msra.mxu0 %v4823
        %6258 = vmatpush.bf16.msra.mxu0 %v4822
        %6259 = vmatmul.bf16.gmra.mxu0 %v5555
        %v6260 = vpop.f32.mrf.mxu0
        %v6261 = vadd.f32 %v6172, %v6260
        %v6262 = vpop.f32.mrf.mxu0
        %v6263 = vadd.f32 %v6174, %v6262
        %6264 = vmatmul.bf16.gmra.mxu0 %v5563
        %v6265 = vpop.f32.mrf.mxu0
        %v6266 = vadd.f32 %v6177, %v6265
        %v6267 = vpop.f32.mrf.mxu0
        %v6268 = vadd.f32 %v6179, %v6267
        %6269 = vmatmul.bf16.gmra.mxu0 %v5571
        %v6270 = vpop.f32.mrf.mxu0
        %v6271 = vadd.f32 %v6182, %v6270
        %v6272 = vpop.f32.mrf.mxu0
        %v6273 = vadd.f32 %v6184, %v6272
        %6274 = vmatmul.bf16.gmra.mxu0 %v5579
        %v6275 = vpop.f32.mrf.mxu0
        %v6276 = vadd.f32 %v6187, %v6275
        %v6277 = vpop.f32.mrf.mxu0
        %v6278 = vadd.f32 %v6189, %v6277
        %6279 = vmatmul.bf16.gmra.mxu0 %v5587
        %v6280 = vpop.f32.mrf.mxu0
        %v6281 = vadd.f32 %v6192, %v6280
        %v6282 = vpop.f32.mrf.mxu0
        %v6283 = vadd.f32 %v6194, %v6282
        %6284 = vmatmul.bf16.gmra.mxu0 %v5595
        %v6285 = vpop.f32.mrf.mxu0
        %v6286 = vadd.f32 %v6197, %v6285
        %v6287 = vpop.f32.mrf.mxu0
        %v6288 = vadd.f32 %v6199, %v6287
        %6289 = vmatmul.bf16.gmra.mxu0 %v5603
        %v6290 = vpop.f32.mrf.mxu0
        %v6291 = vadd.f32 %v6202, %v6290
        %v6292 = vpop.f32.mrf.mxu0
        %v6293 = vadd.f32 %v6204, %v6292
        %6294 = vmatmul.bf16.gmra.mxu0 %v5611
        %v6295 = vpop.f32.mrf.mxu0
        %v6296 = vadd.f32 %v6207, %v6295
        %v6297 = vpop.f32.mrf.mxu0
        %v6298 = vadd.f32 %v6209, %v6297
        %6299 = vmatmul.bf16.gmra.mxu0 %v5619
        %v6300 = vpop.f32.mrf.mxu0
        %v6301 = vadd.f32 %v6212, %v6300
        %v6302 = vpop.f32.mrf.mxu0
        %v6303 = vadd.f32 %v6214, %v6302
        %6304 = vmatmul.bf16.gmra.mxu0 %v5627
        %v6305 = vpop.f32.mrf.mxu0
        %v6306 = vadd.f32 %v6217, %v6305
        %v6307 = vpop.f32.mrf.mxu0
        %v6308 = vadd.f32 %v6219, %v6307
        %6309 = vmatmul.bf16.gmra.mxu0 %v5635
        %v6310 = vpop.f32.mrf.mxu0
        %v6311 = vadd.f32 %v6222, %v6310
        %v6312 = vpop.f32.mrf.mxu0
        %v6313 = vadd.f32 %v6224, %v6312
        %6314 = vmatmul.bf16.gmra.mxu0 %v5643
        %v6315 = vpop.f32.mrf.mxu0
        %v6316 = vadd.f32 %v6227, %v6315
        %v6317 = vpop.f32.mrf.mxu0
        %v6318 = vadd.f32 %v6229, %v6317
        %6319 = vmatmul.bf16.gmra.mxu0 %v5651
        %v6320 = vpop.f32.mrf.mxu0
        %v6321 = vadd.f32 %v6232, %v6320
        %v6322 = vpop.f32.mrf.mxu0
        %v6323 = vadd.f32 %v6234, %v6322
        %6324 = vmatmul.bf16.gmra.mxu0 %v5659
        %v6325 = vpop.f32.mrf.mxu0
        %v6326 = vadd.f32 %v6237, %v6325
        %v6327 = vpop.f32.mrf.mxu0
        %v6328 = vadd.f32 %v6239, %v6327
        %6329 = vmatmul.bf16.gmra.mxu0 %v5667
        %v6330 = vpop.f32.mrf.mxu0
        %v6331 = vadd.f32 %v6242, %v6330
        %v6332 = vpop.f32.mrf.mxu0
        %v6333 = vadd.f32 %v6244, %v6332
        %6334 = vmatmul.bf16.gmra.mxu0 %v5675
        %v6335 = vpop.f32.mrf.mxu0
        %v6336 = vadd.f32 %v6247, %v6335
        %v6337 = vpop.f32.mrf.mxu0
        %v6338 = vadd.f32 %v6249, %v6337
        %6339 = vdwg.mxu0
        %6340 = vmatpush.bf16.msra.mxu0 %v4837
        %6341 = vmatpush.bf16.msra.mxu0 %v4836
        %6342 = vmatpush.bf16.msra.mxu0 %v4835
        %6343 = vmatpush.bf16.msra.mxu0 %v4834
        %6344 = vmatpush.bf16.msra.mxu0 %v4833
        %6345 = vmatpush.bf16.msra.mxu0 %v4832
        %6346 = vmatpush.bf16.msra.mxu0 %v4831
        %6347 = vmatpush.bf16.msra.mxu0 %v4830
        %6348 = vmatmul.bf16.gmra.mxu0 %v5556
        %v6349 = vpop.f32.mrf.mxu0
        %v6350 = vadd.f32 %v6261, %v6349
        %v6351 = vpop.f32.mrf.mxu0
        %v6352 = vadd.f32 %v6263, %v6351
        %6353 = vmatmul.bf16.gmra.mxu0 %v5564
        %v6354 = vpop.f32.mrf.mxu0
        %v6355 = vadd.f32 %v6266, %v6354
        %v6356 = vpop.f32.mrf.mxu0
        %v6357 = vadd.f32 %v6268, %v6356
        %6358 = vmatmul.bf16.gmra.mxu0 %v5572
        %v6359 = vpop.f32.mrf.mxu0
        %v6360 = vadd.f32 %v6271, %v6359
        %v6361 = vpop.f32.mrf.mxu0
        %v6362 = vadd.f32 %v6273, %v6361
        %6363 = vmatmul.bf16.gmra.mxu0 %v5580
        %v6364 = vpop.f32.mrf.mxu0
        %v6365 = vadd.f32 %v6276, %v6364
        %v6366 = vpop.f32.mrf.mxu0
        %v6367 = vadd.f32 %v6278, %v6366
        %6368 = vmatmul.bf16.gmra.mxu0 %v5588
        %v6369 = vpop.f32.mrf.mxu0
        %v6370 = vadd.f32 %v6281, %v6369
        %v6371 = vpop.f32.mrf.mxu0
        %v6372 = vadd.f32 %v6283, %v6371
        %6373 = vmatmul.bf16.gmra.mxu0 %v5596
        %v6374 = vpop.f32.mrf.mxu0
        %v6375 = vadd.f32 %v6286, %v6374
        %v6376 = vpop.f32.mrf.mxu0
        %v6377 = vadd.f32 %v6288, %v6376
        %6378 = vmatmul.bf16.gmra.mxu0 %v5604
        %v6379 = vpop.f32.mrf.mxu0
        %v6380 = vadd.f32 %v6291, %v6379
        %v6381 = vpop.f32.mrf.mxu0
        %v6382 = vadd.f32 %v6293, %v6381
        %6383 = vmatmul.bf16.gmra.mxu0 %v5612
        %v6384 = vpop.f32.mrf.mxu0
        %v6385 = vadd.f32 %v6296, %v6384
        %v6386 = vpop.f32.mrf.mxu0
        %v6387 = vadd.f32 %v6298, %v6386
        %6388 = vmatmul.bf16.gmra.mxu0 %v5620
        %v6389 = vpop.f32.mrf.mxu0
        %v6390 = vadd.f32 %v6301, %v6389
        %v6391 = vpop.f32.mrf.mxu0
        %v6392 = vadd.f32 %v6303, %v6391
        %6393 = vmatmul.bf16.gmra.mxu0 %v5628
        %v6394 = vpop.f32.mrf.mxu0
        %v6395 = vadd.f32 %v6306, %v6394
        %v6396 = vpop.f32.mrf.mxu0
        %v6397 = vadd.f32 %v6308, %v6396
        %6398 = vmatmul.bf16.gmra.mxu0 %v5636
        %v6399 = vpop.f32.mrf.mxu0
        %v6400 = vadd.f32 %v6311, %v6399
        %v6401 = vpop.f32.mrf.mxu0
        %v6402 = vadd.f32 %v6313, %v6401
        %6403 = vmatmul.bf16.gmra.mxu0 %v5644
        %v6404 = vpop.f32.mrf.mxu0
        %v6405 = vadd.f32 %v6316, %v6404
        %v6406 = vpop.f32.mrf.mxu0
        %v6407 = vadd.f32 %v6318, %v6406
        %6408 = vmatmul.bf16.gmra.mxu0 %v5652
        %v6409 = vpop.f32.mrf.mxu0
        %v6410 = vadd.f32 %v6321, %v6409
        %v6411 = vpop.f32.mrf.mxu0
        %v6412 = vadd.f32 %v6323, %v6411
        %6413 = vmatmul.bf16.gmra.mxu0 %v5660
        %v6414 = vpop.f32.mrf.mxu0
        %v6415 = vadd.f32 %v6326, %v6414
        %v6416 = vpop.f32.mrf.mxu0
        %v6417 = vadd.f32 %v6328, %v6416
        %6418 = vmatmul.bf16.gmra.mxu0 %v5668
        %v6419 = vpop.f32.mrf.mxu0
        %v6420 = vadd.f32 %v6331, %v6419
        %v6421 = vpop.f32.mrf.mxu0
        %v6422 = vadd.f32 %v6333, %v6421
        %6423 = vmatmul.bf16.gmra.mxu0 %v5676
        %v6424 = vpop.f32.mrf.mxu0
        %v6425 = vadd.f32 %v6336, %v6424
        %v6426 = vpop.f32.mrf.mxu0
        %v6427 = vadd.f32 %v6338, %v6426
        %6428 = vdwg.mxu0
        %6429 = vmatpush.bf16.msra.mxu0 %v4845
        %6430 = vmatpush.bf16.msra.mxu0 %v4844
        %6431 = vmatpush.bf16.msra.mxu0 %v4843
        %6432 = vmatpush.bf16.msra.mxu0 %v4842
        %6433 = vmatpush.bf16.msra.mxu0 %v4841
        %6434 = vmatpush.bf16.msra.mxu0 %v4840
        %6435 = vmatpush.bf16.msra.mxu0 %v4839
        %6436 = vmatpush.bf16.msra.mxu0 %v4838
        %6437 = vmatmul.bf16.gmra.mxu0 %v5557
        %v6438 = vpop.f32.mrf.mxu0
        %v6439 = vadd.f32 %v6350, %v6438
        %v6440 = vpop.f32.mrf.mxu0
        %v6441 = vadd.f32 %v6352, %v6440
        %6442 = vmatmul.bf16.gmra.mxu0 %v5565
        %v6443 = vpop.f32.mrf.mxu0
        %v6444 = vadd.f32 %v6355, %v6443
        %v6445 = vpop.f32.mrf.mxu0
        %v6446 = vadd.f32 %v6357, %v6445
        %6447 = vmatmul.bf16.gmra.mxu0 %v5573
        %v6448 = vpop.f32.mrf.mxu0
        %v6449 = vadd.f32 %v6360, %v6448
        %v6450 = vpop.f32.mrf.mxu0
        %v6451 = vadd.f32 %v6362, %v6450
        %6452 = vmatmul.bf16.gmra.mxu0 %v5581
        %v6453 = vpop.f32.mrf.mxu0
        %v6454 = vadd.f32 %v6365, %v6453
        %v6455 = vpop.f32.mrf.mxu0
        %v6456 = vadd.f32 %v6367, %v6455
        %6457 = vmatmul.bf16.gmra.mxu0 %v5589
        %v6458 = vpop.f32.mrf.mxu0
        %v6459 = vadd.f32 %v6370, %v6458
        %v6460 = vpop.f32.mrf.mxu0
        %v6461 = vadd.f32 %v6372, %v6460
        %6462 = vmatmul.bf16.gmra.mxu0 %v5597
        %v6463 = vpop.f32.mrf.mxu0
        %v6464 = vadd.f32 %v6375, %v6463
        %v6465 = vpop.f32.mrf.mxu0
        %v6466 = vadd.f32 %v6377, %v6465
        %6467 = vmatmul.bf16.gmra.mxu0 %v5605
        %v6468 = vpop.f32.mrf.mxu0
        %v6469 = vadd.f32 %v6380, %v6468
        %v6470 = vpop.f32.mrf.mxu0
        %v6471 = vadd.f32 %v6382, %v6470
        %6472 = vmatmul.bf16.gmra.mxu0 %v5613
        %v6473 = vpop.f32.mrf.mxu0
        %v6474 = vadd.f32 %v6385, %v6473
        %v6475 = vpop.f32.mrf.mxu0
        %v6476 = vadd.f32 %v6387, %v6475
        %6477 = vmatmul.bf16.gmra.mxu0 %v5621
        %v6478 = vpop.f32.mrf.mxu0
        %v6479 = vadd.f32 %v6390, %v6478
        %v6480 = vpop.f32.mrf.mxu0
        %v6481 = vadd.f32 %v6392, %v6480
        %6482 = vmatmul.bf16.gmra.mxu0 %v5629
        %v6483 = vpop.f32.mrf.mxu0
        %v6484 = vadd.f32 %v6395, %v6483
        %v6485 = vpop.f32.mrf.mxu0
        %v6486 = vadd.f32 %v6397, %v6485
        %6487 = vmatmul.bf16.gmra.mxu0 %v5637
        %v6488 = vpop.f32.mrf.mxu0
        %v6489 = vadd.f32 %v6400, %v6488
        %v6490 = vpop.f32.mrf.mxu0
        %v6491 = vadd.f32 %v6402, %v6490
        %6492 = vmatmul.bf16.gmra.mxu0 %v5645
        %v6493 = vpop.f32.mrf.mxu0
        %v6494 = vadd.f32 %v6405, %v6493
        %v6495 = vpop.f32.mrf.mxu0
        %v6496 = vadd.f32 %v6407, %v6495
        %6497 = vmatmul.bf16.gmra.mxu0 %v5653
        %v6498 = vpop.f32.mrf.mxu0
        %v6499 = vadd.f32 %v6410, %v6498
        %v6500 = vpop.f32.mrf.mxu0
        %v6501 = vadd.f32 %v6412, %v6500
        %6502 = vmatmul.bf16.gmra.mxu0 %v5661
        %v6503 = vpop.f32.mrf.mxu0
        %v6504 = vadd.f32 %v6415, %v6503
        %v6505 = vpop.f32.mrf.mxu0
        %v6506 = vadd.f32 %v6417, %v6505
        %6507 = vmatmul.bf16.gmra.mxu0 %v5669
        %v6508 = vpop.f32.mrf.mxu0
        %v6509 = vadd.f32 %v6420, %v6508
        %v6510 = vpop.f32.mrf.mxu0
        %v6511 = vadd.f32 %v6422, %v6510
        %6512 = vmatmul.bf16.gmra.mxu0 %v5677
        %v6513 = vpop.f32.mrf.mxu0
        %v6514 = vadd.f32 %v6425, %v6513
        %v6515 = vpop.f32.mrf.mxu0
        %v6516 = vadd.f32 %v6427, %v6515
        %6517 = vdwg.mxu0
        %v6518 = vmax.f32 %v6439, 0.0
        %v6519 = vmax.f32 %v6441, 0.0
        %v6520 = vmax.f32 %v6444, 0.0
        %v6521 = vmax.f32 %v6446, 0.0
        %v6522 = vmax.f32 %v6449, 0.0
        %v6523 = vmax.f32 %v6451, 0.0
        %v6524 = vmax.f32 %v6454, 0.0
        %v6525 = vmax.f32 %v6456, 0.0
        %v6526 = vmax.f32 %v6459, 0.0
        %v6527 = vmax.f32 %v6461, 0.0
        %v6528 = vmax.f32 %v6464, 0.0
        %v6529 = vmax.f32 %v6466, 0.0
        %v6530 = vmax.f32 %v6469, 0.0
        %v6531 = vmax.f32 %v6471, 0.0
        %v6532 = vmax.f32 %v6474, 0.0
        %v6533 = vmax.f32 %v6476, 0.0
        %v6534 = vmax.f32 %v6479, 0.0
        %v6535 = vmax.f32 %v6481, 0.0
        %v6536 = vmax.f32 %v6484, 0.0
        %v6537 = vmax.f32 %v6486, 0.0
        %v6538 = vmax.f32 %v6489, 0.0
        %v6539 = vmax.f32 %v6491, 0.0
        %v6540 = vmax.f32 %v6494, 0.0
        %v6541 = vmax.f32 %v6496, 0.0
        %v6542 = vmax.f32 %v6499, 0.0
        %v6543 = vmax.f32 %v6501, 0.0
        %v6544 = vmax.f32 %v6504, 0.0
        %v6545 = vmax.f32 %v6506, 0.0
        %v6546 = vmax.f32 %v6509, 0.0
        %v6547 = vmax.f32 %v6511, 0.0
        %v6548 = vmax.f32 %v6514, 0.0
        %v6549 = vmax.f32 %v6516, 0.0
        %v6550 = vld [vmem:[%s7] sm:$0xff]
        %v6551 = vld [vmem:[%s7 + $0x8] sm:$0xff]
        %v6552 = vld [vmem:[%s7 + $0x10] sm:$0xff]
        %v6553 = vld [vmem:[%s7 + $0x18] sm:$0xff]
        %v6554 = vld [vmem:[%s7 + $0x20] sm:$0xff]
        %v6555 = vld [vmem:[%s7 + $0x28] sm:$0xff]
        %v6556 = vld [vmem:[%s7 + $0x30] sm:$0xff]
        %v6557 = vld [vmem:[%s7 + $0x38] sm:$0xff]
        %v6558 = vld [vmem:[%s7 + $0x40] sm:$0xff]
        %v6559 = vld [vmem:[%s7 + $0x48] sm:$0xff]
        %v6560 = vld [vmem:[%s7 + $0x50] sm:$0xff]
        %v6561 = vld [vmem:[%s7 + $0x58] sm:$0xff]
        %v6562 = vld [vmem:[%s7 + $0x60] sm:$0xff]
        %v6563 = vld [vmem:[%s7 + $0x68] sm:$0xff]
        %v6564 = vld [vmem:[%s7 + $0x70] sm:$0xff]
        %v6565 = vld [vmem:[%s7 + $0x78] sm:$0xff]
        %v6566 = vld [vmem:[%s7 + $0x80] sm:$0xff]
        %v6567 = vld [vmem:[%s7 + $0x88] sm:$0xff]
        %v6568 = vld [vmem:[%s7 + $0x90] sm:$0xff]
        %v6569 = vld [vmem:[%s7 + $0x98] sm:$0xff]
        %v6570 = vld [vmem:[%s7 + $0xa0] sm:$0xff]
        %v6571 = vld [vmem:[%s7 + $0xa8] sm:$0xff]
        %v6572 = vld [vmem:[%s7 + $0xb0] sm:$0xff]
        %v6573 = vld [vmem:[%s7 + $0xb8] sm:$0xff]
        %v6574 = vld [vmem:[%s7 + $0xc0] sm:$0xff]
        %v6575 = vld [vmem:[%s7 + $0xc8] sm:$0xff]
        %v6576 = vld [vmem:[%s7 + $0xd0] sm:$0xff]
        %v6577 = vld [vmem:[%s7 + $0xd8] sm:$0xff]
        %v6578 = vld [vmem:[%s7 + $0xe0] sm:$0xff]
        %v6579 = vld [vmem:[%s7 + $0xe8] sm:$0xff]
        %v6580 = vld [vmem:[%s7 + $0xf0] sm:$0xff]
        %v6581 = vld [vmem:[%s7 + $0xf8] sm:$0xff]
        %6583 = vset.pattern.permute.xlu0 0
        %6584 = vperm.xlu0 %6583, %v6550
        %v6585 = vpop.permute.xlu0 %6584
        %6588 = vset.pattern.permute.xlu0 0
        %6589 = vperm.xlu0 %6588, %v6551
        %v6590 = vpop.permute.xlu0 %6589
        %6593 = vset.pattern.permute.xlu0 0
        %6594 = vperm.xlu0 %6593, %v6552
        %v6595 = vpop.permute.xlu0 %6594
        %6598 = vset.pattern.permute.xlu0 0
        %6599 = vperm.xlu0 %6598, %v6553
        %v6600 = vpop.permute.xlu0 %6599
        %6603 = vset.pattern.permute.xlu0 0
        %6604 = vperm.xlu0 %6603, %v6554
        %v6605 = vpop.permute.xlu0 %6604
        %6608 = vset.pattern.permute.xlu0 0
        %6609 = vperm.xlu0 %6608, %v6555
        %v6610 = vpop.permute.xlu0 %6609
        %6613 = vset.pattern.permute.xlu0 0
        %6614 = vperm.xlu0 %6613, %v6556
        %v6615 = vpop.permute.xlu0 %6614
        %6618 = vset.pattern.permute.xlu0 0
        %6619 = vperm.xlu0 %6618, %v6557
        %v6620 = vpop.permute.xlu0 %6619
        %6623 = vset.pattern.permute.xlu0 0
        %6624 = vperm.xlu0 %6623, %v6558
        %v6625 = vpop.permute.xlu0 %6624
        %6628 = vset.pattern.permute.xlu0 0
        %6629 = vperm.xlu0 %6628, %v6559
        %v6630 = vpop.permute.xlu0 %6629
        %6633 = vset.pattern.permute.xlu0 0
        %6634 = vperm.xlu0 %6633, %v6560
        %v6635 = vpop.permute.xlu0 %6634
        %6638 = vset.pattern.permute.xlu0 0
        %6639 = vperm.xlu0 %6638, %v6561
        %v6640 = vpop.permute.xlu0 %6639
        %6643 = vset.pattern.permute.xlu0 0
        %6644 = vperm.xlu0 %6643, %v6562
        %v6645 = vpop.permute.xlu0 %6644
        %6648 = vset.pattern.permute.xlu0 0
        %6649 = vperm.xlu0 %6648, %v6563
        %v6650 = vpop.permute.xlu0 %6649
        %6653 = vset.pattern.permute.xlu0 0
        %6654 = vperm.xlu0 %6653, %v6564
        %v6655 = vpop.permute.xlu0 %6654
        %6658 = vset.pattern.permute.xlu0 0
        %6659 = vperm.xlu0 %6658, %v6565
        %v6660 = vpop.permute.xlu0 %6659
        %6663 = vset.pattern.permute.xlu0 0
        %6664 = vperm.xlu0 %6663, %v6566
        %v6665 = vpop.permute.xlu0 %6664
        %6668 = vset.pattern.permute.xlu0 0
        %6669 = vperm.xlu0 %6668, %v6567
        %v6670 = vpop.permute.xlu0 %6669
        %6673 = vset.pattern.permute.xlu0 0
        %6674 = vperm.xlu0 %6673, %v6568
        %v6675 = vpop.permute.xlu0 %6674
        %6678 = vset.pattern.permute.xlu0 0
        %6679 = vperm.xlu0 %6678, %v6569
        %v6680 = vpop.permute.xlu0 %6679
        %6683 = vset.pattern.permute.xlu0 0
        %6684 = vperm.xlu0 %6683, %v6570
        %v6685 = vpop.permute.xlu0 %6684
        %6688 = vset.pattern.permute.xlu0 0
        %6689 = vperm.xlu0 %6688, %v6571
        %v6690 = vpop.permute.xlu0 %6689
        %6693 = vset.pattern.permute.xlu0 0
        %6694 = vperm.xlu0 %6693, %v6572
        %v6695 = vpop.permute.xlu0 %6694
        %6698 = vset.pattern.permute.xlu0 0
        %6699 = vperm.xlu0 %6698, %v6573
        %v6700 = vpop.permute.xlu0 %6699
        %6703 = vset.pattern.permute.xlu0 0
        %6704 = vperm.xlu0 %6703, %v6574
        %v6705 = vpop.permute.xlu0 %6704
        %6708 = vset.pattern.permute.xlu0 0
        %6709 = vperm.xlu0 %6708, %v6575
        %v6710 = vpop.permute.xlu0 %6709
        %6713 = vset.pattern.permute.xlu0 0
        %6714 = vperm.xlu0 %6713, %v6576
        %v6715 = vpop.permute.xlu0 %6714
        %6718 = vset.pattern.permute.xlu0 0
        %6719 = vperm.xlu0 %6718, %v6577
        %v6720 = vpop.permute.xlu0 %6719
        %6723 = vset.pattern.permute.xlu0 0
        %6724 = vperm.xlu0 %6723, %v6578
        %v6725 = vpop.permute.xlu0 %6724
        %6728 = vset.pattern.permute.xlu0 0
        %6729 = vperm.xlu0 %6728, %v6579
        %v6730 = vpop.permute.xlu0 %6729
        %6733 = vset.pattern.permute.xlu0 0
        %6734 = vperm.xlu0 %6733, %v6580
        %v6735 = vpop.permute.xlu0 %6734
        %6738 = vset.pattern.permute.xlu0 0
        %6739 = vperm.xlu0 %6738, %v6581
        %v6740 = vpop.permute.xlu0 %6739
        %v6742 = vmul.f32 %v6518, %v6585
        %v6743 = vmul.f32 %v6519, %v6590
        %v6744 = vmul.f32 %v6520, %v6595
        %v6745 = vmul.f32 %v6521, %v6600
        %v6746 = vmul.f32 %v6522, %v6605
        %v6747 = vmul.f32 %v6523, %v6610
        %v6748 = vmul.f32 %v6524, %v6615
        %v6749 = vmul.f32 %v6525, %v6620
        %v6750 = vmul.f32 %v6526, %v6625
        %v6751 = vmul.f32 %v6527, %v6630
        %v6752 = vmul.f32 %v6528, %v6635
        %v6753 = vmul.f32 %v6529, %v6640
        %v6754 = vmul.f32 %v6530, %v6645
        %v6755 = vmul.f32 %v6531, %v6650
        %v6756 = vmul.f32 %v6532, %v6655
        %v6757 = vmul.f32 %v6533, %v6660
        %v6758 = vmul.f32 %v6534, %v6665
        %v6759 = vmul.f32 %v6535, %v6670
        %v6760 = vmul.f32 %v6536, %v6675
        %v6761 = vmul.f32 %v6537, %v6680
        %v6762 = vmul.f32 %v6538, %v6685
        %v6763 = vmul.f32 %v6539, %v6690
        %v6764 = vmul.f32 %v6540, %v6695
        %v6765 = vmul.f32 %v6541, %v6700
        %v6766 = vmul.f32 %v6542, %v6705
        %v6767 = vmul.f32 %v6543, %v6710
        %v6768 = vmul.f32 %v6544, %v6715
        %v6769 = vmul.f32 %v6545, %v6720
        %v6770 = vmul.f32 %v6546, %v6725
        %v6771 = vmul.f32 %v6547, %v6730
        %v6772 = vmul.f32 %v6548, %v6735
        %v6773 = vmul.f32 %v6549, %v6740
        %v6774 = vadd.f32 %v6742, %v6743
        %v6775 = vadd.f32 %v6774, %v6744
        %v6776 = vadd.f32 %v6775, %v6745
        %v6777 = vadd.f32 %v6776, %v6746
        %v6778 = vadd.f32 %v6777, %v6747
        %v6779 = vadd.f32 %v6778, %v6748
        %v6780 = vadd.f32 %v6779, %v6749
        %v6781 = vadd.f32 %v6780, %v6750
        %v6782 = vadd.f32 %v6781, %v6751
        %v6783 = vadd.f32 %v6782, %v6752
        %v6784 = vadd.f32 %v6783, %v6753
        %v6785 = vadd.f32 %v6784, %v6754
        %v6786 = vadd.f32 %v6785, %v6755
        %v6787 = vadd.f32 %v6786, %v6756
        %v6788 = vadd.f32 %v6787, %v6757
        %v6789 = vadd.f32 %v6788, %v6758
        %v6790 = vadd.f32 %v6789, %v6759
        %v6791 = vadd.f32 %v6790, %v6760
        %v6792 = vadd.f32 %v6791, %v6761
        %v6793 = vadd.f32 %v6792, %v6762
        %v6794 = vadd.f32 %v6793, %v6763
        %v6795 = vadd.f32 %v6794, %v6764
        %v6796 = vadd.f32 %v6795, %v6765
        %v6797 = vadd.f32 %v6796, %v6766
        %v6798 = vadd.f32 %v6797, %v6767
        %v6799 = vadd.f32 %v6798, %v6768
        %v6800 = vadd.f32 %v6799, %v6769
        %v6801 = vadd.f32 %v6800, %v6770
        %v6802 = vadd.f32 %v6801, %v6771
        %v6803 = vadd.f32 %v6802, %v6772
        %v6804 = vadd.f32 %v6803, %v6773
        %v6805 = vrot.slane %v6804, 4
        %v6806 = vadd.f32 %v6804, %v6805
        %v6807 = vrot.slane %v6806, 2
        %v6808 = vadd.f32 %v6806, %v6807
        %v6809 = vrot.slane %v6808, 1
        %v6810 = vadd.f32 %v6808, %v6809
        %v6811 = vld [vmem:[#allocation2] sm:$0x1]
        %6813 = vset.pattern.permute.xlu0 0
        %6814 = vperm.xlu0 %6813, %v6811
        %v6815 = vpop.permute.xlu0 %6814
        %v6817 = vperm.slane %v6815, 0
        %v6818 = vadd.f32 %v6810, %v6817
        %6819 = vst [vmem:[%s358] sm:$0x1] %v6818
        %s6820 = sand.u32 %s229, 1
        %s6821 = scalar_lea.sflag [#allocation5], %s6820
        %s6822 = sand.u32 %s229, 1
        %s6823 = scalar_lea.vmem [#allocation8], %s6822
        // Predicated region
        $region65: #{tpu_custom_call.1} parent=55 // pred_check
          %p6824 = pneg %p239
        $region66: #{tpu_custom_call.1} parent=55 // pred_check_branch
          %6826 = sbr.rel (%p6824) target = $region68
        $region67: #{tpu_custom_call.1} parent=55 // pred_region
          %6828 = vsyncadd %s6821, 0
          %s6829 = scalar_lea.hbm %s9, %s27
          %s6831 = sshll.u32 %s6823, 4
          %s6832 = int_to_ptr.vmem [resolvable:$true] %s6831
          %s6833 = sshll.u32 %s6829, 4
          %s6834 = int_to_ptr.hbm [resolvable:$true] %s6833
          %6836 = dma.vmem_to_hbm [thread:$0]  %s6832, 16, %s6834, %s6821
        $region68: #{tpu_custom_call.1} parent=55 // pred_fallthru
          _
      $region56: #{tpu_custom_call.1} parent=5 // pred_fallthru
        _
      %p6837 = scmp.le.s32.totalorder 2, %s22
      // Predicated region
      $region69: #{tpu_custom_call.1} parent=5 // pred_check
        %p6838 = pneg %p6837
      $region70: #{tpu_custom_call.1} parent=5 // pred_check_branch
        %6840 = sbr.rel (%p6838) target = $region72
      $region71: #{tpu_custom_call.1} parent=5 // pred_region
        %s6841 = ssub.s32 %s22, 2
        // Predicated region
        $region73: #{tpu_custom_call.1} parent=71 // pred_check
          %p6842 = pneg %p245
        $region74: #{tpu_custom_call.1} parent=71 // pred_check_branch
          %6844 = sbr.rel (%p6842) target = $region76
        $region75: #{tpu_custom_call.1} parent=71 // pred_region
          %s6845 = sand.u32 %s230, 1
          %s6846 = scalar_lea.sflag [#allocation5], %s6845
          %s6847 = sand.u32 %s230, 1
          %s6848 = scalar_lea.vmem [#allocation8], %s6847
          %6850 = dma.done %s6846, 16
        $region76: #{tpu_custom_call.1} parent=71 // pred_fallthru
          _
      $region72: #{tpu_custom_call.1} parent=5 // pred_fallthru
        _
    $region6: #{tpu_custom_call.1} parent=1 // loop_footer
      %s26 = sadd.s32 1, %s22
    $region7: #{tpu_custom_call.1} parent=1 // loop_footer_branch
      %21 = sbr.rel target = $region3
    $region8: #{tpu_custom_call.1} parent=1 // loop_exit
      _
    %6851 = vsyncpa [#allocation4], 1
    %s6852 = scalar_lea.sflag [#allocation4], 1
    %6853 = vsyncpa %s6852, 1
    %6854 = vsyncpa [#allocation7], 1
    %6855 = vsyncpa [#allocation5], 1
    %s6856 = scalar_lea.sflag [#allocation5], 1
    %6857 = vsyncpa %s6856, 1

</llo_original>
